<compile_context>
chip_gen: v7x
topology: tpu7x:2x2x1
jax: 0.10.0
libtpu: 0.0.40
codegen_flags: <defaults>
</compile_context>

<pallas_src>
import jax
import jax.numpy as jnp
from jax.experimental import pallas as pl
from jax.experimental.pallas import tpu as pltpu


LAYER_DIMS = [(3, 64), (64, 128), (128, 1024), (1024, 512), (512, 256)]


# --------------------------------------------------------------------------
# Small helpers
# --------------------------------------------------------------------------

def _round_up(x, m):
    return -(-x // m) * m


def _vmem_capacity_bytes():
    """Physical per-core VMEM; fall back to the smallest target (v7x: 64 MiB)."""
    try:
        return int(pltpu.get_tpu_info().vmem_capacity_bytes)
    except Exception:
        return 64 * 1024 * 1024


def _const_block_spec(shape):
    """BlockSpec for a grid-invariant (weight/bias) operand.  Its index_map
    never changes, so single-buffer it when pipeline_mode=pl.Buffered(1) is
    available (double-buffering would only waste VMEM)."""
    index_map = lambda i, j: (0,) * len(shape)
    buffered = getattr(pl, "Buffered", None)
    if buffered is not None:
        try:
            return pl.BlockSpec(shape, index_map, pipeline_mode=buffered(1))
        except TypeError:
            pass
    return pl.BlockSpec(shape, index_map)


# --------------------------------------------------------------------------
# Kernel
# --------------------------------------------------------------------------

def stn3d_kernel(x_ref,
                 w1_ref, b1_ref, w2_ref, b2_ref, w3_ref, b3_ref,
                 w4_ref, b4_ref, w5_ref, b5_ref, w6_ref, b6_ref,
                 o_ref, acc_ref):
    """Fused STN3d forward.

    grid = (batch_tiles, point_tiles); the point axis is a reduction.  Each
    step runs conv1 (VPU f32) -> conv2/conv3 (MXU, f32 accumulation) over
    M = bt*nt rows and folds a running max into the f32 VMEM accumulator.
    On the last point tile the fc head runs on the pooled features and the
    lane-dense (bt, 128) logits block is stored.
    """
    j = pl.program_id(1)

    @pl.when(j == 0)
    def _init():
        acc_ref[...] = jnp.full(acc_ref.shape, -jnp.inf, acc_ref.dtype)

    bt, nt, _ = x_ref.shape
    x = x_ref[...].reshape(bt * nt, 3)                  # f32, M = bt*nt rows

    # conv1: K == 3 would leave the MXU contraction dim ~2% utilized -> three
    # f32 broadcast FMAs on the VPU (hidden under the conv2/conv3 matmuls).
    w1 = w1_ref[...]
    h = (x[:, 0:1] * w1[0:1, :]
         + x[:, 1:2] * w1[1:2, :]
         + x[:, 2:3] * w1[2:3, :]
         + b1_ref[...])
    h = jnp.maximum(h, 0.0).astype(w2_ref.dtype)        # (M, 64)

    # conv2 / conv3 on the MXU (bf16 feeds by default, f32 accumulation).
    h = jnp.maximum(
        jnp.dot(h, w2_ref[...], preferred_element_type=jnp.float32) + b2_ref[...],
        0.0).astype(w3_ref.dtype)                       # (M, 128)
    h = jnp.maximum(
        jnp.dot(h, w3_ref[...], preferred_element_type=jnp.float32) + b3_ref[...],
        0.0)                                            # (M, 1024) f32

    # torch.max(x, 2)[0]: running per-batch-element max over point tiles.
    tile_max = jnp.max(h.reshape(bt, nt, h.shape[-1]), axis=1)   # (bt, 1024)
    acc_ref[...] = jnp.maximum(acc_ref[...], tile_max)

    # fc1/fc2/fc3 (BN folded, dropout identity in eval mode) once per batch
    # tile, on the last point tile -> no feats HBM round trip / second launch.
    @pl.when(j == pl.num_programs(1) - 1)
    def _head():
        g = acc_ref[...].astype(w4_ref.dtype)           # (bt, 1024)
        f = jnp.maximum(
            jnp.dot(g, w4_ref[...], preferred_element_type=jnp.float32) + b4_ref[...],
            0.0).astype(w5_ref.dtype)                   # (bt, 512)
        f = jnp.maximum(
            jnp.dot(f, w5_ref[...], preferred_element_type=jnp.float32) + b5_ref[...],
            0.0).astype(w6_ref.dtype)                   # (bt, 256)
        o_ref[...] = (
            jnp.dot(f, w6_ref[...], preferred_element_type=jnp.float32) + b6_ref[...]
        ).astype(o_ref.dtype)                           # (bt, 128), lane-dense


# --------------------------------------------------------------------------
# Wrapper
# --------------------------------------------------------------------------

def stn3d_forward(x_ncl, packed_params):
    """x_ncl: (B, 3, N) float32  ->  (B, 10) float32 logits."""
    B, C, N = x_ncl.shape
    assert C == 3

    # Channels-last so channels map to TPU lanes (1x1 conv == matmul).  Keep
    # the raw xyz in f32 regardless of the MXU dtype: x is only B*N*3 values
    # (negligible DMA/VMEM) and conv1 runs on the VPU in f32 anyway.
    x = jnp.transpose(x_ncl, (0, 2, 1)).astype(jnp.float32)      # (B, N, 3)

    # Per-generation sizing.  The dominant live buffer is the (bt*nt, 1024)
    # f32 conv3 result: 16 MiB at 4096 rows (fine on 128 MiB-VMEM v5e/v6e),
    # 8 MiB at 2048 rows with a <=48 MiB scoped limit on 64 MiB-VMEM v7x.
    if _vmem_capacity_bytes() >= 100 * 1024 * 1024:
        row_budget, vmem_limit = 4096, 96 * 1024 * 1024
    else:
        row_budget, vmem_limit = 2048, 48 * 1024 * 1024

    # Batch tiling: bt <= 8; pad B so bt divides it (padded rows sliced off).
    # For B > 8 this also yields >= 2 batch tiles for v7x's two TensorCores.
    bt = min(B, 8)
    Bp = _round_up(B, bt)

    # Point tiling: nt a multiple of 8, capped by the row budget; pad N by
    # replicating the last point (replication is max-pool-safe), so tiles
    # always divide exactly (e.g. N=2500 -> nt=256, Np=2560).
    nt_cap = max(8, (row_budget // bt) // 8 * 8)
    nt = min(nt_cap, _round_up(N, 8))
    Np = _round_up(N, nt)

    if Bp > B or Np > N:
        x = jnp.pad(x, ((0, Bp - B), (0, Np - N), (0, 0)), mode="edge")

    params = packed_params
    in_specs = [pl.BlockSpec((bt, nt, 3), lambda i, j: (i, j, 0))]
    in_specs += [_const_block_spec(p.shape) for p in params]

    logits_padded = pl.pallas_call(
        stn3d_kernel,
        out_shape=jax.ShapeDtypeStruct((Bp, 128), jnp.float32),
        grid=(Bp // bt, Np // nt),
        in_specs=in_specs,
        out_specs=pl.BlockSpec((bt, 128), lambda i, j: (i, 0)),
        scratch_shapes=[pltpu.VMEM((bt, 1024), jnp.float32)],
        compiler_params=pltpu.CompilerParams(
            dimension_semantics=("parallel", "arbitrary"),
            vmem_limit_bytes=vmem_limit),
    )(x, *params)

    return logits_padded[:B, :10]


# --------------------------------------------------------------------------
# Parameters (raw module-style) + BN folding / packing
# --------------------------------------------------------------------------

def init_raw_params(key):
    """(w, b, gamma, beta, running_mean, running_var) for conv1-3/fc1-2,
    then (w, b) for fc3.  Deterministic synthetic values."""
    keys = jax.random.split(key, 6 * len(LAYER_DIMS) + 2)
    params, k = [], 0
    for cin, cout in LAYER_DIMS:
        params.append(0.1 * jax.random.normal(keys[k], (cin, cout), jnp.float32)); k += 1
        params.append(0.1 * jax.random.normal(keys[k], (1, cout), jnp.float32)); k += 1
        params.append(0.5 + jax.random.uniform(keys[k], (1, cout), jnp.float32)); k += 1  # gamma
        params.append(0.1 * jax.random.normal(keys[k], (1, cout), jnp.float32)); k += 1   # beta
        params.append(0.1 * jax.random.normal(keys[k], (1, cout), jnp.float32)); k += 1   # mean
        params.append(0.5 + jax.random.uniform(keys[k], (1, cout), jnp.float32)); k += 1  # var
    params.append(0.1 * jax.random.normal(keys[k], (256, 10), jnp.float32)); k += 1       # fc3 w
    params.append(0.1 * jax.random.normal(keys[k], (1, 10), jnp.float32)); k += 1         # fc3 b
    return tuple(params)


def pack_params(raw, compute_dtype=jnp.bfloat16, eps=1e-5):
    """Fold eval-mode BN into the matmul weights (w' = w*scale column-wise,
    b' = b*scale + shift).  conv1 stays f32 (VPU path); conv2..fc3 MXU weights
    are cast to compute_dtype (bf16 default, f32 accumulation in the kernel);
    biases stay f32.  fc3 is zero-padded to 128 output lanes for lane-dense
    stores (wrapper slices back to 10)."""
    raw = list(raw)
    folded = []
    for l in range(len(LAYER_DIMS)):
        w, b, gamma, beta, mean, var = raw[6 * l: 6 * l + 6]
        scale = gamma / jnp.sqrt(var + eps)
        shift = beta - mean * scale
        wd = jnp.float32 if l == 0 else compute_dtype   # conv1 is VPU f32
        folded.append(((w * scale).astype(wd),
                       (b * scale + shift).astype(jnp.float32)))
    w6, b6 = raw[-2], raw[-1]
    w6p = jnp.zeros((256, 128), jnp.float32).at[:, :10].set(w6).astype(compute_dtype)
    b6p = jnp.zeros((1, 128), jnp.float32).at[:, :10].set(b6)
    return tuple(a for pair in folded for a in pair) + (w6p, b6p)


# --------------------------------------------------------------------------
# Pure-JAX reference (unfolded eval-mode BN) and test
# --------------------------------------------------------------------------

def stn3d_reference(x_ncl, raw, eps=1e-5):
    (w1, b1, g1, be1, m1, v1,
     w2, b2, g2, be2, m2, v2,
     w3, b3, g3, be3, m3, v3,
     w4, b4, g4, be4, m4, v4,
     w5, b5, g5, be5, m5, v5,
     w6, b6) = raw
    x = jnp.transpose(x_ncl, (0, 2, 1)).astype(jnp.float32)  # (B, N, 3)

    def block(h, w, b, ga, be, mu, var):
        y = h @ w + b
        y = ga * (y - mu) / jnp.sqrt(var + eps) + be
        return jnp.maximum(y, 0.0)

    h = block(x, w1, b1, g1, be1, m1, v1)
    h = block(h, w2, b2, g2, be2, m2, v2)
    h = block(h, w3, b3, g3, be3, m3, v3)       # (B, N, 1024)
    g = jnp.max(h, axis=1)                      # (B, 1024)
    f = block(g, w4, b4, g4, be4, m4, v4)       # (B, 512)
    f = block(f, w5, b5, g5, be5, m5, v5)       # (B, 256) (dropout == identity)
    return f @ w6 + b6                          # (B, 10)


if __name__ == "__main__":
    key = jax.random.PRNGKey(0)
    kx, kx2, kp = jax.random.split(key, 3)
    raw = init_raw_params(kp)

    # ---- case 1: small, exactly-tiled shape, f32 path (tight check) --------
    B, C, N = 2, 3, 16
    x = jax.random.normal(kx, (B, C, N), jnp.float32)
    ref = stn3d_reference(x, raw)
    out32 = jax.block_until_ready(stn3d_forward(x, pack_params(raw, jnp.float32)))
    assert out32.shape == (B, 10), out32.shape
    assert jnp.allclose(out32, ref, rtol=1e-4, atol=1e-4), (out32, ref)

    # ---- case 2: ragged B/N exercising edge padding + 2 batch tiles, f32 ----
    B2, N2 = 10, 50
    x2 = jax.random.normal(kx2, (B2, C, N2), jnp.float32)
    ref2 = stn3d_reference(x2, raw)
    out2 = jax.block_until_ready(stn3d_forward(x2, pack_params(raw, jnp.float32)))
    assert out2.shape == (B2, 10), out2.shape
    assert jnp.allclose(out2, ref2, rtol=1e-4, atol=1e-4), (out2, ref2)

    # ---- case 3: default bf16 MXU path (f32 accumulation), loose check ------
    out16 = jax.block_until_ready(stn3d_forward(x, pack_params(raw)))
    assert out16.shape == (B, 10), out16.shape
    assert jnp.allclose(out16, ref, rtol=5e-2, atol=5e-1), (out16, ref)

    print("KERNEL_OK")
</pallas_src>

<mosaic_0001>
module attributes {stable_mosaic.version = 11 : i64} {
  func.func @stn3d_kernel(%arg0: i32, %arg1: i32, %arg2: memref<2x16x3xf32, #tpu.memory_space<vmem>>, %arg3: memref<3x64xf32, #tpu.memory_space<vmem>>, %arg4: memref<1x64xf32, #tpu.memory_space<vmem>>, %arg5: memref<64x128xf32, #tpu.memory_space<vmem>>, %arg6: memref<1x128xf32, #tpu.memory_space<vmem>>, %arg7: memref<128x1024xf32, #tpu.memory_space<vmem>>, %arg8: memref<1x1024xf32, #tpu.memory_space<vmem>>, %arg9: memref<1024x512xf32, #tpu.memory_space<vmem>>, %arg10: memref<1x512xf32, #tpu.memory_space<vmem>>, %arg11: memref<512x256xf32, #tpu.memory_space<vmem>>, %arg12: memref<1x256xf32, #tpu.memory_space<vmem>>, %arg13: memref<256x128xf32, #tpu.memory_space<vmem>>, %arg14: memref<1x128xf32, #tpu.memory_space<vmem>>, %arg15: memref<2x128xf32, #tpu.memory_space<vmem>>, %arg16: memref<2x1024xf32, #tpu.memory_space<vmem>>) attributes {dimension_semantics = [#tpu.dimension_semantics<parallel>, #tpu.dimension_semantics<arbitrary>], iteration_bounds = array<i64: 1, 1>, scalar_prefetch = 0 : i64, scratch_operands = 1 : i64, tpu.core_type = #tpu.core_type<tc>, window_params = [{transform_indices = @transform_0, window_bounds = array<i64: 2, 16, 3>}, {pipeline_mode = #tpu.pipeline_mode<synchronous>, transform_indices = @transform_1, window_bounds = array<i64: 3, 64>}, {pipeline_mode = #tpu.pipeline_mode<synchronous>, transform_indices = @transform_2, window_bounds = array<i64: 1, 64>}, {pipeline_mode = #tpu.pipeline_mode<synchronous>, transform_indices = @transform_3, window_bounds = array<i64: 64, 128>}, {pipeline_mode = #tpu.pipeline_mode<synchronous>, transform_indices = @transform_4, window_bounds = array<i64: 1, 128>}, {pipeline_mode = #tpu.pipeline_mode<synchronous>, transform_indices = @transform_5, window_bounds = array<i64: 128, 1024>}, {pipeline_mode = #tpu.pipeline_mode<synchronous>, transform_indices = @transform_6, window_bounds = array<i64: 1, 1024>}, {pipeline_mode = #tpu.pipeline_mode<synchronous>, transform_indices = @transform_7, window_bounds = array<i64: 1024, 512>}, {pipeline_mode = #tpu.pipeline_mode<synchronous>, transform_indices = @transform_8, window_bounds = array<i64: 1, 512>}, {pipeline_mode = #tpu.pipeline_mode<synchronous>, transform_indices = @transform_9, window_bounds = array<i64: 512, 256>}, {pipeline_mode = #tpu.pipeline_mode<synchronous>, transform_indices = @transform_10, window_bounds = array<i64: 1, 256>}, {pipeline_mode = #tpu.pipeline_mode<synchronous>, transform_indices = @transform_11, window_bounds = array<i64: 256, 128>}, {pipeline_mode = #tpu.pipeline_mode<synchronous>, transform_indices = @transform_12, window_bounds = array<i64: 1, 128>}, {transform_indices = @transform_13, window_bounds = array<i64: 2, 128>}]} {
    %c0_i32 = arith.constant 0 : i32
    %0 = arith.cmpi eq, %arg1, %c0_i32 : i32
    %1 = arith.extui %0 : i1 to i32
    %c0_i32_0 = arith.constant 0 : i32
    %2 = arith.cmpi ne, %1, %c0_i32_0 : i32
    scf.if %2 {
      %cst_26 = arith.constant 0xFF800000 : f32
      %50 = vector.broadcast %cst_26 : f32 to vector<2x1024xf32>
      %c0_27 = arith.constant 0 : index
      %c0_28 = arith.constant 0 : index
      %51 = vector.load %arg16[%c0_27, %c0_28] : memref<2x1024xf32, #tpu.memory_space<vmem>>, vector<2x1024xf32>
      tpu.vector_store %arg16[%c0_27, %c0_28], %50 {strides = array<i32>} : memref<2x1024xf32, #tpu.memory_space<vmem>>, vector<2x1024xf32>,
    } else {
    }
    %c0 = arith.constant 0 : index
    %c0_1 = arith.constant 0 : index
    %c0_2 = arith.constant 0 : index
    %3 = vector.load %arg2[%c0, %c0_1, %c0_2] : memref<2x16x3xf32, #tpu.memory_space<vmem>>, vector<2x16x3xf32>
    %4 = vector.shape_cast %3 : vector<2x16x3xf32> to vector<32x3xf32>
    %c0_3 = arith.constant 0 : index
    %c0_4 = arith.constant 0 : index
    %5 = vector.load %arg3[%c0_3, %c0_4] : memref<3x64xf32, #tpu.memory_space<vmem>>, vector<3x64xf32>
    %6 = vector.extract_strided_slice %4 {offsets = [0, 0], sizes = [32, 1], strides = [1, 1]} : vector<32x3xf32> to vector<32x1xf32>
    %7 = vector.extract_strided_slice %5 {offsets = [0, 0], sizes = [1, 64], strides = [1, 1]} : vector<3x64xf32> to vector<1x64xf32>
    %8 = vector.broadcast %6 : vector<32x1xf32> to vector<32x64xf32>
    %9 = vector.broadcast %7 : vector<1x64xf32> to vector<32x64xf32>
    %10 = arith.mulf %8, %9 : vector<32x64xf32>
    %11 = vector.extract_strided_slice %4 {offsets = [0, 1], sizes = [32, 1], strides = [1, 1]} : vector<32x3xf32> to vector<32x1xf32>
    %12 = vector.extract_strided_slice %5 {offsets = [1, 0], sizes = [1, 64], strides = [1, 1]} : vector<3x64xf32> to vector<1x64xf32>
    %13 = vector.broadcast %11 : vector<32x1xf32> to vector<32x64xf32>
    %14 = vector.broadcast %12 : vector<1x64xf32> to vector<32x64xf32>
    %15 = arith.mulf %13, %14 : vector<32x64xf32>
    %16 = arith.addf %10, %15 : vector<32x64xf32>
    %17 = vector.extract_strided_slice %4 {offsets = [0, 2], sizes = [32, 1], strides = [1, 1]} : vector<32x3xf32> to vector<32x1xf32>
    %18 = vector.extract_strided_slice %5 {offsets = [2, 0], sizes = [1, 64], strides = [1, 1]} : vector<3x64xf32> to vector<1x64xf32>
    %19 = vector.broadcast %17 : vector<32x1xf32> to vector<32x64xf32>
    %20 = vector.broadcast %18 : vector<1x64xf32> to vector<32x64xf32>
    %21 = arith.mulf %19, %20 : vector<32x64xf32>
    %22 = arith.addf %16, %21 : vector<32x64xf32>
    %c0_5 = arith.constant 0 : index
    %c0_6 = arith.constant 0 : index
    %23 = vector.load %arg4[%c0_5, %c0_6] : memref<1x64xf32, #tpu.memory_space<vmem>>, vector<1x64xf32>
    %24 = vector.broadcast %23 : vector<1x64xf32> to vector<32x64xf32>
    %25 = arith.addf %22, %24 : vector<32x64xf32>
    %cst = arith.constant 0.000000e+00 : f32
    %26 = vector.broadcast %cst : f32 to vector<32x64xf32>
    %27 = arith.maximumf %25, %26 : vector<32x64xf32>
    %c0_7 = arith.constant 0 : index
    %c0_8 = arith.constant 0 : index
    %28 = vector.load %arg5[%c0_7, %c0_8] : memref<64x128xf32, #tpu.memory_space<vmem>>, vector<64x128xf32>
    %cst_9 = arith.constant dense<0.000000e+00> : vector<32x128xf32>
    %29 = tpu.matmul %27, %28, %cst_9 {dimension_numbers = #tpu.dot_dimension_numbers<[1], [0], [0], [1], [0, 0, 1, 1], [], []>} : vector<32x64xf32>, vector<64x128xf32>, vector<32x128xf32> -> vector<32x128xf32>
    %c0_10 = arith.constant 0 : index
    %c0_11 = arith.constant 0 : index
    %30 = vector.load %arg6[%c0_10, %c0_11] : memref<1x128xf32, #tpu.memory_space<vmem>>, vector<1x128xf32>
    %31 = vector.broadcast %30 : vector<1x128xf32> to vector<32x128xf32>
    %32 = arith.addf %29, %31 : vector<32x128xf32>
    %cst_12 = arith.constant 0.000000e+00 : f32
    %33 = vector.broadcast %cst_12 : f32 to vector<32x128xf32>
    %34 = arith.maximumf %32, %33 : vector<32x128xf32>
    %c0_13 = arith.constant 0 : index
    %c0_14 = arith.constant 0 : index
    %35 = vector.load %arg7[%c0_13, %c0_14] : memref<128x1024xf32, #tpu.memory_space<vmem>>, vector<128x1024xf32>
    %cst_15 = arith.constant dense<0.000000e+00> : vector<32x1024xf32>
    %36 = tpu.matmul %34, %35, %cst_15 {dimension_numbers = #tpu.dot_dimension_numbers<[1], [0], [0], [1], [0, 0, 1, 1], [], []>} : vector<32x128xf32>, vector<128x1024xf32>, vector<32x1024xf32> -> vector<32x1024xf32>
    %c0_16 = arith.constant 0 : index
    %c0_17 = arith.constant 0 : index
    %37 = vector.load %arg8[%c0_16, %c0_17] : memref<1x1024xf32, #tpu.memory_space<vmem>>, vector<1x1024xf32>
    %38 = vector.broadcast %37 : vector<1x1024xf32> to vector<32x1024xf32>
    %39 = arith.addf %36, %38 : vector<32x1024xf32>
    %cst_18 = arith.constant 0.000000e+00 : f32
    %40 = vector.broadcast %cst_18 : f32 to vector<32x1024xf32>
    %41 = arith.maximumf %39, %40 : vector<32x1024xf32>
    %42 = vector.shape_cast %41 : vector<32x1024xf32> to vector<2x16x1024xf32>
    %cst_19 = arith.constant dense<0xFF800000> : vector<2x1024xf32>
    %43 = vector.multi_reduction <maximumf>, %42, %cst_19 [1] : vector<2x16x1024xf32> to vector<2x1024xf32>
    %c0_20 = arith.constant 0 : index
    %c0_21 = arith.constant 0 : index
    %44 = vector.load %arg16[%c0_20, %c0_21] : memref<2x1024xf32, #tpu.memory_space<vmem>>, vector<2x1024xf32>
    %45 = arith.maximumf %44, %43 : vector<2x1024xf32>
    %c0_22 = arith.constant 0 : index
    %c0_23 = arith.constant 0 : index
    %46 = vector.load %arg16[%c0_22, %c0_23] : memref<2x1024xf32, #tpu.memory_space<vmem>>, vector<2x1024xf32>
    tpu.vector_store %arg16[%c0_22, %c0_23], %45 {strides = array<i32>} : memref<2x1024xf32, #tpu.memory_space<vmem>>, vector<2x1024xf32>,
    %c0_i32_24 = arith.constant 0 : i32
    %47 = arith.cmpi eq, %arg1, %c0_i32_24 : i32
    %48 = arith.extui %47 : i1 to i32
    %c0_i32_25 = arith.constant 0 : i32
    %49 = arith.cmpi ne, %48, %c0_i32_25 : i32
    scf.if %49 {
      %c0_26 = arith.constant 0 : index
      %c0_27 = arith.constant 0 : index
      %50 = vector.load %arg16[%c0_26, %c0_27] : memref<2x1024xf32, #tpu.memory_space<vmem>>, vector<2x1024xf32>
      %c0_28 = arith.constant 0 : index
      %c0_29 = arith.constant 0 : index
      %51 = vector.load %arg9[%c0_28, %c0_29] : memref<1024x512xf32, #tpu.memory_space<vmem>>, vector<1024x512xf32>
      %cst_30 = arith.constant dense<0.000000e+00> : vector<2x512xf32>
      %52 = tpu.matmul %50, %51, %cst_30 {dimension_numbers = #tpu.dot_dimension_numbers<[1], [0], [0], [1], [0, 0, 1, 1], [], []>} : vector<2x1024xf32>, vector<1024x512xf32>, vector<2x512xf32> -> vector<2x512xf32>
      %c0_31 = arith.constant 0 : index
      %c0_32 = arith.constant 0 : index
      %53 = vector.load %arg10[%c0_31, %c0_32] : memref<1x512xf32, #tpu.memory_space<vmem>>, vector<1x512xf32>
      %54 = vector.broadcast %53 : vector<1x512xf32> to vector<2x512xf32>
      %55 = arith.addf %52, %54 : vector<2x512xf32>
      %cst_33 = arith.constant 0.000000e+00 : f32
      %56 = vector.broadcast %cst_33 : f32 to vector<2x512xf32>
      %57 = arith.maximumf %55, %56 : vector<2x512xf32>
      %c0_34 = arith.constant 0 : index
      %c0_35 = arith.constant 0 : index
      %58 = vector.load %arg11[%c0_34, %c0_35] : memref<512x256xf32, #tpu.memory_space<vmem>>, vector<512x256xf32>
      %cst_36 = arith.constant dense<0.000000e+00> : vector<2x256xf32>
      %59 = tpu.matmul %57, %58, %cst_36 {dimension_numbers = #tpu.dot_dimension_numbers<[1], [0], [0], [1], [0, 0, 1, 1], [], []>} : vector<2x512xf32>, vector<512x256xf32>, vector<2x256xf32> -> vector<2x256xf32>
      %c0_37 = arith.constant 0 : index
      %c0_38 = arith.constant 0 : index
      %60 = vector.load %arg12[%c0_37, %c0_38] : memref<1x256xf32, #tpu.memory_space<vmem>>, vector<1x256xf32>
      %61 = vector.broadcast %60 : vector<1x256xf32> to vector<2x256xf32>
      %62 = arith.addf %59, %61 : vector<2x256xf32>
      %cst_39 = arith.constant 0.000000e+00 : f32
      %63 = vector.broadcast %cst_39 : f32 to vector<2x256xf32>
      %64 = arith.maximumf %62, %63 : vector<2x256xf32>
      %c0_40 = arith.constant 0 : index
      %c0_41 = arith.constant 0 : index
      %65 = vector.load %arg13[%c0_40, %c0_41] : memref<256x128xf32, #tpu.memory_space<vmem>>, vector<256x128xf32>
      %cst_42 = arith.constant dense<0.000000e+00> : vector<2x128xf32>
      %66 = tpu.matmul %64, %65, %cst_42 {dimension_numbers = #tpu.dot_dimension_numbers<[1], [0], [0], [1], [0, 0, 1, 1], [], []>} : vector<2x256xf32>, vector<256x128xf32>, vector<2x128xf32> -> vector<2x128xf32>
      %c0_43 = arith.constant 0 : index
      %c0_44 = arith.constant 0 : index
      %67 = vector.load %arg14[%c0_43, %c0_44] : memref<1x128xf32, #tpu.memory_space<vmem>>, vector<1x128xf32>
      %68 = vector.broadcast %67 : vector<1x128xf32> to vector<2x128xf32>
      %69 = arith.addf %66, %68 : vector<2x128xf32>
      %c0_45 = arith.constant 0 : index
      %c0_46 = arith.constant 0 : index
      %70 = vector.load %arg15[%c0_45, %c0_46] : memref<2x128xf32, #tpu.memory_space<vmem>>, vector<2x128xf32>
      tpu.vector_store %arg15[%c0_45, %c0_46], %69 {strides = array<i32>} : memref<2x128xf32, #tpu.memory_space<vmem>>, vector<2x128xf32>,
    } else {
    }
    return
  }
  func.func @transform_0(%arg0: i32, %arg1: i32) -> (i32, i32, i32) {
    %c0_i32 = arith.constant 0 : i32
    %c0_i32_0 = arith.constant 0 : i32
    return %arg0, %arg1, %c0_i32 : i32, i32, i32
  }
  func.func @transform_1(%arg0: i32, %arg1: i32) -> (i32, i32) {
    %c0_i32 = arith.constant 0 : i32
    %c0_i32_0 = arith.constant 0 : i32
    %c0_i32_1 = arith.constant 0 : i32
    return %c0_i32, %c0_i32_0 : i32, i32
  }
  func.func @transform_2(%arg0: i32, %arg1: i32) -> (i32, i32) {
    %c0_i32 = arith.constant 0 : i32
    %c0_i32_0 = arith.constant 0 : i32
    %c0_i32_1 = arith.constant 0 : i32
    return %c0_i32, %c0_i32_0 : i32, i32
  }
  func.func @transform_3(%arg0: i32, %arg1: i32) -> (i32, i32) {
    %c0_i32 = arith.constant 0 : i32
    %c0_i32_0 = arith.constant 0 : i32
    %c0_i32_1 = arith.constant 0 : i32
    return %c0_i32, %c0_i32_0 : i32, i32
  }
  func.func @transform_4(%arg0: i32, %arg1: i32) -> (i32, i32) {
    %c0_i32 = arith.constant 0 : i32
    %c0_i32_0 = arith.constant 0 : i32
    %c0_i32_1 = arith.constant 0 : i32
    return %c0_i32, %c0_i32_0 : i32, i32
  }
  func.func @transform_5(%arg0: i32, %arg1: i32) -> (i32, i32) {
    %c0_i32 = arith.constant 0 : i32
    %c0_i32_0 = arith.constant 0 : i32
    %c0_i32_1 = arith.constant 0 : i32
    return %c0_i32, %c0_i32_0 : i32, i32
  }
  func.func @transform_6(%arg0: i32, %arg1: i32) -> (i32, i32) {
    %c0_i32 = arith.constant 0 : i32
    %c0_i32_0 = arith.constant 0 : i32
    %c0_i32_1 = arith.constant 0 : i32
    return %c0_i32, %c0_i32_0 : i32, i32
  }
  func.func @transform_7(%arg0: i32, %arg1: i32) -> (i32, i32) {
    %c0_i32 = arith.constant 0 : i32
    %c0_i32_0 = arith.constant 0 : i32
    %c0_i32_1 = arith.constant 0 : i32
    return %c0_i32, %c0_i32_0 : i32, i32
  }
  func.func @transform_8(%arg0: i32, %arg1: i32) -> (i32, i32) {
    %c0_i32 = arith.constant 0 : i32
    %c0_i32_0 = arith.constant 0 : i32
    %c0_i32_1 = arith.constant 0 : i32
    return %c0_i32, %c0_i32_0 : i32, i32
  }
  func.func @transform_9(%arg0: i32, %arg1: i32) -> (i32, i32) {
    %c0_i32 = arith.constant 0 : i32
    %c0_i32_0 = arith.constant 0 : i32
    %c0_i32_1 = arith.constant 0 : i32
    return %c0_i32, %c0_i32_0 : i32, i32
  }
  func.func @transform_10(%arg0: i32, %arg1: i32) -> (i32, i32) {
    %c0_i32 = arith.constant 0 : i32
    %c0_i32_0 = arith.constant 0 : i32
    %c0_i32_1 = arith.constant 0 : i32
    return %c0_i32, %c0_i32_0 : i32, i32
  }
  func.func @transform_11(%arg0: i32, %arg1: i32) -> (i32, i32) {
    %c0_i32 = arith.constant 0 : i32
    %c0_i32_0 = arith.constant 0 : i32
    %c0_i32_1 = arith.constant 0 : i32
    return %c0_i32, %c0_i32_0 : i32, i32
  }
  func.func @transform_12(%arg0: i32, %arg1: i32) -> (i32, i32) {
    %c0_i32 = arith.constant 0 : i32
    %c0_i32_0 = arith.constant 0 : i32
    %c0_i32_1 = arith.constant 0 : i32
    return %c0_i32, %c0_i32_0 : i32, i32
  }
  func.func @transform_13(%arg0: i32, %arg1: i32) -> (i32, i32) {
    %c0_i32 = arith.constant 0 : i32
    %c0_i32_0 = arith.constant 0 : i32
    return %arg0, %c0_i32 : i32, i32
  }
}

</mosaic_0001>

<llo_original>
// kernel: tpu_custom_call.1
$region0: #{tpu_custom_call.1}
  #allocation0 [shape = 'u32[]', space=smem, size = 0x4, offset = 0x4, fixed_abs, tag = 'smem constant byte address 0x4 - core index']
  #allocation1 [shape = 'u32[144,128]{1,0:T(1,128)}', space=vmem, size = 0x12000, scoped, tag = 'internal scratch']
  #allocation2 [shape = 'f32[2,1024]{1,0:T(2,128)}', space=vmem, size = 0x2000, scoped, tag = 'scratch operand']
  %s0 = inlined_call_operand.vmem [shape: f32[2,16,3], index: 0, kind: input, shape index: {}]
  %s1 = inlined_call_operand.hbm [shape: f32[3,64], index: 1, kind: input, shape index: {}]
  %s2 = inlined_call_operand.hbm [shape: f32[1,64], index: 2, kind: input, shape index: {}]
  %s3 = inlined_call_operand.hbm [shape: f32[64,128], index: 3, kind: input, shape index: {}]
  %s4 = inlined_call_operand.hbm [shape: f32[1,128], index: 4, kind: input, shape index: {}]
  %s5 = inlined_call_operand.hbm [shape: f32[128,1024], index: 5, kind: input, shape index: {}]
  %s6 = inlined_call_operand.hbm [shape: f32[1,1024], index: 6, kind: input, shape index: {}]
  %s7 = inlined_call_operand.hbm [shape: f32[1024,512], index: 7, kind: input, shape index: {}]
  %s8 = inlined_call_operand.hbm [shape: f32[1,512], index: 8, kind: input, shape index: {}]
  %s9 = inlined_call_operand.hbm [shape: f32[512,256], index: 9, kind: input, shape index: {}]
  %s10 = inlined_call_operand.hbm [shape: f32[1,256], index: 10, kind: input, shape index: {}]
  %s11 = inlined_call_operand.hbm [shape: f32[256,128], index: 11, kind: input, shape index: {}]
  %s12 = inlined_call_operand.hbm [shape: f32[1,128], index: 12, kind: input, shape index: {}]
  %s13 = inlined_call_operand.hbm [shape: f32[2,128], index: 13, kind: output, shape index: {}]
  %s14 = sld [smem:[#allocation0]]
  $region118: #{tpu_custom_call.1} parent=0
    _
  %s16 = ssub.s32 1, %s14
  %s17 = scalar_select 0, %s16, %s14
  $region1: #{tpu_custom_call.1} parent=0
    #allocation3 [shape = 'u8[2048]{0}', space=vmem, size = 0x800, scoped, tag = 'input window, operand 1, single buffered']
    #allocation4 [shape = 's32[1]{0}', space=sflag, size = 0x4, scoped, tag = 'scoped memory for tpu_custom_call.1']
    #allocation5 [shape = 's32[1]{0}', space=sflag, size = 0x4, scoped, tag = 'scoped memory for tpu_custom_call.1']
    #allocation6 [shape = 'u8[512]{0}', space=vmem, size = 0x400, scoped, tag = 'input window, operand 2, single buffered']
    #allocation7 [shape = 's32[1]{0}', space=sflag, size = 0x4, scoped, tag = 'scoped memory for tpu_custom_call.1']
    #allocation8 [shape = 'u8[32768]{0}', space=vmem, size = 0x8000, scoped, tag = 'input window, operand 3, single buffered']
    #allocation9 [shape = 'u8[512]{0}', space=vmem, size = 0x400, scoped, tag = 'input window, operand 4, single buffered']
    #allocation10 [shape = 's32[1]{0}', space=sflag, size = 0x4, scoped, tag = 'scoped memory for tpu_custom_call.1']
    #allocation11 [shape = 'u8[524288]{0}', space=vmem, size = 0x80000, scoped, tag = 'input window, operand 5, single buffered']
    #allocation12 [shape = 'u8[4096]{0}', space=vmem, size = 0x1000, scoped, tag = 'input window, operand 6, single buffered']
    #allocation13 [shape = 's32[1]{0}', space=sflag, size = 0x4, scoped, tag = 'scoped memory for tpu_custom_call.1']
    #allocation14 [shape = 'u8[2097152]{0}', space=vmem, size = 0x200000, scoped, tag = 'input window, operand 7, single buffered']
    #allocation15 [shape = 'u8[2048]{0}', space=vmem, size = 0x800, scoped, tag = 'input window, operand 8, single buffered']
    #allocation16 [shape = 's32[1]{0}', space=sflag, size = 0x4, scoped, tag = 'scoped memory for tpu_custom_call.1']
    #allocation17 [shape = 'u8[524288]{0}', space=vmem, size = 0x80000, scoped, tag = 'input window, operand 9, single buffered']
    #allocation18 [shape = 'u8[1024]{0}', space=vmem, size = 0x400, scoped, tag = 'input window, operand 10, single buffered']
    #allocation19 [shape = 's32[1]{0}', space=sflag, size = 0x4, scoped, tag = 'scoped memory for tpu_custom_call.1']
    #allocation20 [shape = 'u8[131072]{0}', space=vmem, size = 0x20000, scoped, tag = 'input window, operand 11, single buffered']
    #allocation21 [shape = 'u8[512]{0}', space=vmem, size = 0x400, scoped, tag = 'input window, operand 12, single buffered']
    #allocation22 [shape = 's32[1]{0}', space=sflag, size = 0x4, scoped, tag = 'scoped memory for tpu_custom_call.1']
    #allocation23 [shape = 'u8[1024]{0}', space=vmem, size = 0x400, scoped, tag = 'output window, operand 0, single buffered']
    %18 = vsyncpa [#allocation4], 0
    %19 = vsyncpa [#allocation7], 0
    %20 = vsyncpa [#allocation10], 0
    %21 = vsyncpa [#allocation13], 0
    %22 = vsyncpa [#allocation16], 0
    %23 = vsyncpa [#allocation19], 0
    %24 = vsyncpa [#allocation22], 0
    %25 = vsyncpa [#allocation5], 0
    // Predicated region
    $region2: #{tpu_custom_call.1} parent=1 // pred_check
      _
    $region3: #{tpu_custom_call.1} parent=1 // pred_check_branch
      %27 = sbr.rel (0) target = $region5
    $region4: #{tpu_custom_call.1} parent=1 // pred_region
      _
    $region5: #{tpu_custom_call.1} parent=1 // pred_fallthru
      _
    // Predicated region
    $region6: #{tpu_custom_call.1} parent=1 // pred_check
      _
    $region7: #{tpu_custom_call.1} parent=1 // pred_check_branch
      %29 = sbr.rel (0) target = $region9
    $region8: #{tpu_custom_call.1} parent=1 // pred_region
      %s31 = ssub.s32 64, 64
      %32 = vsyncadd [#allocation4], %s31
      %s34 = sshll.u32 [#allocation3], 4
      %s35 = int_to_ptr.vmem [resolvable:$true] %s34
      %37 = dma.hbm_to_vmem [thread:$0]  %s1, 64, %s35, [#allocation4]
    $region9: #{tpu_custom_call.1} parent=1 // pred_fallthru
      _
    // Predicated region
    $region10: #{tpu_custom_call.1} parent=1 // pred_check
      _
    $region11: #{tpu_custom_call.1} parent=1 // pred_check_branch
      %39 = sbr.rel (0) target = $region13
    $region12: #{tpu_custom_call.1} parent=1 // pred_region
      %s41 = ssub.s32 16, 16
      %42 = vsyncadd [#allocation7], %s41
      %s44 = sshll.u32 [#allocation6], 4
      %s45 = int_to_ptr.vmem [resolvable:$true] %s44
      %47 = dma.hbm_to_vmem [thread:$0]  %s2, 16, %s45, [#allocation7]
    $region13: #{tpu_custom_call.1} parent=1 // pred_fallthru
      _
    // Predicated region
    $region14: #{tpu_custom_call.1} parent=1 // pred_check
      _
    $region15: #{tpu_custom_call.1} parent=1 // pred_check_branch
      %49 = sbr.rel (0) target = $region17
    $region16: #{tpu_custom_call.1} parent=1 // pred_region
      %s51 = ssub.s32 1024, 1024
      %52 = vsyncadd [#allocation7], %s51
      %s53 = sshll.u32 [#allocation8], 4
      %s54 = int_to_ptr.vmem [resolvable:$true] %s53
      %59 = dma.hbm_to_vmem [thread:$0]  %s3, 1024, %s54, [#allocation7], 128, 128, 8
    $region17: #{tpu_custom_call.1} parent=1 // pred_fallthru
      _
    // Predicated region
    $region18: #{tpu_custom_call.1} parent=1 // pred_check
      _
    $region19: #{tpu_custom_call.1} parent=1 // pred_check_branch
      %61 = sbr.rel (0) target = $region21
    $region20: #{tpu_custom_call.1} parent=1 // pred_region
      %s63 = ssub.s32 16, 16
      %64 = vsyncadd [#allocation10], %s63
      %s66 = sshll.u32 [#allocation9], 4
      %s67 = int_to_ptr.vmem [resolvable:$true] %s66
      %69 = dma.hbm_to_vmem [thread:$0]  %s4, 16, %s67, [#allocation10]
    $region21: #{tpu_custom_call.1} parent=1 // pred_fallthru
      _
    // Predicated region
    $region22: #{tpu_custom_call.1} parent=1 // pred_check
      _
    $region23: #{tpu_custom_call.1} parent=1 // pred_check_branch
      %71 = sbr.rel (0) target = $region25
    $region24: #{tpu_custom_call.1} parent=1 // pred_region
      %s73 = ssub.s32 16384, 16384
      %74 = vsyncadd [#allocation10], %s73
      %s75 = sshll.u32 [#allocation11], 4
      %s76 = int_to_ptr.vmem [resolvable:$true] %s75
      %81 = dma.hbm_to_vmem [thread:$0]  %s5, 16384, %s76, [#allocation10], 1024, 1024, 64
    $region25: #{tpu_custom_call.1} parent=1 // pred_fallthru
      _
    // Predicated region
    $region26: #{tpu_custom_call.1} parent=1 // pred_check
      _
    $region27: #{tpu_custom_call.1} parent=1 // pred_check_branch
      %83 = sbr.rel (0) target = $region29
    $region28: #{tpu_custom_call.1} parent=1 // pred_region
      %s85 = ssub.s32 128, 128
      %86 = vsyncadd [#allocation13], %s85
      %s88 = sshll.u32 [#allocation12], 4
      %s89 = int_to_ptr.vmem [resolvable:$true] %s88
      %91 = dma.hbm_to_vmem [thread:$0]  %s6, 128, %s89, [#allocation13]
    $region29: #{tpu_custom_call.1} parent=1 // pred_fallthru
      _
    // Predicated region
    $region30: #{tpu_custom_call.1} parent=1 // pred_check
      _
    $region31: #{tpu_custom_call.1} parent=1 // pred_check_branch
      %93 = sbr.rel (0) target = $region33
    $region32: #{tpu_custom_call.1} parent=1 // pred_region
      %s95 = ssub.s32 65536, 65536
      %96 = vsyncadd [#allocation13], %s95
      %s97 = sshll.u32 [#allocation14], 4
      %s98 = int_to_ptr.vmem [resolvable:$true] %s97
      %103 = dma.hbm_to_vmem [thread:$0]  %s7, 65536, %s98, [#allocation13], 512, 512, 32
    $region33: #{tpu_custom_call.1} parent=1 // pred_fallthru
      _
    // Predicated region
    $region34: #{tpu_custom_call.1} parent=1 // pred_check
      _
    $region35: #{tpu_custom_call.1} parent=1 // pred_check_branch
      %105 = sbr.rel (0) target = $region37
    $region36: #{tpu_custom_call.1} parent=1 // pred_region
      %s107 = ssub.s32 64, 64
      %108 = vsyncadd [#allocation16], %s107
      %s110 = sshll.u32 [#allocation15], 4
      %s111 = int_to_ptr.vmem [resolvable:$true] %s110
      %113 = dma.hbm_to_vmem [thread:$0]  %s8, 64, %s111, [#allocation16]
    $region37: #{tpu_custom_call.1} parent=1 // pred_fallthru
      _
    // Predicated region
    $region38: #{tpu_custom_call.1} parent=1 // pred_check
      _
    $region39: #{tpu_custom_call.1} parent=1 // pred_check_branch
      %115 = sbr.rel (0) target = $region41
    $region40: #{tpu_custom_call.1} parent=1 // pred_region
      %s117 = ssub.s32 16384, 16384
      %118 = vsyncadd [#allocation16], %s117
      %s119 = sshll.u32 [#allocation17], 4
      %s120 = int_to_ptr.vmem [resolvable:$true] %s119
      %125 = dma.hbm_to_vmem [thread:$0]  %s9, 16384, %s120, [#allocation16], 256, 256, 16
    $region41: #{tpu_custom_call.1} parent=1 // pred_fallthru
      _
    // Predicated region
    $region42: #{tpu_custom_call.1} parent=1 // pred_check
      _
    $region43: #{tpu_custom_call.1} parent=1 // pred_check_branch
      %127 = sbr.rel (0) target = $region45
    $region44: #{tpu_custom_call.1} parent=1 // pred_region
      %s129 = ssub.s32 32, 32
      %130 = vsyncadd [#allocation19], %s129
      %s132 = sshll.u32 [#allocation18], 4
      %s133 = int_to_ptr.vmem [resolvable:$true] %s132
      %135 = dma.hbm_to_vmem [thread:$0]  %s10, 32, %s133, [#allocation19]
    $region45: #{tpu_custom_call.1} parent=1 // pred_fallthru
      _
    // Predicated region
    $region46: #{tpu_custom_call.1} parent=1 // pred_check
      _
    $region47: #{tpu_custom_call.1} parent=1 // pred_check_branch
      %137 = sbr.rel (0) target = $region49
    $region48: #{tpu_custom_call.1} parent=1 // pred_region
      %s139 = ssub.s32 4096, 4096
      %140 = vsyncadd [#allocation19], %s139
      %s141 = sshll.u32 [#allocation20], 4
      %s142 = int_to_ptr.vmem [resolvable:$true] %s141
      %147 = dma.hbm_to_vmem [thread:$0]  %s11, 4096, %s142, [#allocation19], 128, 128, 8
    $region49: #{tpu_custom_call.1} parent=1 // pred_fallthru
      _
    // Predicated region
    $region50: #{tpu_custom_call.1} parent=1 // pred_check
      _
    $region51: #{tpu_custom_call.1} parent=1 // pred_check_branch
      %149 = sbr.rel (0) target = $region53
    $region52: #{tpu_custom_call.1} parent=1 // pred_region
      %s151 = ssub.s32 16, 16
      %152 = vsyncadd [#allocation22], %s151
      %s154 = sshll.u32 [#allocation21], 4
      %s155 = int_to_ptr.vmem [resolvable:$true] %s154
      %157 = dma.hbm_to_vmem [thread:$0]  %s12, 16, %s155, [#allocation22]
    $region53: #{tpu_custom_call.1} parent=1 // pred_fallthru
      _
    // Predicated region
    $region54: #{tpu_custom_call.1} parent=1 // pred_check
      _
    $region55: #{tpu_custom_call.1} parent=1 // pred_check_branch
      %159 = sbr.rel (0) target = $region57
    $region56: #{tpu_custom_call.1} parent=1 // pred_region
      %160 = dma.done [#allocation4], 64
    $region57: #{tpu_custom_call.1} parent=1 // pred_fallthru
      _
    // Predicated region
    $region58: #{tpu_custom_call.1} parent=1 // pred_check
      _
    $region59: #{tpu_custom_call.1} parent=1 // pred_check_branch
      %162 = sbr.rel (0) target = $region61
    $region60: #{tpu_custom_call.1} parent=1 // pred_region
      %163 = dma.done [#allocation7], 16
    $region61: #{tpu_custom_call.1} parent=1 // pred_fallthru
      _
    // Predicated region
    $region62: #{tpu_custom_call.1} parent=1 // pred_check
      _
    $region63: #{tpu_custom_call.1} parent=1 // pred_check_branch
      %165 = sbr.rel (0) target = $region65
    $region64: #{tpu_custom_call.1} parent=1 // pred_region
      %166 = dma.done [#allocation7], 1024
    $region65: #{tpu_custom_call.1} parent=1 // pred_fallthru
      _
    // Predicated region
    $region66: #{tpu_custom_call.1} parent=1 // pred_check
      _
    $region67: #{tpu_custom_call.1} parent=1 // pred_check_branch
      %168 = sbr.rel (0) target = $region69
    $region68: #{tpu_custom_call.1} parent=1 // pred_region
      %169 = dma.done [#allocation10], 16
    $region69: #{tpu_custom_call.1} parent=1 // pred_fallthru
      _
    // Predicated region
    $region70: #{tpu_custom_call.1} parent=1 // pred_check
      _
    $region71: #{tpu_custom_call.1} parent=1 // pred_check_branch
      %171 = sbr.rel (0) target = $region73
    $region72: #{tpu_custom_call.1} parent=1 // pred_region
      %172 = dma.done [#allocation10], 16384
    $region73: #{tpu_custom_call.1} parent=1 // pred_fallthru
      _
    // Predicated region
    $region74: #{tpu_custom_call.1} parent=1 // pred_check
      _
    $region75: #{tpu_custom_call.1} parent=1 // pred_check_branch
      %174 = sbr.rel (0) target = $region77
    $region76: #{tpu_custom_call.1} parent=1 // pred_region
      %175 = dma.done [#allocation13], 128
    $region77: #{tpu_custom_call.1} parent=1 // pred_fallthru
      _
    // Predicated region
    $region78: #{tpu_custom_call.1} parent=1 // pred_check
      _
    $region79: #{tpu_custom_call.1} parent=1 // pred_check_branch
      %177 = sbr.rel (0) target = $region81
    $region80: #{tpu_custom_call.1} parent=1 // pred_region
      %178 = dma.done [#allocation13], 65536
    $region81: #{tpu_custom_call.1} parent=1 // pred_fallthru
      _
    // Predicated region
    $region82: #{tpu_custom_call.1} parent=1 // pred_check
      _
    $region83: #{tpu_custom_call.1} parent=1 // pred_check_branch
      %180 = sbr.rel (0) target = $region85
    $region84: #{tpu_custom_call.1} parent=1 // pred_region
      %181 = dma.done [#allocation16], 64
    $region85: #{tpu_custom_call.1} parent=1 // pred_fallthru
      _
    // Predicated region
    $region86: #{tpu_custom_call.1} parent=1 // pred_check
      _
    $region87: #{tpu_custom_call.1} parent=1 // pred_check_branch
      %183 = sbr.rel (0) target = $region89
    $region88: #{tpu_custom_call.1} parent=1 // pred_region
      %184 = dma.done [#allocation16], 16384
    $region89: #{tpu_custom_call.1} parent=1 // pred_fallthru
      _
    // Predicated region
    $region90: #{tpu_custom_call.1} parent=1 // pred_check
      _
    $region91: #{tpu_custom_call.1} parent=1 // pred_check_branch
      %186 = sbr.rel (0) target = $region93
    $region92: #{tpu_custom_call.1} parent=1 // pred_region
      %187 = dma.done [#allocation19], 32
    $region93: #{tpu_custom_call.1} parent=1 // pred_fallthru
      _
    // Predicated region
    $region94: #{tpu_custom_call.1} parent=1 // pred_check
      _
    $region95: #{tpu_custom_call.1} parent=1 // pred_check_branch
      %189 = sbr.rel (0) target = $region97
    $region96: #{tpu_custom_call.1} parent=1 // pred_region
      %190 = dma.done [#allocation19], 4096
    $region97: #{tpu_custom_call.1} parent=1 // pred_fallthru
      _
    // Predicated region
    $region98: #{tpu_custom_call.1} parent=1 // pred_check
      _
    $region99: #{tpu_custom_call.1} parent=1 // pred_check_branch
      %192 = sbr.rel (0) target = $region101
    $region100: #{tpu_custom_call.1} parent=1 // pred_region
      %193 = dma.done [#allocation22], 16
    $region101: #{tpu_custom_call.1} parent=1 // pred_fallthru
      _
    %p194 = scmp.eq.s32.totalorder 0, 0
    // Predicated region
    $region102: #{tpu_custom_call.1} parent=1 // pred_check
      %p195 = pneg %p194
    $region103: #{tpu_custom_call.1} parent=1 // pred_check_branch
      %197 = sbr.rel (%p195) target = $region105
    $region104: #{tpu_custom_call.1} parent=1 // pred_region
      %198 = vst [vmem:[#allocation2] sm:$0xff] -inf
      %199 = vst [vmem:[#allocation2 + $0x8] sm:$0xff] -inf
    $region105: #{tpu_custom_call.1} parent=1 // pred_fallthru
      _
    %v200 = vld [vmem:[%s0] sm:$0xff]
    %v201 = vld [vmem:[%s0 + $0x8] sm:$0xff]
    %v202 = vld [vmem:[%s0 + $0x10] sm:$0xff]
    %v203 = vld [vmem:[%s0 + $0x18] sm:$0xff]
    %v204 = vld [vmem:[#allocation3] sm:$0x7]
    %206 = vset.pattern.permute.xlu0 0
    %207 = vperm.xlu0 %206, %v200
    %v208 = vpop.permute.xlu0 %207
    %211 = vset.pattern.permute.xlu0 0
    %212 = vperm.xlu0 %211, %v201
    %v213 = vpop.permute.xlu0 %212
    %216 = vset.pattern.permute.xlu0 0
    %217 = vperm.xlu0 %216, %v202
    %v218 = vpop.permute.xlu0 %217
    %221 = vset.pattern.permute.xlu0 0
    %222 = vperm.xlu0 %221, %v203
    %v223 = vpop.permute.xlu0 %222
    %v225 = vlaneseq
    %v226 = vshrl.u32 %v225, 7
    %v227 = vsub.s32 0, %v226
    %v228 = vrot.slane %v204, %v227
    %v229 = vmul.f32 %v208, %v228
    %v230 = vmul.f32 %v213, %v228
    %v231 = vmul.f32 %v218, %v228
    %v232 = vmul.f32 %v223, %v228
    %233 = vset.pattern.permute.xlu0 1
    %234 = vperm.xlu0 %233, %v200
    %v235 = vpop.permute.xlu0 %234
    %237 = vset.pattern.permute.xlu0 1
    %238 = vperm.xlu0 %237, %v201
    %v239 = vpop.permute.xlu0 %238
    %241 = vset.pattern.permute.xlu0 1
    %242 = vperm.xlu0 %241, %v202
    %v243 = vpop.permute.xlu0 %242
    %245 = vset.pattern.permute.xlu0 1
    %246 = vperm.xlu0 %245, %v203
    %v247 = vpop.permute.xlu0 %246
    %v249 = vlaneseq
    %v250 = vshrl.u32 %v249, 7
    %v251 = vsub.s32 1, %v250
    %v252 = vrot.slane %v204, %v251
    %v253 = vmul.f32 %v235, %v252
    %v254 = vmul.f32 %v239, %v252
    %v255 = vmul.f32 %v243, %v252
    %v256 = vmul.f32 %v247, %v252
    %v257 = vadd.f32 %v229, %v253
    %v258 = vadd.f32 %v230, %v254
    %v259 = vadd.f32 %v231, %v255
    %v260 = vadd.f32 %v232, %v256
    %261 = vset.pattern.permute.xlu0 2
    %262 = vperm.xlu0 %261, %v200
    %v263 = vpop.permute.xlu0 %262
    %265 = vset.pattern.permute.xlu0 2
    %266 = vperm.xlu0 %265, %v201
    %v267 = vpop.permute.xlu0 %266
    %269 = vset.pattern.permute.xlu0 2
    %270 = vperm.xlu0 %269, %v202
    %v271 = vpop.permute.xlu0 %270
    %273 = vset.pattern.permute.xlu0 2
    %274 = vperm.xlu0 %273, %v203
    %v275 = vpop.permute.xlu0 %274
    %v277 = vlaneseq
    %v278 = vshrl.u32 %v277, 7
    %v279 = vsub.s32 2, %v278
    %v280 = vrot.slane %v204, %v279
    %v281 = vmul.f32 %v263, %v280
    %v282 = vmul.f32 %v267, %v280
    %v283 = vmul.f32 %v271, %v280
    %v284 = vmul.f32 %v275, %v280
    %v285 = vadd.f32 %v257, %v281
    %v286 = vadd.f32 %v258, %v282
    %v287 = vadd.f32 %v259, %v283
    %v288 = vadd.f32 %v260, %v284
    %v289 = vld [vmem:[#allocation6] sm:$0x1]
    %v291 = vlaneseq
    %v292 = vshrl.u32 %v291, 7
    %v293 = vsub.s32 0, %v292
    %v294 = vrot.slane %v289, %v293
    %v296 = vadd.f32 %v285, %v294
    %v297 = vadd.f32 %v286, %v294
    %v298 = vadd.f32 %v287, %v294
    %v299 = vadd.f32 %v288, %v294
    %v300 = vmax.f32 %v296, 0.0
    %v301 = vmax.f32 %v297, 0.0
    %v302 = vmax.f32 %v298, 0.0
    %v303 = vmax.f32 %v299, 0.0
    %v304 = vld [vmem:[#allocation8] sm:$0xff]
    %v305 = vld [vmem:[#allocation8 + $0x8] sm:$0xff]
    %v306 = vld [vmem:[#allocation8 + $0x10] sm:$0xff]
    %v307 = vld [vmem:[#allocation8 + $0x18] sm:$0xff]
    %v308 = vld [vmem:[#allocation8 + $0x20] sm:$0xff]
    %v309 = vld [vmem:[#allocation8 + $0x28] sm:$0xff]
    %v310 = vld [vmem:[#allocation8 + $0x30] sm:$0xff]
    %v311 = vld [vmem:[#allocation8 + $0x38] sm:$0xff]
    %v312 = vld [vmem:[#allocation9] sm:$0x1]
    %v314 = vlaneseq
    %v315 = vshrl.u32 %v314, 7
    %v316 = vsub.s32 0, %v315
    %v317 = vrot.slane %v312, %v316
    %vm319 = vcmask 523264
    %v321 = vsel %vm319, %v300, 0
    %v324 = vsel %vm319, %v301, 0
    %v327 = vsel %vm319, %v302, 0
    %v330 = vsel %vm319, %v303, 0
    %332 = vmatprep.subr.mxu0 0.0
    %333 = vmatpush1.msra.mxu0 %v304
    %334 = vmatprep.subr.mxu0 0.0
    %335 = vmatpush1.msra.mxu0 %v305
    %336 = vmatprep.subr.mxu0 0.0
    %337 = vmatpush1.msra.mxu0 %v306
    %338 = vmatprep.subr.mxu0 0.0
    %339 = vmatpush1.msra.mxu0 %v307
    %340 = vmatprep.subr.mxu0 0.0
    %341 = vmatpush1.msra.mxu0 %v308
    %342 = vmatprep.subr.mxu0 0.0
    %343 = vmatpush1.msra.mxu0 %v309
    %344 = vmatprep.subr.mxu0 0.0
    %345 = vmatpush1.msra.mxu0 %v310
    %346 = vmatprep.subr.mxu0 0.0
    %347 = vmatpush1.msra.mxu0 %v311
    %348 = vmatprep.subr.mxu0 0.0
    %349 = vmatpush1.msra.mxu0 0.0
    %350 = vmatprep.subr.mxu0 0.0
    %351 = vmatpush1.msra.mxu0 0.0
    %352 = vmatprep.subr.mxu0 0.0
    %353 = vmatpush1.msra.mxu0 0.0
    %354 = vmatprep.subr.mxu0 0.0
    %355 = vmatpush1.msra.mxu0 0.0
    %356 = vmatprep.subr.mxu0 0.0
    %357 = vmatpush1.msra.mxu0 0.0
    %358 = vmatprep.subr.mxu0 0.0
    %359 = vmatpush1.msra.mxu0 0.0
    %360 = vmatprep.subr.mxu0 0.0
    %361 = vmatpush1.msra.mxu0 0.0
    %362 = vmatprep.subr.mxu0 0.0
    %363 = vmatpush1.msra.mxu0 0.0
    %364 = vmatprep.subr.mxu0 0.0
    %365 = vmatpush1.msra.mxu0 0.0
    %366 = vmatprep.subr.mxu0 0.0
    %367 = vmatpush1.msra.mxu0 0.0
    %368 = vmatprep.subr.mxu0 0.0
    %369 = vmatpush1.msra.mxu0 0.0
    %370 = vmatprep.subr.mxu0 0.0
    %371 = vmatpush1.msra.mxu0 0.0
    %372 = vmatprep.subr.mxu0 0.0
    %373 = vmatpush1.msra.mxu0 0.0
    %374 = vmatprep.subr.mxu0 0.0
    %375 = vmatpush1.msra.mxu0 0.0
    %376 = vmatprep.subr.mxu0 0.0
    %377 = vmatpush1.msra.mxu0 0.0
    %378 = vmatprep.subr.mxu0 0.0
    %379 = vmatpush1.msra.mxu0 0.0
    %380 = vmatprep.subr.mxu0 0.0
    %381 = vmatpush1.msra.mxu0 0.0
    %382 = vmatprep.subr.mxu0 0.0
    %383 = vmatpush1.msra.mxu0 0.0
    %384 = vmatprep.subr.mxu0 0.0
    %385 = vmatpush1.msra.mxu0 0.0
    %386 = vmatprep.subr.mxu0 0.0
    %387 = vmatpush1.msra.mxu0 0.0
    %388 = vmatprep.subr.mxu0 0.0
    %389 = vmatpush1.msra.mxu0 0.0
    %390 = vmatprep.subr.mxu0 0.0
    %391 = vmatpush1.msra.mxu0 0.0
    %392 = vmatprep.subr.mxu0 0.0
    %393 = vmatpush1.msra.mxu0 0.0
    %394 = vmatprep.subr.mxu0 0.0
    %395 = vmatpush1.msra.mxu0 0.0
    %396 = vmatprep.mubr.f32.mxu0 0.0
    %397 = vmatmul.mubr.f32.gmra.mrb[0].mxu0 %v321
    %v398 = vpop.f32.mrb[0].mxu0
    %v399 = vadd.f32 %v317, %v398
    %v400 = vpop.f32.mrb[0].mxu0
    %401 = vmatprep.mubr.f32.mxu0 0.0
    %402 = vmatmul.mubr.f32.gmra.mrb[0].mxu0 %v324
    %v403 = vpop.f32.mrb[0].mxu0
    %v404 = vadd.f32 %v317, %v403
    %v405 = vpop.f32.mrb[0].mxu0
    %406 = vmatprep.mubr.f32.mxu0 0.0
    %407 = vmatmul.mubr.f32.gmra.mrb[0].mxu0 %v327
    %v408 = vpop.f32.mrb[0].mxu0
    %v409 = vadd.f32 %v317, %v408
    %v410 = vpop.f32.mrb[0].mxu0
    %411 = vmatprep.mubr.f32.mxu0 0.0
    %412 = vmatmul.mubr.f32.gmra.mrb[0].mxu0 %v330
    %v413 = vpop.f32.mrb[0].mxu0
    %v414 = vadd.f32 %v317, %v413
    %v415 = vpop.f32.mrb[0].mxu0
    %416 = vdwg.mxu0
    %v417 = vmax.f32 %v399, 0.0
    %v418 = vmax.f32 %v404, 0.0
    %v419 = vmax.f32 %v409, 0.0
    %v420 = vmax.f32 %v414, 0.0
    %v421 = vld [vmem:[#allocation11] sm:$0xff]
    %v422 = vld [vmem:[#allocation11 + $0x8] sm:$0xff]
    %v423 = vld [vmem:[#allocation11 + $0x10] sm:$0xff]
    %v424 = vld [vmem:[#allocation11 + $0x18] sm:$0xff]
    %v425 = vld [vmem:[#allocation11 + $0x20] sm:$0xff]
    %v426 = vld [vmem:[#allocation11 + $0x28] sm:$0xff]
    %v427 = vld [vmem:[#allocation11 + $0x30] sm:$0xff]
    %v428 = vld [vmem:[#allocation11 + $0x38] sm:$0xff]
    %v429 = vld [vmem:[#allocation11 + $0x40] sm:$0xff]
    %v430 = vld [vmem:[#allocation11 + $0x48] sm:$0xff]
    %v431 = vld [vmem:[#allocation11 + $0x50] sm:$0xff]
    %v432 = vld [vmem:[#allocation11 + $0x58] sm:$0xff]
    %v433 = vld [vmem:[#allocation11 + $0x60] sm:$0xff]
    %v434 = vld [vmem:[#allocation11 + $0x68] sm:$0xff]
    %v435 = vld [vmem:[#allocation11 + $0x70] sm:$0xff]
    %v436 = vld [vmem:[#allocation11 + $0x78] sm:$0xff]
    %v437 = vld [vmem:[#allocation11 + $0x80] sm:$0xff]
    %v438 = vld [vmem:[#allocation11 + $0x88] sm:$0xff]
    %v439 = vld [vmem:[#allocation11 + $0x90] sm:$0xff]
    %v440 = vld [vmem:[#allocation11 + $0x98] sm:$0xff]
    %v441 = vld [vmem:[#allocation11 + $0xa0] sm:$0xff]
    %v442 = vld [vmem:[#allocation11 + $0xa8] sm:$0xff]
    %v443 = vld [vmem:[#allocation11 + $0xb0] sm:$0xff]
    %v444 = vld [vmem:[#allocation11 + $0xb8] sm:$0xff]
    %v445 = vld [vmem:[#allocation11 + $0xc0] sm:$0xff]
    %v446 = vld [vmem:[#allocation11 + $0xc8] sm:$0xff]
    %v447 = vld [vmem:[#allocation11 + $0xd0] sm:$0xff]
    %v448 = vld [vmem:[#allocation11 + $0xd8] sm:$0xff]
    %v449 = vld [vmem:[#allocation11 + $0xe0] sm:$0xff]
    %v450 = vld [vmem:[#allocation11 + $0xe8] sm:$0xff]
    %v451 = vld [vmem:[#allocation11 + $0xf0] sm:$0xff]
    %v452 = vld [vmem:[#allocation11 + $0xf8] sm:$0xff]
    %v453 = vld [vmem:[#allocation11 + $0x100] sm:$0xff]
    %v454 = vld [vmem:[#allocation11 + $0x108] sm:$0xff]
    %v455 = vld [vmem:[#allocation11 + $0x110] sm:$0xff]
    %v456 = vld [vmem:[#allocation11 + $0x118] sm:$0xff]
    %v457 = vld [vmem:[#allocation11 + $0x120] sm:$0xff]
    %v458 = vld [vmem:[#allocation11 + $0x128] sm:$0xff]
    %v459 = vld [vmem:[#allocation11 + $0x130] sm:$0xff]
    %v460 = vld [vmem:[#allocation11 + $0x138] sm:$0xff]
    %v461 = vld [vmem:[#allocation11 + $0x140] sm:$0xff]
    %v462 = vld [vmem:[#allocation11 + $0x148] sm:$0xff]
    %v463 = vld [vmem:[#allocation11 + $0x150] sm:$0xff]
    %v464 = vld [vmem:[#allocation11 + $0x158] sm:$0xff]
    %v465 = vld [vmem:[#allocation11 + $0x160] sm:$0xff]
    %v466 = vld [vmem:[#allocation11 + $0x168] sm:$0xff]
    %v467 = vld [vmem:[#allocation11 + $0x170] sm:$0xff]
    %v468 = vld [vmem:[#allocation11 + $0x178] sm:$0xff]
    %v469 = vld [vmem:[#allocation11 + $0x180] sm:$0xff]
    %v470 = vld [vmem:[#allocation11 + $0x188] sm:$0xff]
    %v471 = vld [vmem:[#allocation11 + $0x190] sm:$0xff]
    %v472 = vld [vmem:[#allocation11 + $0x198] sm:$0xff]
    %v473 = vld [vmem:[#allocation11 + $0x1a0] sm:$0xff]
    %v474 = vld [vmem:[#allocation11 + $0x1a8] sm:$0xff]
    %v475 = vld [vmem:[#allocation11 + $0x1b0] sm:$0xff]
    %v476 = vld [vmem:[#allocation11 + $0x1b8] sm:$0xff]
    %v477 = vld [vmem:[#allocation11 + $0x1c0] sm:$0xff]
    %v478 = vld [vmem:[#allocation11 + $0x1c8] sm:$0xff]
    %v479 = vld [vmem:[#allocation11 + $0x1d0] sm:$0xff]
    %v480 = vld [vmem:[#allocation11 + $0x1d8] sm:$0xff]
    %v481 = vld [vmem:[#allocation11 + $0x1e0] sm:$0xff]
    %v482 = vld [vmem:[#allocation11 + $0x1e8] sm:$0xff]
    %v483 = vld [vmem:[#allocation11 + $0x1f0] sm:$0xff]
    %v484 = vld [vmem:[#allocation11 + $0x1f8] sm:$0xff]
    %v485 = vld [vmem:[#allocation11 + $0x200] sm:$0xff]
    %v486 = vld [vmem:[#allocation11 + $0x208] sm:$0xff]
    %v487 = vld [vmem:[#allocation11 + $0x210] sm:$0xff]
    %v488 = vld [vmem:[#allocation11 + $0x218] sm:$0xff]
    %v489 = vld [vmem:[#allocation11 + $0x220] sm:$0xff]
    %v490 = vld [vmem:[#allocation11 + $0x228] sm:$0xff]
    %v491 = vld [vmem:[#allocation11 + $0x230] sm:$0xff]
    %v492 = vld [vmem:[#allocation11 + $0x238] sm:$0xff]
    %v493 = vld [vmem:[#allocation11 + $0x240] sm:$0xff]
    %v494 = vld [vmem:[#allocation11 + $0x248] sm:$0xff]
    %v495 = vld [vmem:[#allocation11 + $0x250] sm:$0xff]
    %v496 = vld [vmem:[#allocation11 + $0x258] sm:$0xff]
    %v497 = vld [vmem:[#allocation11 + $0x260] sm:$0xff]
    %v498 = vld [vmem:[#allocation11 + $0x268] sm:$0xff]
    %v499 = vld [vmem:[#allocation11 + $0x270] sm:$0xff]
    %v500 = vld [vmem:[#allocation11 + $0x278] sm:$0xff]
    %v501 = vld [vmem:[#allocation11 + $0x280] sm:$0xff]
    %v502 = vld [vmem:[#allocation11 + $0x288] sm:$0xff]
    %v503 = vld [vmem:[#allocation11 + $0x290] sm:$0xff]
    %v504 = vld [vmem:[#allocation11 + $0x298] sm:$0xff]
    %v505 = vld [vmem:[#allocation11 + $0x2a0] sm:$0xff]
    %v506 = vld [vmem:[#allocation11 + $0x2a8] sm:$0xff]
    %v507 = vld [vmem:[#allocation11 + $0x2b0] sm:$0xff]
    %v508 = vld [vmem:[#allocation11 + $0x2b8] sm:$0xff]
    %v509 = vld [vmem:[#allocation11 + $0x2c0] sm:$0xff]
    %v510 = vld [vmem:[#allocation11 + $0x2c8] sm:$0xff]
    %v511 = vld [vmem:[#allocation11 + $0x2d0] sm:$0xff]
    %v512 = vld [vmem:[#allocation11 + $0x2d8] sm:$0xff]
    %v513 = vld [vmem:[#allocation11 + $0x2e0] sm:$0xff]
    %v514 = vld [vmem:[#allocation11 + $0x2e8] sm:$0xff]
    %v515 = vld [vmem:[#allocation11 + $0x2f0] sm:$0xff]
    %v516 = vld [vmem:[#allocation11 + $0x2f8] sm:$0xff]
    %v517 = vld [vmem:[#allocation11 + $0x300] sm:$0xff]
    %v518 = vld [vmem:[#allocation11 + $0x308] sm:$0xff]
    %v519 = vld [vmem:[#allocation11 + $0x310] sm:$0xff]
    %v520 = vld [vmem:[#allocation11 + $0x318] sm:$0xff]
    %v521 = vld [vmem:[#allocation11 + $0x320] sm:$0xff]
    %v522 = vld [vmem:[#allocation11 + $0x328] sm:$0xff]
    %v523 = vld [vmem:[#allocation11 + $0x330] sm:$0xff]
    %v524 = vld [vmem:[#allocation11 + $0x338] sm:$0xff]
    %v525 = vld [vmem:[#allocation11 + $0x340] sm:$0xff]
    %v526 = vld [vmem:[#allocation11 + $0x348] sm:$0xff]
    %v527 = vld [vmem:[#allocation11 + $0x350] sm:$0xff]
    %v528 = vld [vmem:[#allocation11 + $0x358] sm:$0xff]
    %v529 = vld [vmem:[#allocation11 + $0x360] sm:$0xff]
    %v530 = vld [vmem:[#allocation11 + $0x368] sm:$0xff]
    %v531 = vld [vmem:[#allocation11 + $0x370] sm:$0xff]
    %v532 = vld [vmem:[#allocation11 + $0x378] sm:$0xff]
    %v533 = vld [vmem:[#allocation11 + $0x380] sm:$0xff]
    %v534 = vld [vmem:[#allocation11 + $0x388] sm:$0xff]
    %v535 = vld [vmem:[#allocation11 + $0x390] sm:$0xff]
    %v536 = vld [vmem:[#allocation11 + $0x398] sm:$0xff]
    %v537 = vld [vmem:[#allocation11 + $0x3a0] sm:$0xff]
    %v538 = vld [vmem:[#allocation11 + $0x3a8] sm:$0xff]
    %v539 = vld [vmem:[#allocation11 + $0x3b0] sm:$0xff]
    %v540 = vld [vmem:[#allocation11 + $0x3b8] sm:$0xff]
    %v541 = vld [vmem:[#allocation11 + $0x3c0] sm:$0xff]
    %v542 = vld [vmem:[#allocation11 + $0x3c8] sm:$0xff]
    %v543 = vld [vmem:[#allocation11 + $0x3d0] sm:$0xff]
    %v544 = vld [vmem:[#allocation11 + $0x3d8] sm:$0xff]
    %v545 = vld [vmem:[#allocation11 + $0x3e0] sm:$0xff]
    %v546 = vld [vmem:[#allocation11 + $0x3e8] sm:$0xff]
    %v547 = vld [vmem:[#allocation11 + $0x3f0] sm:$0xff]
    %v548 = vld [vmem:[#allocation11 + $0x3f8] sm:$0xff]
    %v549 = vld [vmem:[#allocation12] sm:$0xff]
    %v551 = vlaneseq
    %v552 = vshrl.u32 %v551, 7
    %v553 = vsub.s32 0, %v552
    %v554 = vrot.slane %v549, %v553
    %v555 = vlaneseq
    %v556 = vshrl.u32 %v555, 7
    %v557 = vsub.s32 1, %v556
    %v558 = vrot.slane %v549, %v557
    %v559 = vlaneseq
    %v560 = vshrl.u32 %v559, 7
    %v561 = vsub.s32 2, %v560
    %v562 = vrot.slane %v549, %v561
    %v563 = vlaneseq
    %v564 = vshrl.u32 %v563, 7
    %v565 = vsub.s32 3, %v564
    %v566 = vrot.slane %v549, %v565
    %v567 = vlaneseq
    %v568 = vshrl.u32 %v567, 7
    %v569 = vsub.s32 4, %v568
    %v570 = vrot.slane %v549, %v569
    %v571 = vlaneseq
    %v572 = vshrl.u32 %v571, 7
    %v573 = vsub.s32 5, %v572
    %v574 = vrot.slane %v549, %v573
    %v575 = vlaneseq
    %v576 = vshrl.u32 %v575, 7
    %v577 = vsub.s32 6, %v576
    %v578 = vrot.slane %v549, %v577
    %v579 = vlaneseq
    %v580 = vshrl.u32 %v579, 7
    %v581 = vsub.s32 7, %v580
    %v582 = vrot.slane %v549, %v581
    %591 = vmatprep.subr.mxu0 %v422
    %592 = vmatpush1.msra.mxu0 %v421
    %593 = vmatprep.subr.mxu0 %v430
    %594 = vmatpush1.msra.mxu0 %v429
    %595 = vmatprep.subr.mxu0 %v438
    %596 = vmatpush1.msra.mxu0 %v437
    %597 = vmatprep.subr.mxu0 %v446
    %598 = vmatpush1.msra.mxu0 %v445
    %599 = vmatprep.subr.mxu0 %v454
    %600 = vmatpush1.msra.mxu0 %v453
    %601 = vmatprep.subr.mxu0 %v462
    %602 = vmatpush1.msra.mxu0 %v461
    %603 = vmatprep.subr.mxu0 %v470
    %604 = vmatpush1.msra.mxu0 %v469
    %605 = vmatprep.subr.mxu0 %v478
    %606 = vmatpush1.msra.mxu0 %v477
    %607 = vmatprep.subr.mxu0 %v486
    %608 = vmatpush1.msra.mxu0 %v485
    %609 = vmatprep.subr.mxu0 %v494
    %610 = vmatpush1.msra.mxu0 %v493
    %611 = vmatprep.subr.mxu0 %v502
    %612 = vmatpush1.msra.mxu0 %v501
    %613 = vmatprep.subr.mxu0 %v510
    %614 = vmatpush1.msra.mxu0 %v509
    %615 = vmatprep.subr.mxu0 %v518
    %616 = vmatpush1.msra.mxu0 %v517
    %617 = vmatprep.subr.mxu0 %v526
    %618 = vmatpush1.msra.mxu0 %v525
    %619 = vmatprep.subr.mxu0 %v534
    %620 = vmatpush1.msra.mxu0 %v533
    %621 = vmatprep.subr.mxu0 %v542
    %622 = vmatpush1.msra.mxu0 %v541
    %623 = vmatprep.subr.mxu0 0.0
    %624 = vmatpush1.msra.mxu0 0.0
    %625 = vmatprep.subr.mxu0 0.0
    %626 = vmatpush1.msra.mxu0 0.0
    %627 = vmatprep.subr.mxu0 0.0
    %628 = vmatpush1.msra.mxu0 0.0
    %629 = vmatprep.subr.mxu0 0.0
    %630 = vmatpush1.msra.mxu0 0.0
    %631 = vmatprep.subr.mxu0 0.0
    %632 = vmatpush1.msra.mxu0 0.0
    %633 = vmatprep.subr.mxu0 0.0
    %634 = vmatpush1.msra.mxu0 0.0
    %635 = vmatprep.subr.mxu0 0.0
    %636 = vmatpush1.msra.mxu0 0.0
    %637 = vmatprep.subr.mxu0 0.0
    %638 = vmatpush1.msra.mxu0 0.0
    %639 = vmatprep.subr.mxu0 0.0
    %640 = vmatpush1.msra.mxu0 0.0
    %641 = vmatprep.subr.mxu0 0.0
    %642 = vmatpush1.msra.mxu0 0.0
    %643 = vmatprep.subr.mxu0 0.0
    %644 = vmatpush1.msra.mxu0 0.0
    %645 = vmatprep.subr.mxu0 0.0
    %646 = vmatpush1.msra.mxu0 0.0
    %647 = vmatprep.subr.mxu0 0.0
    %648 = vmatpush1.msra.mxu0 0.0
    %649 = vmatprep.subr.mxu0 0.0
    %650 = vmatpush1.msra.mxu0 0.0
    %651 = vmatprep.subr.mxu0 0.0
    %652 = vmatpush1.msra.mxu0 0.0
    %653 = vmatprep.subr.mxu0 0.0
    %654 = vmatpush1.msra.mxu0 0.0
    %655 = vmatprep.mubr.f32.mxu0 0.0
    %656 = vmatmul.mubr.f32.gmra.mrb[0].mxu0 %v417
    %v657 = vpop.f32.mrb[0].mxu0
    %v658 = vadd.f32 %v554, %v657
    %v659 = vpop.f32.mrb[0].mxu0
    %v660 = vadd.f32 %v558, %v659
    %661 = vmatprep.mubr.f32.mxu0 0.0
    %662 = vmatmul.mubr.f32.gmra.mrb[0].mxu0 %v418
    %v663 = vpop.f32.mrb[0].mxu0
    %v664 = vadd.f32 %v554, %v663
    %v665 = vpop.f32.mrb[0].mxu0
    %v666 = vadd.f32 %v558, %v665
    %667 = vmatprep.mubr.f32.mxu0 0.0
    %668 = vmatmul.mubr.f32.gmra.mrb[0].mxu0 %v419
    %v669 = vpop.f32.mrb[0].mxu0
    %v670 = vadd.f32 %v554, %v669
    %v671 = vpop.f32.mrb[0].mxu0
    %v672 = vadd.f32 %v558, %v671
    %673 = vmatprep.mubr.f32.mxu0 0.0
    %674 = vmatmul.mubr.f32.gmra.mrb[0].mxu0 %v420
    %v675 = vpop.f32.mrb[0].mxu0
    %v676 = vadd.f32 %v554, %v675
    %v677 = vpop.f32.mrb[0].mxu0
    %v678 = vadd.f32 %v558, %v677
    %679 = vdwg.mxu0
    %680 = vmatprep.subr.mxu0 %v424
    %681 = vmatpush1.msra.mxu0 %v423
    %682 = vmatprep.subr.mxu0 %v432
    %683 = vmatpush1.msra.mxu0 %v431
    %684 = vmatprep.subr.mxu0 %v440
    %685 = vmatpush1.msra.mxu0 %v439
    %686 = vmatprep.subr.mxu0 %v448
    %687 = vmatpush1.msra.mxu0 %v447
    %688 = vmatprep.subr.mxu0 %v456
    %689 = vmatpush1.msra.mxu0 %v455
    %690 = vmatprep.subr.mxu0 %v464
    %691 = vmatpush1.msra.mxu0 %v463
    %692 = vmatprep.subr.mxu0 %v472
    %693 = vmatpush1.msra.mxu0 %v471
    %694 = vmatprep.subr.mxu0 %v480
    %695 = vmatpush1.msra.mxu0 %v479
    %696 = vmatprep.subr.mxu0 %v488
    %697 = vmatpush1.msra.mxu0 %v487
    %698 = vmatprep.subr.mxu0 %v496
    %699 = vmatpush1.msra.mxu0 %v495
    %700 = vmatprep.subr.mxu0 %v504
    %701 = vmatpush1.msra.mxu0 %v503
    %702 = vmatprep.subr.mxu0 %v512
    %703 = vmatpush1.msra.mxu0 %v511
    %704 = vmatprep.subr.mxu0 %v520
    %705 = vmatpush1.msra.mxu0 %v519
    %706 = vmatprep.subr.mxu0 %v528
    %707 = vmatpush1.msra.mxu0 %v527
    %708 = vmatprep.subr.mxu0 %v536
    %709 = vmatpush1.msra.mxu0 %v535
    %710 = vmatprep.subr.mxu0 %v544
    %711 = vmatpush1.msra.mxu0 %v543
    %712 = vmatprep.subr.mxu0 0.0
    %713 = vmatpush1.msra.mxu0 0.0
    %714 = vmatprep.subr.mxu0 0.0
    %715 = vmatpush1.msra.mxu0 0.0
    %716 = vmatprep.subr.mxu0 0.0
    %717 = vmatpush1.msra.mxu0 0.0
    %718 = vmatprep.subr.mxu0 0.0
    %719 = vmatpush1.msra.mxu0 0.0
    %720 = vmatprep.subr.mxu0 0.0
    %721 = vmatpush1.msra.mxu0 0.0
    %722 = vmatprep.subr.mxu0 0.0
    %723 = vmatpush1.msra.mxu0 0.0
    %724 = vmatprep.subr.mxu0 0.0
    %725 = vmatpush1.msra.mxu0 0.0
    %726 = vmatprep.subr.mxu0 0.0
    %727 = vmatpush1.msra.mxu0 0.0
    %728 = vmatprep.subr.mxu0 0.0
    %729 = vmatpush1.msra.mxu0 0.0
    %730 = vmatprep.subr.mxu0 0.0
    %731 = vmatpush1.msra.mxu0 0.0
    %732 = vmatprep.subr.mxu0 0.0
    %733 = vmatpush1.msra.mxu0 0.0
    %734 = vmatprep.subr.mxu0 0.0
    %735 = vmatpush1.msra.mxu0 0.0
    %736 = vmatprep.subr.mxu0 0.0
    %737 = vmatpush1.msra.mxu0 0.0
    %738 = vmatprep.subr.mxu0 0.0
    %739 = vmatpush1.msra.mxu0 0.0
    %740 = vmatprep.subr.mxu0 0.0
    %741 = vmatpush1.msra.mxu0 0.0
    %742 = vmatprep.subr.mxu0 0.0
    %743 = vmatpush1.msra.mxu0 0.0
    %744 = vmatprep.mubr.f32.mxu0 0.0
    %745 = vmatmul.mubr.f32.gmra.mrb[0].mxu0 %v417
    %v746 = vpop.f32.mrb[0].mxu0
    %v747 = vadd.f32 %v562, %v746
    %v748 = vpop.f32.mrb[0].mxu0
    %v749 = vadd.f32 %v566, %v748
    %750 = vmatprep.mubr.f32.mxu0 0.0
    %751 = vmatmul.mubr.f32.gmra.mrb[0].mxu0 %v418
    %v752 = vpop.f32.mrb[0].mxu0
    %v753 = vadd.f32 %v562, %v752
    %v754 = vpop.f32.mrb[0].mxu0
    %v755 = vadd.f32 %v566, %v754
    %756 = vmatprep.mubr.f32.mxu0 0.0
    %757 = vmatmul.mubr.f32.gmra.mrb[0].mxu0 %v419
    %v758 = vpop.f32.mrb[0].mxu0
    %v759 = vadd.f32 %v562, %v758
    %v760 = vpop.f32.mrb[0].mxu0
    %v761 = vadd.f32 %v566, %v760
    %762 = vmatprep.mubr.f32.mxu0 0.0
    %763 = vmatmul.mubr.f32.gmra.mrb[0].mxu0 %v420
    %v764 = vpop.f32.mrb[0].mxu0
    %v765 = vadd.f32 %v562, %v764
    %v766 = vpop.f32.mrb[0].mxu0
    %v767 = vadd.f32 %v566, %v766
    %768 = vdwg.mxu0
    %769 = vmatprep.subr.mxu0 %v426
    %770 = vmatpush1.msra.mxu0 %v425
    %771 = vmatprep.subr.mxu0 %v434
    %772 = vmatpush1.msra.mxu0 %v433
    %773 = vmatprep.subr.mxu0 %v442
    %774 = vmatpush1.msra.mxu0 %v441
    %775 = vmatprep.subr.mxu0 %v450
    %776 = vmatpush1.msra.mxu0 %v449
    %777 = vmatprep.subr.mxu0 %v458
    %778 = vmatpush1.msra.mxu0 %v457
    %779 = vmatprep.subr.mxu0 %v466
    %780 = vmatpush1.msra.mxu0 %v465
    %781 = vmatprep.subr.mxu0 %v474
    %782 = vmatpush1.msra.mxu0 %v473
    %783 = vmatprep.subr.mxu0 %v482
    %784 = vmatpush1.msra.mxu0 %v481
    %785 = vmatprep.subr.mxu0 %v490
    %786 = vmatpush1.msra.mxu0 %v489
    %787 = vmatprep.subr.mxu0 %v498
    %788 = vmatpush1.msra.mxu0 %v497
    %789 = vmatprep.subr.mxu0 %v506
    %790 = vmatpush1.msra.mxu0 %v505
    %791 = vmatprep.subr.mxu0 %v514
    %792 = vmatpush1.msra.mxu0 %v513
    %793 = vmatprep.subr.mxu0 %v522
    %794 = vmatpush1.msra.mxu0 %v521
    %795 = vmatprep.subr.mxu0 %v530
    %796 = vmatpush1.msra.mxu0 %v529
    %797 = vmatprep.subr.mxu0 %v538
    %798 = vmatpush1.msra.mxu0 %v537
    %799 = vmatprep.subr.mxu0 %v546
    %800 = vmatpush1.msra.mxu0 %v545
    %801 = vmatprep.subr.mxu0 0.0
    %802 = vmatpush1.msra.mxu0 0.0
    %803 = vmatprep.subr.mxu0 0.0
    %804 = vmatpush1.msra.mxu0 0.0
    %805 = vmatprep.subr.mxu0 0.0
    %806 = vmatpush1.msra.mxu0 0.0
    %807 = vmatprep.subr.mxu0 0.0
    %808 = vmatpush1.msra.mxu0 0.0
    %809 = vmatprep.subr.mxu0 0.0
    %810 = vmatpush1.msra.mxu0 0.0
    %811 = vmatprep.subr.mxu0 0.0
    %812 = vmatpush1.msra.mxu0 0.0
    %813 = vmatprep.subr.mxu0 0.0
    %814 = vmatpush1.msra.mxu0 0.0
    %815 = vmatprep.subr.mxu0 0.0
    %816 = vmatpush1.msra.mxu0 0.0
    %817 = vmatprep.subr.mxu0 0.0
    %818 = vmatpush1.msra.mxu0 0.0
    %819 = vmatprep.subr.mxu0 0.0
    %820 = vmatpush1.msra.mxu0 0.0
    %821 = vmatprep.subr.mxu0 0.0
    %822 = vmatpush1.msra.mxu0 0.0
    %823 = vmatprep.subr.mxu0 0.0
    %824 = vmatpush1.msra.mxu0 0.0
    %825 = vmatprep.subr.mxu0 0.0
    %826 = vmatpush1.msra.mxu0 0.0
    %827 = vmatprep.subr.mxu0 0.0
    %828 = vmatpush1.msra.mxu0 0.0
    %829 = vmatprep.subr.mxu0 0.0
    %830 = vmatpush1.msra.mxu0 0.0
    %831 = vmatprep.subr.mxu0 0.0
    %832 = vmatpush1.msra.mxu0 0.0
    %833 = vmatprep.mubr.f32.mxu0 0.0
    %834 = vmatmul.mubr.f32.gmra.mrb[0].mxu0 %v417
    %v835 = vpop.f32.mrb[0].mxu0
    %v836 = vadd.f32 %v570, %v835
    %v837 = vpop.f32.mrb[0].mxu0
    %v838 = vadd.f32 %v574, %v837
    %839 = vmatprep.mubr.f32.mxu0 0.0
    %840 = vmatmul.mubr.f32.gmra.mrb[0].mxu0 %v418
    %v841 = vpop.f32.mrb[0].mxu0
    %v842 = vadd.f32 %v570, %v841
    %v843 = vpop.f32.mrb[0].mxu0
    %v844 = vadd.f32 %v574, %v843
    %845 = vmatprep.mubr.f32.mxu0 0.0
    %846 = vmatmul.mubr.f32.gmra.mrb[0].mxu0 %v419
    %v847 = vpop.f32.mrb[0].mxu0
    %v848 = vadd.f32 %v570, %v847
    %v849 = vpop.f32.mrb[0].mxu0
    %v850 = vadd.f32 %v574, %v849
    %851 = vmatprep.mubr.f32.mxu0 0.0
    %852 = vmatmul.mubr.f32.gmra.mrb[0].mxu0 %v420
    %v853 = vpop.f32.mrb[0].mxu0
    %v854 = vadd.f32 %v570, %v853
    %v855 = vpop.f32.mrb[0].mxu0
    %v856 = vadd.f32 %v574, %v855
    %857 = vdwg.mxu0
    %858 = vmatprep.subr.mxu0 %v428
    %859 = vmatpush1.msra.mxu0 %v427
    %860 = vmatprep.subr.mxu0 %v436
    %861 = vmatpush1.msra.mxu0 %v435
    %862 = vmatprep.subr.mxu0 %v444
    %863 = vmatpush1.msra.mxu0 %v443
    %864 = vmatprep.subr.mxu0 %v452
    %865 = vmatpush1.msra.mxu0 %v451
    %866 = vmatprep.subr.mxu0 %v460
    %867 = vmatpush1.msra.mxu0 %v459
    %868 = vmatprep.subr.mxu0 %v468
    %869 = vmatpush1.msra.mxu0 %v467
    %870 = vmatprep.subr.mxu0 %v476
    %871 = vmatpush1.msra.mxu0 %v475
    %872 = vmatprep.subr.mxu0 %v484
    %873 = vmatpush1.msra.mxu0 %v483
    %874 = vmatprep.subr.mxu0 %v492
    %875 = vmatpush1.msra.mxu0 %v491
    %876 = vmatprep.subr.mxu0 %v500
    %877 = vmatpush1.msra.mxu0 %v499
    %878 = vmatprep.subr.mxu0 %v508
    %879 = vmatpush1.msra.mxu0 %v507
    %880 = vmatprep.subr.mxu0 %v516
    %881 = vmatpush1.msra.mxu0 %v515
    %882 = vmatprep.subr.mxu0 %v524
    %883 = vmatpush1.msra.mxu0 %v523
    %884 = vmatprep.subr.mxu0 %v532
    %885 = vmatpush1.msra.mxu0 %v531
    %886 = vmatprep.subr.mxu0 %v540
    %887 = vmatpush1.msra.mxu0 %v539
    %888 = vmatprep.subr.mxu0 %v548
    %889 = vmatpush1.msra.mxu0 %v547
    %890 = vmatprep.subr.mxu0 0.0
    %891 = vmatpush1.msra.mxu0 0.0
    %892 = vmatprep.subr.mxu0 0.0
    %893 = vmatpush1.msra.mxu0 0.0
    %894 = vmatprep.subr.mxu0 0.0
    %895 = vmatpush1.msra.mxu0 0.0
    %896 = vmatprep.subr.mxu0 0.0
    %897 = vmatpush1.msra.mxu0 0.0
    %898 = vmatprep.subr.mxu0 0.0
    %899 = vmatpush1.msra.mxu0 0.0
    %900 = vmatprep.subr.mxu0 0.0
    %901 = vmatpush1.msra.mxu0 0.0
    %902 = vmatprep.subr.mxu0 0.0
    %903 = vmatpush1.msra.mxu0 0.0
    %904 = vmatprep.subr.mxu0 0.0
    %905 = vmatpush1.msra.mxu0 0.0
    %906 = vmatprep.subr.mxu0 0.0
    %907 = vmatpush1.msra.mxu0 0.0
    %908 = vmatprep.subr.mxu0 0.0
    %909 = vmatpush1.msra.mxu0 0.0
    %910 = vmatprep.subr.mxu0 0.0
    %911 = vmatpush1.msra.mxu0 0.0
    %912 = vmatprep.subr.mxu0 0.0
    %913 = vmatpush1.msra.mxu0 0.0
    %914 = vmatprep.subr.mxu0 0.0
    %915 = vmatpush1.msra.mxu0 0.0
    %916 = vmatprep.subr.mxu0 0.0
    %917 = vmatpush1.msra.mxu0 0.0
    %918 = vmatprep.subr.mxu0 0.0
    %919 = vmatpush1.msra.mxu0 0.0
    %920 = vmatprep.subr.mxu0 0.0
    %921 = vmatpush1.msra.mxu0 0.0
    %922 = vmatprep.mubr.f32.mxu0 0.0
    %923 = vmatmul.mubr.f32.gmra.mrb[0].mxu0 %v417
    %v924 = vpop.f32.mrb[0].mxu0
    %v925 = vadd.f32 %v578, %v924
    %v926 = vpop.f32.mrb[0].mxu0
    %v927 = vadd.f32 %v582, %v926
    %928 = vmatprep.mubr.f32.mxu0 0.0
    %929 = vmatmul.mubr.f32.gmra.mrb[0].mxu0 %v418
    %v930 = vpop.f32.mrb[0].mxu0
    %v931 = vadd.f32 %v578, %v930
    %v932 = vpop.f32.mrb[0].mxu0
    %v933 = vadd.f32 %v582, %v932
    %934 = vmatprep.mubr.f32.mxu0 0.0
    %935 = vmatmul.mubr.f32.gmra.mrb[0].mxu0 %v419
    %v936 = vpop.f32.mrb[0].mxu0
    %v937 = vadd.f32 %v578, %v936
    %v938 = vpop.f32.mrb[0].mxu0
    %v939 = vadd.f32 %v582, %v938
    %940 = vmatprep.mubr.f32.mxu0 0.0
    %941 = vmatmul.mubr.f32.gmra.mrb[0].mxu0 %v420
    %v942 = vpop.f32.mrb[0].mxu0
    %v943 = vadd.f32 %v578, %v942
    %v944 = vpop.f32.mrb[0].mxu0
    %v945 = vadd.f32 %v582, %v944
    %946 = vdwg.mxu0
    %v947 = vmax.f32 %v658, 0.0
    %v948 = vmax.f32 %v660, 0.0
    %v949 = vmax.f32 %v747, 0.0
    %v950 = vmax.f32 %v749, 0.0
    %v951 = vmax.f32 %v836, 0.0
    %v952 = vmax.f32 %v838, 0.0
    %v953 = vmax.f32 %v925, 0.0
    %v954 = vmax.f32 %v927, 0.0
    %v955 = vmax.f32 %v664, 0.0
    %v956 = vmax.f32 %v666, 0.0
    %v957 = vmax.f32 %v753, 0.0
    %v958 = vmax.f32 %v755, 0.0
    %v959 = vmax.f32 %v842, 0.0
    %v960 = vmax.f32 %v844, 0.0
    %v961 = vmax.f32 %v931, 0.0
    %v962 = vmax.f32 %v933, 0.0
    %v963 = vmax.f32 %v670, 0.0
    %v964 = vmax.f32 %v672, 0.0
    %v965 = vmax.f32 %v759, 0.0
    %v966 = vmax.f32 %v761, 0.0
    %v967 = vmax.f32 %v848, 0.0
    %v968 = vmax.f32 %v850, 0.0
    %v969 = vmax.f32 %v937, 0.0
    %v970 = vmax.f32 %v939, 0.0
    %v971 = vmax.f32 %v676, 0.0
    %v972 = vmax.f32 %v678, 0.0
    %v973 = vmax.f32 %v765, 0.0
    %v974 = vmax.f32 %v767, 0.0
    %v975 = vmax.f32 %v854, 0.0
    %v976 = vmax.f32 %v856, 0.0
    %v977 = vmax.f32 %v943, 0.0
    %v978 = vmax.f32 %v945, 0.0
    %v979 = vmax.f32 %v947, %v955
    %v980 = vrot.slane %v979, 4
    %v981 = vmax.f32 %v979, %v980
    %v982 = vrot.slane %v981, 2
    %v983 = vmax.f32 %v981, %v982
    %v984 = vrot.slane %v983, 1
    %v985 = vmax.f32 %v983, %v984
    %v986 = vmax.f32 %v948, %v956
    %v987 = vrot.slane %v986, 4
    %v988 = vmax.f32 %v986, %v987
    %v989 = vrot.slane %v988, 2
    %v990 = vmax.f32 %v988, %v989
    %v991 = vrot.slane %v990, 1
    %v992 = vmax.f32 %v990, %v991
    %v993 = vmax.f32 %v949, %v957
    %v994 = vrot.slane %v993, 4
    %v995 = vmax.f32 %v993, %v994
    %v996 = vrot.slane %v995, 2
    %v997 = vmax.f32 %v995, %v996
    %v998 = vrot.slane %v997, 1
    %v999 = vmax.f32 %v997, %v998
    %v1000 = vmax.f32 %v950, %v958
    %v1001 = vrot.slane %v1000, 4
    %v1002 = vmax.f32 %v1000, %v1001
    %v1003 = vrot.slane %v1002, 2
    %v1004 = vmax.f32 %v1002, %v1003
    %v1005 = vrot.slane %v1004, 1
    %v1006 = vmax.f32 %v1004, %v1005
    %v1007 = vmax.f32 %v951, %v959
    %v1008 = vrot.slane %v1007, 4
    %v1009 = vmax.f32 %v1007, %v1008
    %v1010 = vrot.slane %v1009, 2
    %v1011 = vmax.f32 %v1009, %v1010
    %v1012 = vrot.slane %v1011, 1
    %v1013 = vmax.f32 %v1011, %v1012
    %v1014 = vmax.f32 %v952, %v960
    %v1015 = vrot.slane %v1014, 4
    %v1016 = vmax.f32 %v1014, %v1015
    %v1017 = vrot.slane %v1016, 2
    %v1018 = vmax.f32 %v1016, %v1017
    %v1019 = vrot.slane %v1018, 1
    %v1020 = vmax.f32 %v1018, %v1019
    %v1021 = vmax.f32 %v953, %v961
    %v1022 = vrot.slane %v1021, 4
    %v1023 = vmax.f32 %v1021, %v1022
    %v1024 = vrot.slane %v1023, 2
    %v1025 = vmax.f32 %v1023, %v1024
    %v1026 = vrot.slane %v1025, 1
    %v1027 = vmax.f32 %v1025, %v1026
    %v1028 = vmax.f32 %v954, %v962
    %v1029 = vrot.slane %v1028, 4
    %v1030 = vmax.f32 %v1028, %v1029
    %v1031 = vrot.slane %v1030, 2
    %v1032 = vmax.f32 %v1030, %v1031
    %v1033 = vrot.slane %v1032, 1
    %v1034 = vmax.f32 %v1032, %v1033
    %v1035 = vmax.f32 %v963, %v971
    %v1036 = vrot.slane %v1035, 4
    %v1037 = vmax.f32 %v1035, %v1036
    %v1038 = vrot.slane %v1037, 2
    %v1039 = vmax.f32 %v1037, %v1038
    %v1040 = vrot.slane %v1039, 1
    %v1041 = vmax.f32 %v1039, %v1040
    %v1042 = vmax.f32 %v964, %v972
    %v1043 = vrot.slane %v1042, 4
    %v1044 = vmax.f32 %v1042, %v1043
    %v1045 = vrot.slane %v1044, 2
    %v1046 = vmax.f32 %v1044, %v1045
    %v1047 = vrot.slane %v1046, 1
    %v1048 = vmax.f32 %v1046, %v1047
    %v1049 = vmax.f32 %v965, %v973
    %v1050 = vrot.slane %v1049, 4
    %v1051 = vmax.f32 %v1049, %v1050
    %v1052 = vrot.slane %v1051, 2
    %v1053 = vmax.f32 %v1051, %v1052
    %v1054 = vrot.slane %v1053, 1
    %v1055 = vmax.f32 %v1053, %v1054
    %v1056 = vmax.f32 %v966, %v974
    %v1057 = vrot.slane %v1056, 4
    %v1058 = vmax.f32 %v1056, %v1057
    %v1059 = vrot.slane %v1058, 2
    %v1060 = vmax.f32 %v1058, %v1059
    %v1061 = vrot.slane %v1060, 1
    %v1062 = vmax.f32 %v1060, %v1061
    %v1063 = vmax.f32 %v967, %v975
    %v1064 = vrot.slane %v1063, 4
    %v1065 = vmax.f32 %v1063, %v1064
    %v1066 = vrot.slane %v1065, 2
    %v1067 = vmax.f32 %v1065, %v1066
    %v1068 = vrot.slane %v1067, 1
    %v1069 = vmax.f32 %v1067, %v1068
    %v1070 = vmax.f32 %v968, %v976
    %v1071 = vrot.slane %v1070, 4
    %v1072 = vmax.f32 %v1070, %v1071
    %v1073 = vrot.slane %v1072, 2
    %v1074 = vmax.f32 %v1072, %v1073
    %v1075 = vrot.slane %v1074, 1
    %v1076 = vmax.f32 %v1074, %v1075
    %v1077 = vmax.f32 %v969, %v977
    %v1078 = vrot.slane %v1077, 4
    %v1079 = vmax.f32 %v1077, %v1078
    %v1080 = vrot.slane %v1079, 2
    %v1081 = vmax.f32 %v1079, %v1080
    %v1082 = vrot.slane %v1081, 1
    %v1083 = vmax.f32 %v1081, %v1082
    %v1084 = vmax.f32 %v970, %v978
    %v1085 = vrot.slane %v1084, 4
    %v1086 = vmax.f32 %v1084, %v1085
    %v1087 = vrot.slane %v1086, 2
    %v1088 = vmax.f32 %v1086, %v1087
    %v1089 = vrot.slane %v1088, 1
    %v1090 = vmax.f32 %v1088, %v1089
    %v1091 = vld [vmem:[#allocation2] sm:$0xff]
    %v1092 = vld [vmem:[#allocation2 + $0x8] sm:$0xff]
    %v1109 = vcombine.low %v985, %v992
    %v1110 = vcombine.low %v999, %v1006
    %v1112 = vunpack.c.l.s4 1983009808
    %v1113 = vunpack.c.0.s8 %v1112
    %v1114 = vlaneseq
    %v1115 = vshrl.u32 %v1114, 7
    %v1116 = vsub.s32 %v1113, %v1115
    %v1117 = vrot.slane %v1109, %v1116
    %v1119 = vunpack.c.l.s4 1983009808
    %v1120 = vunpack.c.0.s8 %v1119
    %v1121 = vlaneseq
    %v1122 = vshrl.u32 %v1121, 7
    %v1123 = vsub.s32 %v1120, %v1122
    %v1124 = vrot.slane %v1110, %v1123
    %v1125 = vcombine.low %v1117, %v1124
    %v1126 = vcombine.low %v1013, %v1020
    %v1127 = vcombine.low %v1027, %v1034
    %v1129 = vunpack.c.l.s4 1983009808
    %v1130 = vunpack.c.0.s8 %v1129
    %v1131 = vlaneseq
    %v1132 = vshrl.u32 %v1131, 7
    %v1133 = vsub.s32 %v1130, %v1132
    %v1134 = vrot.slane %v1126, %v1133
    %v1136 = vunpack.c.l.s4 1983009808
    %v1137 = vunpack.c.0.s8 %v1136
    %v1138 = vlaneseq
    %v1139 = vshrl.u32 %v1138, 7
    %v1140 = vsub.s32 %v1137, %v1139
    %v1141 = vrot.slane %v1127, %v1140
    %v1142 = vcombine.low %v1134, %v1141
    %v1143 = vcombine.low %v1041, %v1048
    %v1144 = vcombine.low %v1055, %v1062
    %v1146 = vunpack.c.l.s4 1983009808
    %v1147 = vunpack.c.0.s8 %v1146
    %v1148 = vlaneseq
    %v1149 = vshrl.u32 %v1148, 7
    %v1150 = vsub.s32 %v1147, %v1149
    %v1151 = vrot.slane %v1143, %v1150
    %v1153 = vunpack.c.l.s4 1983009808
    %v1154 = vunpack.c.0.s8 %v1153
    %v1155 = vlaneseq
    %v1156 = vshrl.u32 %v1155, 7
    %v1157 = vsub.s32 %v1154, %v1156
    %v1158 = vrot.slane %v1144, %v1157
    %v1159 = vcombine.low %v1151, %v1158
    %v1160 = vcombine.low %v1069, %v1076
    %v1161 = vcombine.low %v1083, %v1090
    %v1163 = vunpack.c.l.s4 1983009808
    %v1164 = vunpack.c.0.s8 %v1163
    %v1165 = vlaneseq
    %v1166 = vshrl.u32 %v1165, 7
    %v1167 = vsub.s32 %v1164, %v1166
    %v1168 = vrot.slane %v1160, %v1167
    %v1170 = vunpack.c.l.s4 1983009808
    %v1171 = vunpack.c.0.s8 %v1170
    %v1172 = vlaneseq
    %v1173 = vshrl.u32 %v1172, 7
    %v1174 = vsub.s32 %v1171, %v1173
    %v1175 = vrot.slane %v1161, %v1174
    %v1176 = vcombine.low %v1168, %v1175
    %vm1177 = vcmask 1044484
    %v1178 = vsel %vm1177, %v1125, %v1125
    %vm1179 = vcmask 1046534
    %v1180 = vsel %vm1179, %v1125, %v1178
    %v1181 = vrot.slane %v1159, 7
    %vm1182 = vcmask 1041409
    %v1183 = vsel %vm1182, %v1181, %v1180
    %vm1184 = vcmask 1043459
    %v1185 = vsel %vm1184, %v1181, %v1183
    %vm1186 = vcmask 1045509
    %v1187 = vsel %vm1186, %v1181, %v1185
    %vm1188 = vcmask 1047559
    %v1189 = vsel %vm1188, %v1181, %v1187
    %v1190 = vsel %vm1177, %v1142, %v1142
    %v1191 = vsel %vm1179, %v1142, %v1190
    %v1192 = vrot.slane %v1176, 7
    %v1193 = vsel %vm1182, %v1192, %v1191
    %v1194 = vsel %vm1184, %v1192, %v1193
    %v1195 = vsel %vm1186, %v1192, %v1194
    %v1196 = vsel %vm1188, %v1192, %v1195
    %v1199 = vmax.f32 %v1091, %v1189
    %v1200 = vmax.f32 %v1092, %v1196
    %1201 = vst [vmem:[#allocation2] sm:$0xff] %v1199
    %1202 = vst [vmem:[#allocation2 + $0x8] sm:$0xff] %v1200
    // Predicated region
    $region106: #{tpu_custom_call.1} parent=1 // pred_check
      %p1203 = pneg %p194
    $region107: #{tpu_custom_call.1} parent=1 // pred_check_branch
      %1205 = sbr.rel (%p1203) target = $region109
    $region108: #{tpu_custom_call.1} parent=1 // pred_region
      %v1206 = vld [vmem:[#allocation2] sm:$0xff]
      %v1207 = vld [vmem:[#allocation2 + $0x8] sm:$0xff]
      %v1208 = vld [vmem:[#allocation14] sm:$0xff]
      %v1209 = vld [vmem:[#allocation14 + $0x8] sm:$0xff]
      %v1210 = vld [vmem:[#allocation14 + $0x10] sm:$0xff]
      %v1211 = vld [vmem:[#allocation14 + $0x18] sm:$0xff]
      %v1212 = vld [vmem:[#allocation14 + $0x20] sm:$0xff]
      %v1213 = vld [vmem:[#allocation14 + $0x28] sm:$0xff]
      %v1214 = vld [vmem:[#allocation14 + $0x30] sm:$0xff]
      %v1215 = vld [vmem:[#allocation14 + $0x38] sm:$0xff]
      %v1216 = vld [vmem:[#allocation14 + $0x40] sm:$0xff]
      %v1217 = vld [vmem:[#allocation14 + $0x48] sm:$0xff]
      %v1218 = vld [vmem:[#allocation14 + $0x50] sm:$0xff]
      %v1219 = vld [vmem:[#allocation14 + $0x58] sm:$0xff]
      %v1220 = vld [vmem:[#allocation14 + $0x60] sm:$0xff]
      %v1221 = vld [vmem:[#allocation14 + $0x68] sm:$0xff]
      %v1222 = vld [vmem:[#allocation14 + $0x70] sm:$0xff]
      %v1223 = vld [vmem:[#allocation14 + $0x78] sm:$0xff]
      %v1224 = vld [vmem:[#allocation14 + $0x80] sm:$0xff]
      %v1225 = vld [vmem:[#allocation14 + $0x88] sm:$0xff]
      %v1226 = vld [vmem:[#allocation14 + $0x90] sm:$0xff]
      %v1227 = vld [vmem:[#allocation14 + $0x98] sm:$0xff]
      %v1228 = vld [vmem:[#allocation14 + $0xa0] sm:$0xff]
      %v1229 = vld [vmem:[#allocation14 + $0xa8] sm:$0xff]
      %v1230 = vld [vmem:[#allocation14 + $0xb0] sm:$0xff]
      %v1231 = vld [vmem:[#allocation14 + $0xb8] sm:$0xff]
      %v1232 = vld [vmem:[#allocation14 + $0xc0] sm:$0xff]
      %v1233 = vld [vmem:[#allocation14 + $0xc8] sm:$0xff]
      %v1234 = vld [vmem:[#allocation14 + $0xd0] sm:$0xff]
      %v1235 = vld [vmem:[#allocation14 + $0xd8] sm:$0xff]
      %v1236 = vld [vmem:[#allocation14 + $0xe0] sm:$0xff]
      %v1237 = vld [vmem:[#allocation14 + $0xe8] sm:$0xff]
      %v1238 = vld [vmem:[#allocation14 + $0xf0] sm:$0xff]
      %v1239 = vld [vmem:[#allocation14 + $0xf8] sm:$0xff]
      %v1240 = vld [vmem:[#allocation14 + $0x100] sm:$0xff]
      %v1241 = vld [vmem:[#allocation14 + $0x108] sm:$0xff]
      %v1242 = vld [vmem:[#allocation14 + $0x110] sm:$0xff]
      %v1243 = vld [vmem:[#allocation14 + $0x118] sm:$0xff]
      %v1244 = vld [vmem:[#allocation14 + $0x120] sm:$0xff]
      %v1245 = vld [vmem:[#allocation14 + $0x128] sm:$0xff]
      %v1246 = vld [vmem:[#allocation14 + $0x130] sm:$0xff]
      %v1247 = vld [vmem:[#allocation14 + $0x138] sm:$0xff]
      %v1248 = vld [vmem:[#allocation14 + $0x140] sm:$0xff]
      %v1249 = vld [vmem:[#allocation14 + $0x148] sm:$0xff]
      %v1250 = vld [vmem:[#allocation14 + $0x150] sm:$0xff]
      %v1251 = vld [vmem:[#allocation14 + $0x158] sm:$0xff]
      %v1252 = vld [vmem:[#allocation14 + $0x160] sm:$0xff]
      %v1253 = vld [vmem:[#allocation14 + $0x168] sm:$0xff]
      %v1254 = vld [vmem:[#allocation14 + $0x170] sm:$0xff]
      %v1255 = vld [vmem:[#allocation14 + $0x178] sm:$0xff]
      %v1256 = vld [vmem:[#allocation14 + $0x180] sm:$0xff]
      %v1257 = vld [vmem:[#allocation14 + $0x188] sm:$0xff]
      %v1258 = vld [vmem:[#allocation14 + $0x190] sm:$0xff]
      %v1259 = vld [vmem:[#allocation14 + $0x198] sm:$0xff]
      %v1260 = vld [vmem:[#allocation14 + $0x1a0] sm:$0xff]
      %v1261 = vld [vmem:[#allocation14 + $0x1a8] sm:$0xff]
      %v1262 = vld [vmem:[#allocation14 + $0x1b0] sm:$0xff]
      %v1263 = vld [vmem:[#allocation14 + $0x1b8] sm:$0xff]
      %v1264 = vld [vmem:[#allocation14 + $0x1c0] sm:$0xff]
      %v1265 = vld [vmem:[#allocation14 + $0x1c8] sm:$0xff]
      %v1266 = vld [vmem:[#allocation14 + $0x1d0] sm:$0xff]
      %v1267 = vld [vmem:[#allocation14 + $0x1d8] sm:$0xff]
      %v1268 = vld [vmem:[#allocation14 + $0x1e0] sm:$0xff]
      %v1269 = vld [vmem:[#allocation14 + $0x1e8] sm:$0xff]
      %v1270 = vld [vmem:[#allocation14 + $0x1f0] sm:$0xff]
      %v1271 = vld [vmem:[#allocation14 + $0x1f8] sm:$0xff]
      %v1272 = vld [vmem:[#allocation14 + $0x200] sm:$0xff]
      %v1273 = vld [vmem:[#allocation14 + $0x208] sm:$0xff]
      %v1274 = vld [vmem:[#allocation14 + $0x210] sm:$0xff]
      %v1275 = vld [vmem:[#allocation14 + $0x218] sm:$0xff]
      %v1276 = vld [vmem:[#allocation14 + $0x220] sm:$0xff]
      %v1277 = vld [vmem:[#allocation14 + $0x228] sm:$0xff]
      %v1278 = vld [vmem:[#allocation14 + $0x230] sm:$0xff]
      %v1279 = vld [vmem:[#allocation14 + $0x238] sm:$0xff]
      %v1280 = vld [vmem:[#allocation14 + $0x240] sm:$0xff]
      %v1281 = vld [vmem:[#allocation14 + $0x248] sm:$0xff]
      %v1282 = vld [vmem:[#allocation14 + $0x250] sm:$0xff]
      %v1283 = vld [vmem:[#allocation14 + $0x258] sm:$0xff]
      %v1284 = vld [vmem:[#allocation14 + $0x260] sm:$0xff]
      %v1285 = vld [vmem:[#allocation14 + $0x268] sm:$0xff]
      %v1286 = vld [vmem:[#allocation14 + $0x270] sm:$0xff]
      %v1287 = vld [vmem:[#allocation14 + $0x278] sm:$0xff]
      %v1288 = vld [vmem:[#allocation14 + $0x280] sm:$0xff]
      %v1289 = vld [vmem:[#allocation14 + $0x288] sm:$0xff]
      %v1290 = vld [vmem:[#allocation14 + $0x290] sm:$0xff]
      %v1291 = vld [vmem:[#allocation14 + $0x298] sm:$0xff]
      %v1292 = vld [vmem:[#allocation14 + $0x2a0] sm:$0xff]
      %v1293 = vld [vmem:[#allocation14 + $0x2a8] sm:$0xff]
      %v1294 = vld [vmem:[#allocation14 + $0x2b0] sm:$0xff]
      %v1295 = vld [vmem:[#allocation14 + $0x2b8] sm:$0xff]
      %v1296 = vld [vmem:[#allocation14 + $0x2c0] sm:$0xff]
      %v1297 = vld [vmem:[#allocation14 + $0x2c8] sm:$0xff]
      %v1298 = vld [vmem:[#allocation14 + $0x2d0] sm:$0xff]
      %v1299 = vld [vmem:[#allocation14 + $0x2d8] sm:$0xff]
      %v1300 = vld [vmem:[#allocation14 + $0x2e0] sm:$0xff]
      %v1301 = vld [vmem:[#allocation14 + $0x2e8] sm:$0xff]
      %v1302 = vld [vmem:[#allocation14 + $0x2f0] sm:$0xff]
      %v1303 = vld [vmem:[#allocation14 + $0x2f8] sm:$0xff]
      %v1304 = vld [vmem:[#allocation14 + $0x300] sm:$0xff]
      %v1305 = vld [vmem:[#allocation14 + $0x308] sm:$0xff]
      %v1306 = vld [vmem:[#allocation14 + $0x310] sm:$0xff]
      %v1307 = vld [vmem:[#allocation14 + $0x318] sm:$0xff]
      %v1308 = vld [vmem:[#allocation14 + $0x320] sm:$0xff]
      %v1309 = vld [vmem:[#allocation14 + $0x328] sm:$0xff]
      %v1310 = vld [vmem:[#allocation14 + $0x330] sm:$0xff]
      %v1311 = vld [vmem:[#allocation14 + $0x338] sm:$0xff]
      %v1312 = vld [vmem:[#allocation14 + $0x340] sm:$0xff]
      %v1313 = vld [vmem:[#allocation14 + $0x348] sm:$0xff]
      %v1314 = vld [vmem:[#allocation14 + $0x350] sm:$0xff]
      %v1315 = vld [vmem:[#allocation14 + $0x358] sm:$0xff]
      %v1316 = vld [vmem:[#allocation14 + $0x360] sm:$0xff]
      %v1317 = vld [vmem:[#allocation14 + $0x368] sm:$0xff]
      %v1318 = vld [vmem:[#allocation14 + $0x370] sm:$0xff]
      %v1319 = vld [vmem:[#allocation14 + $0x378] sm:$0xff]
      %v1320 = vld [vmem:[#allocation14 + $0x380] sm:$0xff]
      %v1321 = vld [vmem:[#allocation14 + $0x388] sm:$0xff]
      %v1322 = vld [vmem:[#allocation14 + $0x390] sm:$0xff]
      %v1323 = vld [vmem:[#allocation14 + $0x398] sm:$0xff]
      %v1324 = vld [vmem:[#allocation14 + $0x3a0] sm:$0xff]
      %v1325 = vld [vmem:[#allocation14 + $0x3a8] sm:$0xff]
      %v1326 = vld [vmem:[#allocation14 + $0x3b0] sm:$0xff]
      %v1327 = vld [vmem:[#allocation14 + $0x3b8] sm:$0xff]
      %v1328 = vld [vmem:[#allocation14 + $0x3c0] sm:$0xff]
      %v1329 = vld [vmem:[#allocation14 + $0x3c8] sm:$0xff]
      %v1330 = vld [vmem:[#allocation14 + $0x3d0] sm:$0xff]
      %v1331 = vld [vmem:[#allocation14 + $0x3d8] sm:$0xff]
      %v1332 = vld [vmem:[#allocation14 + $0x3e0] sm:$0xff]
      %v1333 = vld [vmem:[#allocation14 + $0x3e8] sm:$0xff]
      %v1334 = vld [vmem:[#allocation14 + $0x3f0] sm:$0xff]
      %v1335 = vld [vmem:[#allocation14 + $0x3f8] sm:$0xff]
      %v1336 = vld [vmem:[#allocation14 + $0x400] sm:$0xff]
      %v1337 = vld [vmem:[#allocation14 + $0x408] sm:$0xff]
      %v1338 = vld [vmem:[#allocation14 + $0x410] sm:$0xff]
      %v1339 = vld [vmem:[#allocation14 + $0x418] sm:$0xff]
      %v1340 = vld [vmem:[#allocation14 + $0x420] sm:$0xff]
      %v1341 = vld [vmem:[#allocation14 + $0x428] sm:$0xff]
      %v1342 = vld [vmem:[#allocation14 + $0x430] sm:$0xff]
      %v1343 = vld [vmem:[#allocation14 + $0x438] sm:$0xff]
      %v1344 = vld [vmem:[#allocation14 + $0x440] sm:$0xff]
      %v1345 = vld [vmem:[#allocation14 + $0x448] sm:$0xff]
      %v1346 = vld [vmem:[#allocation14 + $0x450] sm:$0xff]
      %v1347 = vld [vmem:[#allocation14 + $0x458] sm:$0xff]
      %v1348 = vld [vmem:[#allocation14 + $0x460] sm:$0xff]
      %v1349 = vld [vmem:[#allocation14 + $0x468] sm:$0xff]
      %v1350 = vld [vmem:[#allocation14 + $0x470] sm:$0xff]
      %v1351 = vld [vmem:[#allocation14 + $0x478] sm:$0xff]
      %v1352 = vld [vmem:[#allocation14 + $0x480] sm:$0xff]
      %v1353 = vld [vmem:[#allocation14 + $0x488] sm:$0xff]
      %v1354 = vld [vmem:[#allocation14 + $0x490] sm:$0xff]
      %v1355 = vld [vmem:[#allocation14 + $0x498] sm:$0xff]
      %v1356 = vld [vmem:[#allocation14 + $0x4a0] sm:$0xff]
      %v1357 = vld [vmem:[#allocation14 + $0x4a8] sm:$0xff]
      %v1358 = vld [vmem:[#allocation14 + $0x4b0] sm:$0xff]
      %v1359 = vld [vmem:[#allocation14 + $0x4b8] sm:$0xff]
      %v1360 = vld [vmem:[#allocation14 + $0x4c0] sm:$0xff]
      %v1361 = vld [vmem:[#allocation14 + $0x4c8] sm:$0xff]
      %v1362 = vld [vmem:[#allocation14 + $0x4d0] sm:$0xff]
      %v1363 = vld [vmem:[#allocation14 + $0x4d8] sm:$0xff]
      %v1364 = vld [vmem:[#allocation14 + $0x4e0] sm:$0xff]
      %v1365 = vld [vmem:[#allocation14 + $0x4e8] sm:$0xff]
      %v1366 = vld [vmem:[#allocation14 + $0x4f0] sm:$0xff]
      %v1367 = vld [vmem:[#allocation14 + $0x4f8] sm:$0xff]
      %v1368 = vld [vmem:[#allocation14 + $0x500] sm:$0xff]
      %v1369 = vld [vmem:[#allocation14 + $0x508] sm:$0xff]
      %v1370 = vld [vmem:[#allocation14 + $0x510] sm:$0xff]
      %v1371 = vld [vmem:[#allocation14 + $0x518] sm:$0xff]
      %v1372 = vld [vmem:[#allocation14 + $0x520] sm:$0xff]
      %v1373 = vld [vmem:[#allocation14 + $0x528] sm:$0xff]
      %v1374 = vld [vmem:[#allocation14 + $0x530] sm:$0xff]
      %v1375 = vld [vmem:[#allocation14 + $0x538] sm:$0xff]
      %v1376 = vld [vmem:[#allocation14 + $0x540] sm:$0xff]
      %v1377 = vld [vmem:[#allocation14 + $0x548] sm:$0xff]
      %v1378 = vld [vmem:[#allocation14 + $0x550] sm:$0xff]
      %v1379 = vld [vmem:[#allocation14 + $0x558] sm:$0xff]
      %v1380 = vld [vmem:[#allocation14 + $0x560] sm:$0xff]
      %v1381 = vld [vmem:[#allocation14 + $0x568] sm:$0xff]
      %v1382 = vld [vmem:[#allocation14 + $0x570] sm:$0xff]
      %v1383 = vld [vmem:[#allocation14 + $0x578] sm:$0xff]
      %v1384 = vld [vmem:[#allocation14 + $0x580] sm:$0xff]
      %v1385 = vld [vmem:[#allocation14 + $0x588] sm:$0xff]
      %v1386 = vld [vmem:[#allocation14 + $0x590] sm:$0xff]
      %v1387 = vld [vmem:[#allocation14 + $0x598] sm:$0xff]
      %v1388 = vld [vmem:[#allocation14 + $0x5a0] sm:$0xff]
      %v1389 = vld [vmem:[#allocation14 + $0x5a8] sm:$0xff]
      %v1390 = vld [vmem:[#allocation14 + $0x5b0] sm:$0xff]
      %v1391 = vld [vmem:[#allocation14 + $0x5b8] sm:$0xff]
      %v1392 = vld [vmem:[#allocation14 + $0x5c0] sm:$0xff]
      %v1393 = vld [vmem:[#allocation14 + $0x5c8] sm:$0xff]
      %v1394 = vld [vmem:[#allocation14 + $0x5d0] sm:$0xff]
      %v1395 = vld [vmem:[#allocation14 + $0x5d8] sm:$0xff]
      %v1396 = vld [vmem:[#allocation14 + $0x5e0] sm:$0xff]
      %v1397 = vld [vmem:[#allocation14 + $0x5e8] sm:$0xff]
      %v1398 = vld [vmem:[#allocation14 + $0x5f0] sm:$0xff]
      %v1399 = vld [vmem:[#allocation14 + $0x5f8] sm:$0xff]
      %v1400 = vld [vmem:[#allocation14 + $0x600] sm:$0xff]
      %v1401 = vld [vmem:[#allocation14 + $0x608] sm:$0xff]
      %v1402 = vld [vmem:[#allocation14 + $0x610] sm:$0xff]
      %v1403 = vld [vmem:[#allocation14 + $0x618] sm:$0xff]
      %v1404 = vld [vmem:[#allocation14 + $0x620] sm:$0xff]
      %v1405 = vld [vmem:[#allocation14 + $0x628] sm:$0xff]
      %v1406 = vld [vmem:[#allocation14 + $0x630] sm:$0xff]
      %v1407 = vld [vmem:[#allocation14 + $0x638] sm:$0xff]
      %v1408 = vld [vmem:[#allocation14 + $0x640] sm:$0xff]
      %v1409 = vld [vmem:[#allocation14 + $0x648] sm:$0xff]
      %v1410 = vld [vmem:[#allocation14 + $0x650] sm:$0xff]
      %v1411 = vld [vmem:[#allocation14 + $0x658] sm:$0xff]
      %v1412 = vld [vmem:[#allocation14 + $0x660] sm:$0xff]
      %v1413 = vld [vmem:[#allocation14 + $0x668] sm:$0xff]
      %v1414 = vld [vmem:[#allocation14 + $0x670] sm:$0xff]
      %v1415 = vld [vmem:[#allocation14 + $0x678] sm:$0xff]
      %v1416 = vld [vmem:[#allocation14 + $0x680] sm:$0xff]
      %v1417 = vld [vmem:[#allocation14 + $0x688] sm:$0xff]
      %v1418 = vld [vmem:[#allocation14 + $0x690] sm:$0xff]
      %v1419 = vld [vmem:[#allocation14 + $0x698] sm:$0xff]
      %v1420 = vld [vmem:[#allocation14 + $0x6a0] sm:$0xff]
      %v1421 = vld [vmem:[#allocation14 + $0x6a8] sm:$0xff]
      %v1422 = vld [vmem:[#allocation14 + $0x6b0] sm:$0xff]
      %v1423 = vld [vmem:[#allocation14 + $0x6b8] sm:$0xff]
      %v1424 = vld [vmem:[#allocation14 + $0x6c0] sm:$0xff]
      %v1425 = vld [vmem:[#allocation14 + $0x6c8] sm:$0xff]
      %v1426 = vld [vmem:[#allocation14 + $0x6d0] sm:$0xff]
      %v1427 = vld [vmem:[#allocation14 + $0x6d8] sm:$0xff]
      %v1428 = vld [vmem:[#allocation14 + $0x6e0] sm:$0xff]
      %v1429 = vld [vmem:[#allocation14 + $0x6e8] sm:$0xff]
      %v1430 = vld [vmem:[#allocation14 + $0x6f0] sm:$0xff]
      %v1431 = vld [vmem:[#allocation14 + $0x6f8] sm:$0xff]
      %v1432 = vld [vmem:[#allocation14 + $0x700] sm:$0xff]
      %v1433 = vld [vmem:[#allocation14 + $0x708] sm:$0xff]
      %v1434 = vld [vmem:[#allocation14 + $0x710] sm:$0xff]
      %v1435 = vld [vmem:[#allocation14 + $0x718] sm:$0xff]
      %v1436 = vld [vmem:[#allocation14 + $0x720] sm:$0xff]
      %v1437 = vld [vmem:[#allocation14 + $0x728] sm:$0xff]
      %v1438 = vld [vmem:[#allocation14 + $0x730] sm:$0xff]
      %v1439 = vld [vmem:[#allocation14 + $0x738] sm:$0xff]
      %v1440 = vld [vmem:[#allocation14 + $0x740] sm:$0xff]
      %v1441 = vld [vmem:[#allocation14 + $0x748] sm:$0xff]
      %v1442 = vld [vmem:[#allocation14 + $0x750] sm:$0xff]
      %v1443 = vld [vmem:[#allocation14 + $0x758] sm:$0xff]
      %v1444 = vld [vmem:[#allocation14 + $0x760] sm:$0xff]
      %v1445 = vld [vmem:[#allocation14 + $0x768] sm:$0xff]
      %v1446 = vld [vmem:[#allocation14 + $0x770] sm:$0xff]
      %v1447 = vld [vmem:[#allocation14 + $0x778] sm:$0xff]
      %v1448 = vld [vmem:[#allocation14 + $0x780] sm:$0xff]
      %v1449 = vld [vmem:[#allocation14 + $0x788] sm:$0xff]
      %v1450 = vld [vmem:[#allocation14 + $0x790] sm:$0xff]
      %v1451 = vld [vmem:[#allocation14 + $0x798] sm:$0xff]
      %v1452 = vld [vmem:[#allocation14 + $0x7a0] sm:$0xff]
      %v1453 = vld [vmem:[#allocation14 + $0x7a8] sm:$0xff]
      %v1454 = vld [vmem:[#allocation14 + $0x7b0] sm:$0xff]
      %v1455 = vld [vmem:[#allocation14 + $0x7b8] sm:$0xff]
      %v1456 = vld [vmem:[#allocation14 + $0x7c0] sm:$0xff]
      %v1457 = vld [vmem:[#allocation14 + $0x7c8] sm:$0xff]
      %v1458 = vld [vmem:[#allocation14 + $0x7d0] sm:$0xff]
      %v1459 = vld [vmem:[#allocation14 + $0x7d8] sm:$0xff]
      %v1460 = vld [vmem:[#allocation14 + $0x7e0] sm:$0xff]
      %v1461 = vld [vmem:[#allocation14 + $0x7e8] sm:$0xff]
      %v1462 = vld [vmem:[#allocation14 + $0x7f0] sm:$0xff]
      %v1463 = vld [vmem:[#allocation14 + $0x7f8] sm:$0xff]
      %v1464 = vld [vmem:[#allocation14 + $0x800] sm:$0xff]
      %v1465 = vld [vmem:[#allocation14 + $0x808] sm:$0xff]
      %v1466 = vld [vmem:[#allocation14 + $0x810] sm:$0xff]
      %v1467 = vld [vmem:[#allocation14 + $0x818] sm:$0xff]
      %v1468 = vld [vmem:[#allocation14 + $0x820] sm:$0xff]
      %v1469 = vld [vmem:[#allocation14 + $0x828] sm:$0xff]
      %v1470 = vld [vmem:[#allocation14 + $0x830] sm:$0xff]
      %v1471 = vld [vmem:[#allocation14 + $0x838] sm:$0xff]
      %v1472 = vld [vmem:[#allocation14 + $0x840] sm:$0xff]
      %v1473 = vld [vmem:[#allocation14 + $0x848] sm:$0xff]
      %v1474 = vld [vmem:[#allocation14 + $0x850] sm:$0xff]
      %v1475 = vld [vmem:[#allocation14 + $0x858] sm:$0xff]
      %v1476 = vld [vmem:[#allocation14 + $0x860] sm:$0xff]
      %v1477 = vld [vmem:[#allocation14 + $0x868] sm:$0xff]
      %v1478 = vld [vmem:[#allocation14 + $0x870] sm:$0xff]
      %v1479 = vld [vmem:[#allocation14 + $0x878] sm:$0xff]
      %v1480 = vld [vmem:[#allocation14 + $0x880] sm:$0xff]
      %v1481 = vld [vmem:[#allocation14 + $0x888] sm:$0xff]
      %v1482 = vld [vmem:[#allocation14 + $0x890] sm:$0xff]
      %v1483 = vld [vmem:[#allocation14 + $0x898] sm:$0xff]
      %v1484 = vld [vmem:[#allocation14 + $0x8a0] sm:$0xff]
      %v1485 = vld [vmem:[#allocation14 + $0x8a8] sm:$0xff]
      %v1486 = vld [vmem:[#allocation14 + $0x8b0] sm:$0xff]
      %v1487 = vld [vmem:[#allocation14 + $0x8b8] sm:$0xff]
      %v1488 = vld [vmem:[#allocation14 + $0x8c0] sm:$0xff]
      %v1489 = vld [vmem:[#allocation14 + $0x8c8] sm:$0xff]
      %v1490 = vld [vmem:[#allocation14 + $0x8d0] sm:$0xff]
      %v1491 = vld [vmem:[#allocation14 + $0x8d8] sm:$0xff]
      %v1492 = vld [vmem:[#allocation14 + $0x8e0] sm:$0xff]
      %v1493 = vld [vmem:[#allocation14 + $0x8e8] sm:$0xff]
      %v1494 = vld [vmem:[#allocation14 + $0x8f0] sm:$0xff]
      %v1495 = vld [vmem:[#allocation14 + $0x8f8] sm:$0xff]
      %v1496 = vld [vmem:[#allocation14 + $0x900] sm:$0xff]
      %v1497 = vld [vmem:[#allocation14 + $0x908] sm:$0xff]
      %v1498 = vld [vmem:[#allocation14 + $0x910] sm:$0xff]
      %v1499 = vld [vmem:[#allocation14 + $0x918] sm:$0xff]
      %v1500 = vld [vmem:[#allocation14 + $0x920] sm:$0xff]
      %v1501 = vld [vmem:[#allocation14 + $0x928] sm:$0xff]
      %v1502 = vld [vmem:[#allocation14 + $0x930] sm:$0xff]
      %v1503 = vld [vmem:[#allocation14 + $0x938] sm:$0xff]
      %v1504 = vld [vmem:[#allocation14 + $0x940] sm:$0xff]
      %v1505 = vld [vmem:[#allocation14 + $0x948] sm:$0xff]
      %v1506 = vld [vmem:[#allocation14 + $0x950] sm:$0xff]
      %v1507 = vld [vmem:[#allocation14 + $0x958] sm:$0xff]
      %v1508 = vld [vmem:[#allocation14 + $0x960] sm:$0xff]
      %v1509 = vld [vmem:[#allocation14 + $0x968] sm:$0xff]
      %v1510 = vld [vmem:[#allocation14 + $0x970] sm:$0xff]
      %v1511 = vld [vmem:[#allocation14 + $0x978] sm:$0xff]
      %v1512 = vld [vmem:[#allocation14 + $0x980] sm:$0xff]
      %v1513 = vld [vmem:[#allocation14 + $0x988] sm:$0xff]
      %v1514 = vld [vmem:[#allocation14 + $0x990] sm:$0xff]
      %v1515 = vld [vmem:[#allocation14 + $0x998] sm:$0xff]
      %v1516 = vld [vmem:[#allocation14 + $0x9a0] sm:$0xff]
      %v1517 = vld [vmem:[#allocation14 + $0x9a8] sm:$0xff]
      %v1518 = vld [vmem:[#allocation14 + $0x9b0] sm:$0xff]
      %v1519 = vld [vmem:[#allocation14 + $0x9b8] sm:$0xff]
      %v1520 = vld [vmem:[#allocation14 + $0x9c0] sm:$0xff]
      %v1521 = vld [vmem:[#allocation14 + $0x9c8] sm:$0xff]
      %v1522 = vld [vmem:[#allocation14 + $0x9d0] sm:$0xff]
      %v1523 = vld [vmem:[#allocation14 + $0x9d8] sm:$0xff]
      %v1524 = vld [vmem:[#allocation14 + $0x9e0] sm:$0xff]
      %v1525 = vld [vmem:[#allocation14 + $0x9e8] sm:$0xff]
      %v1526 = vld [vmem:[#allocation14 + $0x9f0] sm:$0xff]
      %v1527 = vld [vmem:[#allocation14 + $0x9f8] sm:$0xff]
      %v1528 = vld [vmem:[#allocation14 + $0xa00] sm:$0xff]
      %v1529 = vld [vmem:[#allocation14 + $0xa08] sm:$0xff]
      %v1530 = vld [vmem:[#allocation14 + $0xa10] sm:$0xff]
      %v1531 = vld [vmem:[#allocation14 + $0xa18] sm:$0xff]
      %v1532 = vld [vmem:[#allocation14 + $0xa20] sm:$0xff]
      %v1533 = vld [vmem:[#allocation14 + $0xa28] sm:$0xff]
      %v1534 = vld [vmem:[#allocation14 + $0xa30] sm:$0xff]
      %v1535 = vld [vmem:[#allocation14 + $0xa38] sm:$0xff]
      %v1536 = vld [vmem:[#allocation14 + $0xa40] sm:$0xff]
      %v1537 = vld [vmem:[#allocation14 + $0xa48] sm:$0xff]
      %v1538 = vld [vmem:[#allocation14 + $0xa50] sm:$0xff]
      %v1539 = vld [vmem:[#allocation14 + $0xa58] sm:$0xff]
      %v1540 = vld [vmem:[#allocation14 + $0xa60] sm:$0xff]
      %v1541 = vld [vmem:[#allocation14 + $0xa68] sm:$0xff]
      %v1542 = vld [vmem:[#allocation14 + $0xa70] sm:$0xff]
      %v1543 = vld [vmem:[#allocation14 + $0xa78] sm:$0xff]
      %v1544 = vld [vmem:[#allocation14 + $0xa80] sm:$0xff]
      %v1545 = vld [vmem:[#allocation14 + $0xa88] sm:$0xff]
      %v1546 = vld [vmem:[#allocation14 + $0xa90] sm:$0xff]
      %v1547 = vld [vmem:[#allocation14 + $0xa98] sm:$0xff]
      %v1548 = vld [vmem:[#allocation14 + $0xaa0] sm:$0xff]
      %v1549 = vld [vmem:[#allocation14 + $0xaa8] sm:$0xff]
      %v1550 = vld [vmem:[#allocation14 + $0xab0] sm:$0xff]
      %v1551 = vld [vmem:[#allocation14 + $0xab8] sm:$0xff]
      %v1552 = vld [vmem:[#allocation14 + $0xac0] sm:$0xff]
      %v1553 = vld [vmem:[#allocation14 + $0xac8] sm:$0xff]
      %v1554 = vld [vmem:[#allocation14 + $0xad0] sm:$0xff]
      %v1555 = vld [vmem:[#allocation14 + $0xad8] sm:$0xff]
      %v1556 = vld [vmem:[#allocation14 + $0xae0] sm:$0xff]
      %v1557 = vld [vmem:[#allocation14 + $0xae8] sm:$0xff]
      %v1558 = vld [vmem:[#allocation14 + $0xaf0] sm:$0xff]
      %v1559 = vld [vmem:[#allocation14 + $0xaf8] sm:$0xff]
      %v1560 = vld [vmem:[#allocation14 + $0xb00] sm:$0xff]
      %v1561 = vld [vmem:[#allocation14 + $0xb08] sm:$0xff]
      %v1562 = vld [vmem:[#allocation14 + $0xb10] sm:$0xff]
      %v1563 = vld [vmem:[#allocation14 + $0xb18] sm:$0xff]
      %v1564 = vld [vmem:[#allocation14 + $0xb20] sm:$0xff]
      %v1565 = vld [vmem:[#allocation14 + $0xb28] sm:$0xff]
      %v1566 = vld [vmem:[#allocation14 + $0xb30] sm:$0xff]
      %v1567 = vld [vmem:[#allocation14 + $0xb38] sm:$0xff]
      %v1568 = vld [vmem:[#allocation14 + $0xb40] sm:$0xff]
      %v1569 = vld [vmem:[#allocation14 + $0xb48] sm:$0xff]
      %v1570 = vld [vmem:[#allocation14 + $0xb50] sm:$0xff]
      %v1571 = vld [vmem:[#allocation14 + $0xb58] sm:$0xff]
      %v1572 = vld [vmem:[#allocation14 + $0xb60] sm:$0xff]
      %v1573 = vld [vmem:[#allocation14 + $0xb68] sm:$0xff]
      %v1574 = vld [vmem:[#allocation14 + $0xb70] sm:$0xff]
      %v1575 = vld [vmem:[#allocation14 + $0xb78] sm:$0xff]
      %v1576 = vld [vmem:[#allocation14 + $0xb80] sm:$0xff]
      %v1577 = vld [vmem:[#allocation14 + $0xb88] sm:$0xff]
      %v1578 = vld [vmem:[#allocation14 + $0xb90] sm:$0xff]
      %v1579 = vld [vmem:[#allocation14 + $0xb98] sm:$0xff]
      %v1580 = vld [vmem:[#allocation14 + $0xba0] sm:$0xff]
      %v1581 = vld [vmem:[#allocation14 + $0xba8] sm:$0xff]
      %v1582 = vld [vmem:[#allocation14 + $0xbb0] sm:$0xff]
      %v1583 = vld [vmem:[#allocation14 + $0xbb8] sm:$0xff]
      %v1584 = vld [vmem:[#allocation14 + $0xbc0] sm:$0xff]
      %v1585 = vld [vmem:[#allocation14 + $0xbc8] sm:$0xff]
      %v1586 = vld [vmem:[#allocation14 + $0xbd0] sm:$0xff]
      %v1587 = vld [vmem:[#allocation14 + $0xbd8] sm:$0xff]
      %v1588 = vld [vmem:[#allocation14 + $0xbe0] sm:$0xff]
      %v1589 = vld [vmem:[#allocation14 + $0xbe8] sm:$0xff]
      %v1590 = vld [vmem:[#allocation14 + $0xbf0] sm:$0xff]
      %v1591 = vld [vmem:[#allocation14 + $0xbf8] sm:$0xff]
      %v1592 = vld [vmem:[#allocation14 + $0xc00] sm:$0xff]
      %v1593 = vld [vmem:[#allocation14 + $0xc08] sm:$0xff]
      %v1594 = vld [vmem:[#allocation14 + $0xc10] sm:$0xff]
      %v1595 = vld [vmem:[#allocation14 + $0xc18] sm:$0xff]
      %v1596 = vld [vmem:[#allocation14 + $0xc20] sm:$0xff]
      %v1597 = vld [vmem:[#allocation14 + $0xc28] sm:$0xff]
      %v1598 = vld [vmem:[#allocation14 + $0xc30] sm:$0xff]
      %v1599 = vld [vmem:[#allocation14 + $0xc38] sm:$0xff]
      %v1600 = vld [vmem:[#allocation14 + $0xc40] sm:$0xff]
      %v1601 = vld [vmem:[#allocation14 + $0xc48] sm:$0xff]
      %v1602 = vld [vmem:[#allocation14 + $0xc50] sm:$0xff]
      %v1603 = vld [vmem:[#allocation14 + $0xc58] sm:$0xff]
      %v1604 = vld [vmem:[#allocation14 + $0xc60] sm:$0xff]
      %v1605 = vld [vmem:[#allocation14 + $0xc68] sm:$0xff]
      %v1606 = vld [vmem:[#allocation14 + $0xc70] sm:$0xff]
      %v1607 = vld [vmem:[#allocation14 + $0xc78] sm:$0xff]
      %v1608 = vld [vmem:[#allocation14 + $0xc80] sm:$0xff]
      %v1609 = vld [vmem:[#allocation14 + $0xc88] sm:$0xff]
      %v1610 = vld [vmem:[#allocation14 + $0xc90] sm:$0xff]
      %v1611 = vld [vmem:[#allocation14 + $0xc98] sm:$0xff]
      %v1612 = vld [vmem:[#allocation14 + $0xca0] sm:$0xff]
      %v1613 = vld [vmem:[#allocation14 + $0xca8] sm:$0xff]
      %v1614 = vld [vmem:[#allocation14 + $0xcb0] sm:$0xff]
      %v1615 = vld [vmem:[#allocation14 + $0xcb8] sm:$0xff]
      %v1616 = vld [vmem:[#allocation14 + $0xcc0] sm:$0xff]
      %v1617 = vld [vmem:[#allocation14 + $0xcc8] sm:$0xff]
      %v1618 = vld [vmem:[#allocation14 + $0xcd0] sm:$0xff]
      %v1619 = vld [vmem:[#allocation14 + $0xcd8] sm:$0xff]
      %v1620 = vld [vmem:[#allocation14 + $0xce0] sm:$0xff]
      %v1621 = vld [vmem:[#allocation14 + $0xce8] sm:$0xff]
      %v1622 = vld [vmem:[#allocation14 + $0xcf0] sm:$0xff]
      %v1623 = vld [vmem:[#allocation14 + $0xcf8] sm:$0xff]
      %v1624 = vld [vmem:[#allocation14 + $0xd00] sm:$0xff]
      %v1625 = vld [vmem:[#allocation14 + $0xd08] sm:$0xff]
      %v1626 = vld [vmem:[#allocation14 + $0xd10] sm:$0xff]
      %v1627 = vld [vmem:[#allocation14 + $0xd18] sm:$0xff]
      %v1628 = vld [vmem:[#allocation14 + $0xd20] sm:$0xff]
      %v1629 = vld [vmem:[#allocation14 + $0xd28] sm:$0xff]
      %v1630 = vld [vmem:[#allocation14 + $0xd30] sm:$0xff]
      %v1631 = vld [vmem:[#allocation14 + $0xd38] sm:$0xff]
      %v1632 = vld [vmem:[#allocation14 + $0xd40] sm:$0xff]
      %v1633 = vld [vmem:[#allocation14 + $0xd48] sm:$0xff]
      %v1634 = vld [vmem:[#allocation14 + $0xd50] sm:$0xff]
      %v1635 = vld [vmem:[#allocation14 + $0xd58] sm:$0xff]
      %v1636 = vld [vmem:[#allocation14 + $0xd60] sm:$0xff]
      %v1637 = vld [vmem:[#allocation14 + $0xd68] sm:$0xff]
      %v1638 = vld [vmem:[#allocation14 + $0xd70] sm:$0xff]
      %v1639 = vld [vmem:[#allocation14 + $0xd78] sm:$0xff]
      %v1640 = vld [vmem:[#allocation14 + $0xd80] sm:$0xff]
      %v1641 = vld [vmem:[#allocation14 + $0xd88] sm:$0xff]
      %v1642 = vld [vmem:[#allocation14 + $0xd90] sm:$0xff]
      %v1643 = vld [vmem:[#allocation14 + $0xd98] sm:$0xff]
      %v1644 = vld [vmem:[#allocation14 + $0xda0] sm:$0xff]
      %v1645 = vld [vmem:[#allocation14 + $0xda8] sm:$0xff]
      %v1646 = vld [vmem:[#allocation14 + $0xdb0] sm:$0xff]
      %v1647 = vld [vmem:[#allocation14 + $0xdb8] sm:$0xff]
      %v1648 = vld [vmem:[#allocation14 + $0xdc0] sm:$0xff]
      %v1649 = vld [vmem:[#allocation14 + $0xdc8] sm:$0xff]
      %v1650 = vld [vmem:[#allocation14 + $0xdd0] sm:$0xff]
      %v1651 = vld [vmem:[#allocation14 + $0xdd8] sm:$0xff]
      %v1652 = vld [vmem:[#allocation14 + $0xde0] sm:$0xff]
      %v1653 = vld [vmem:[#allocation14 + $0xde8] sm:$0xff]
      %v1654 = vld [vmem:[#allocation14 + $0xdf0] sm:$0xff]
      %v1655 = vld [vmem:[#allocation14 + $0xdf8] sm:$0xff]
      %v1656 = vld [vmem:[#allocation14 + $0xe00] sm:$0xff]
      %v1657 = vld [vmem:[#allocation14 + $0xe08] sm:$0xff]
      %v1658 = vld [vmem:[#allocation14 + $0xe10] sm:$0xff]
      %v1659 = vld [vmem:[#allocation14 + $0xe18] sm:$0xff]
      %v1660 = vld [vmem:[#allocation14 + $0xe20] sm:$0xff]
      %v1661 = vld [vmem:[#allocation14 + $0xe28] sm:$0xff]
      %v1662 = vld [vmem:[#allocation14 + $0xe30] sm:$0xff]
      %v1663 = vld [vmem:[#allocation14 + $0xe38] sm:$0xff]
      %v1664 = vld [vmem:[#allocation14 + $0xe40] sm:$0xff]
      %v1665 = vld [vmem:[#allocation14 + $0xe48] sm:$0xff]
      %v1666 = vld [vmem:[#allocation14 + $0xe50] sm:$0xff]
      %v1667 = vld [vmem:[#allocation14 + $0xe58] sm:$0xff]
      %v1668 = vld [vmem:[#allocation14 + $0xe60] sm:$0xff]
      %v1669 = vld [vmem:[#allocation14 + $0xe68] sm:$0xff]
      %v1670 = vld [vmem:[#allocation14 + $0xe70] sm:$0xff]
      %v1671 = vld [vmem:[#allocation14 + $0xe78] sm:$0xff]
      %v1672 = vld [vmem:[#allocation14 + $0xe80] sm:$0xff]
      %v1673 = vld [vmem:[#allocation14 + $0xe88] sm:$0xff]
      %v1674 = vld [vmem:[#allocation14 + $0xe90] sm:$0xff]
      %v1675 = vld [vmem:[#allocation14 + $0xe98] sm:$0xff]
      %v1676 = vld [vmem:[#allocation14 + $0xea0] sm:$0xff]
      %v1677 = vld [vmem:[#allocation14 + $0xea8] sm:$0xff]
      %v1678 = vld [vmem:[#allocation14 + $0xeb0] sm:$0xff]
      %v1679 = vld [vmem:[#allocation14 + $0xeb8] sm:$0xff]
      %v1680 = vld [vmem:[#allocation14 + $0xec0] sm:$0xff]
      %v1681 = vld [vmem:[#allocation14 + $0xec8] sm:$0xff]
      %v1682 = vld [vmem:[#allocation14 + $0xed0] sm:$0xff]
      %v1683 = vld [vmem:[#allocation14 + $0xed8] sm:$0xff]
      %v1684 = vld [vmem:[#allocation14 + $0xee0] sm:$0xff]
      %v1685 = vld [vmem:[#allocation14 + $0xee8] sm:$0xff]
      %v1686 = vld [vmem:[#allocation14 + $0xef0] sm:$0xff]
      %v1687 = vld [vmem:[#allocation14 + $0xef8] sm:$0xff]
      %v1688 = vld [vmem:[#allocation14 + $0xf00] sm:$0xff]
      %v1689 = vld [vmem:[#allocation14 + $0xf08] sm:$0xff]
      %v1690 = vld [vmem:[#allocation14 + $0xf10] sm:$0xff]
      %v1691 = vld [vmem:[#allocation14 + $0xf18] sm:$0xff]
      %v1692 = vld [vmem:[#allocation14 + $0xf20] sm:$0xff]
      %v1693 = vld [vmem:[#allocation14 + $0xf28] sm:$0xff]
      %v1694 = vld [vmem:[#allocation14 + $0xf30] sm:$0xff]
      %v1695 = vld [vmem:[#allocation14 + $0xf38] sm:$0xff]
      %v1696 = vld [vmem:[#allocation14 + $0xf40] sm:$0xff]
      %v1697 = vld [vmem:[#allocation14 + $0xf48] sm:$0xff]
      %v1698 = vld [vmem:[#allocation14 + $0xf50] sm:$0xff]
      %v1699 = vld [vmem:[#allocation14 + $0xf58] sm:$0xff]
      %v1700 = vld [vmem:[#allocation14 + $0xf60] sm:$0xff]
      %v1701 = vld [vmem:[#allocation14 + $0xf68] sm:$0xff]
      %v1702 = vld [vmem:[#allocation14 + $0xf70] sm:$0xff]
      %v1703 = vld [vmem:[#allocation14 + $0xf78] sm:$0xff]
      %v1704 = vld [vmem:[#allocation14 + $0xf80] sm:$0xff]
      %v1705 = vld [vmem:[#allocation14 + $0xf88] sm:$0xff]
      %v1706 = vld [vmem:[#allocation14 + $0xf90] sm:$0xff]
      %v1707 = vld [vmem:[#allocation14 + $0xf98] sm:$0xff]
      %v1708 = vld [vmem:[#allocation14 + $0xfa0] sm:$0xff]
      %v1709 = vld [vmem:[#allocation14 + $0xfa8] sm:$0xff]
      %v1710 = vld [vmem:[#allocation14 + $0xfb0] sm:$0xff]
      %v1711 = vld [vmem:[#allocation14 + $0xfb8] sm:$0xff]
      %v1712 = vld [vmem:[#allocation14 + $0xfc0] sm:$0xff]
      %v1713 = vld [vmem:[#allocation14 + $0xfc8] sm:$0xff]
      %v1714 = vld [vmem:[#allocation14 + $0xfd0] sm:$0xff]
      %v1715 = vld [vmem:[#allocation14 + $0xfd8] sm:$0xff]
      %v1716 = vld [vmem:[#allocation14 + $0xfe0] sm:$0xff]
      %v1717 = vld [vmem:[#allocation14 + $0xfe8] sm:$0xff]
      %v1718 = vld [vmem:[#allocation14 + $0xff0] sm:$0xff]
      %v1719 = vld [vmem:[#allocation14 + $0xff8] sm:$0xff]
      %v1720 = vld [vmem:[#allocation15] sm:$0xf]
      %v1722 = vlaneseq
      %v1723 = vshrl.u32 %v1722, 7
      %v1724 = vsub.s32 0, %v1723
      %v1725 = vrot.slane %v1720, %v1724
      %v1726 = vlaneseq
      %v1727 = vshrl.u32 %v1726, 7
      %v1728 = vsub.s32 1, %v1727
      %v1729 = vrot.slane %v1720, %v1728
      %v1730 = vlaneseq
      %v1731 = vshrl.u32 %v1730, 7
      %v1732 = vsub.s32 2, %v1731
      %v1733 = vrot.slane %v1720, %v1732
      %v1734 = vlaneseq
      %v1735 = vshrl.u32 %v1734, 7
      %v1736 = vsub.s32 3, %v1735
      %v1737 = vrot.slane %v1720, %v1736
      %v1744 = vcombine.high %v1206, %v1206
      %v1746 = vunpack.c.l.s4 1983009808
      %v1747 = vunpack.c.0.s8 %v1746
      %v1748 = vlaneseq
      %v1749 = vshrl.u32 %v1748, 7
      %v1750 = vsub.s32 %v1747, %v1749
      %v1751 = vrot.slane %v1206, %v1750
      %v1753 = vunpack.c.l.s4 1983009808
      %v1754 = vunpack.c.0.s8 %v1753
      %v1755 = vlaneseq
      %v1756 = vshrl.u32 %v1755, 7
      %v1757 = vsub.s32 %v1754, %v1756
      %v1758 = vrot.slane %v1744, %v1757
      %v1759 = vcombine.high %v1751, %v1751
      %v1760 = vcombine.high %v1758, %v1758
      %v1761 = vcombine.high %v1207, %v1207
      %v1763 = vunpack.c.l.s4 1983009808
      %v1764 = vunpack.c.0.s8 %v1763
      %v1765 = vlaneseq
      %v1766 = vshrl.u32 %v1765, 7
      %v1767 = vsub.s32 %v1764, %v1766
      %v1768 = vrot.slane %v1207, %v1767
      %v1770 = vunpack.c.l.s4 1983009808
      %v1771 = vunpack.c.0.s8 %v1770
      %v1772 = vlaneseq
      %v1773 = vshrl.u32 %v1772, 7
      %v1774 = vsub.s32 %v1771, %v1773
      %v1775 = vrot.slane %v1761, %v1774
      %v1776 = vcombine.high %v1768, %v1768
      %v1777 = vcombine.high %v1775, %v1775
      %1786 = vmatprep.subr.mxu0 %v1209
      %1787 = vmatpush1.msra.mxu0 %v1208
      %1788 = vmatprep.subr.mxu0 %v1213
      %1789 = vmatpush1.msra.mxu0 %v1212
      %1790 = vmatprep.subr.mxu0 %v1217
      %1791 = vmatpush1.msra.mxu0 %v1216
      %1792 = vmatprep.subr.mxu0 %v1221
      %1793 = vmatpush1.msra.mxu0 %v1220
      %1794 = vmatprep.subr.mxu0 %v1225
      %1795 = vmatpush1.msra.mxu0 %v1224
      %1796 = vmatprep.subr.mxu0 %v1229
      %1797 = vmatpush1.msra.mxu0 %v1228
      %1798 = vmatprep.subr.mxu0 %v1233
      %1799 = vmatpush1.msra.mxu0 %v1232
      %1800 = vmatprep.subr.mxu0 %v1237
      %1801 = vmatpush1.msra.mxu0 %v1236
      %1802 = vmatprep.subr.mxu0 %v1241
      %1803 = vmatpush1.msra.mxu0 %v1240
      %1804 = vmatprep.subr.mxu0 %v1245
      %1805 = vmatpush1.msra.mxu0 %v1244
      %1806 = vmatprep.subr.mxu0 %v1249
      %1807 = vmatpush1.msra.mxu0 %v1248
      %1808 = vmatprep.subr.mxu0 %v1253
      %1809 = vmatpush1.msra.mxu0 %v1252
      %1810 = vmatprep.subr.mxu0 %v1257
      %1811 = vmatpush1.msra.mxu0 %v1256
      %1812 = vmatprep.subr.mxu0 %v1261
      %1813 = vmatpush1.msra.mxu0 %v1260
      %1814 = vmatprep.subr.mxu0 %v1265
      %1815 = vmatpush1.msra.mxu0 %v1264
      %1816 = vmatprep.subr.mxu0 %v1269
      %1817 = vmatpush1.msra.mxu0 %v1268
      %1818 = vmatprep.subr.mxu0 %v1273
      %1819 = vmatpush1.msra.mxu0 %v1272
      %1820 = vmatprep.subr.mxu0 %v1277
      %1821 = vmatpush1.msra.mxu0 %v1276
      %1822 = vmatprep.subr.mxu0 %v1281
      %1823 = vmatpush1.msra.mxu0 %v1280
      %1824 = vmatprep.subr.mxu0 %v1285
      %1825 = vmatpush1.msra.mxu0 %v1284
      %1826 = vmatprep.subr.mxu0 %v1289
      %1827 = vmatpush1.msra.mxu0 %v1288
      %1828 = vmatprep.subr.mxu0 %v1293
      %1829 = vmatpush1.msra.mxu0 %v1292
      %1830 = vmatprep.subr.mxu0 %v1297
      %1831 = vmatpush1.msra.mxu0 %v1296
      %1832 = vmatprep.subr.mxu0 %v1301
      %1833 = vmatpush1.msra.mxu0 %v1300
      %1834 = vmatprep.subr.mxu0 %v1305
      %1835 = vmatpush1.msra.mxu0 %v1304
      %1836 = vmatprep.subr.mxu0 %v1309
      %1837 = vmatpush1.msra.mxu0 %v1308
      %1838 = vmatprep.subr.mxu0 %v1313
      %1839 = vmatpush1.msra.mxu0 %v1312
      %1840 = vmatprep.subr.mxu0 %v1317
      %1841 = vmatpush1.msra.mxu0 %v1316
      %1842 = vmatprep.subr.mxu0 %v1321
      %1843 = vmatpush1.msra.mxu0 %v1320
      %1844 = vmatprep.subr.mxu0 %v1325
      %1845 = vmatpush1.msra.mxu0 %v1324
      %1846 = vmatprep.subr.mxu0 %v1329
      %1847 = vmatpush1.msra.mxu0 %v1328
      %1848 = vmatprep.subr.mxu0 %v1333
      %1849 = vmatpush1.msra.mxu0 %v1332
      %1850 = vmatprep.mubr.f32.mxu0 %v1759
      %1851 = vmatmul.mubr.f32.gmra.mrb[0].mxu0 %v1751
      %v1852 = vpop.f32.mrb[0].mxu0
      %v1853 = vadd.f32 %v1725, %v1852
      %v1854 = vpop.f32.mrb[0].mxu0
      %v1855 = vadd.f32 %v1729, %v1854
      %1856 = vdwg.mxu0
      %1857 = vmatprep.subr.mxu0 %v1337
      %1858 = vmatpush1.msra.mxu0 %v1336
      %1859 = vmatprep.subr.mxu0 %v1341
      %1860 = vmatpush1.msra.mxu0 %v1340
      %1861 = vmatprep.subr.mxu0 %v1345
      %1862 = vmatpush1.msra.mxu0 %v1344
      %1863 = vmatprep.subr.mxu0 %v1349
      %1864 = vmatpush1.msra.mxu0 %v1348
      %1865 = vmatprep.subr.mxu0 %v1353
      %1866 = vmatpush1.msra.mxu0 %v1352
      %1867 = vmatprep.subr.mxu0 %v1357
      %1868 = vmatpush1.msra.mxu0 %v1356
      %1869 = vmatprep.subr.mxu0 %v1361
      %1870 = vmatpush1.msra.mxu0 %v1360
      %1871 = vmatprep.subr.mxu0 %v1365
      %1872 = vmatpush1.msra.mxu0 %v1364
      %1873 = vmatprep.subr.mxu0 %v1369
      %1874 = vmatpush1.msra.mxu0 %v1368
      %1875 = vmatprep.subr.mxu0 %v1373
      %1876 = vmatpush1.msra.mxu0 %v1372
      %1877 = vmatprep.subr.mxu0 %v1377
      %1878 = vmatpush1.msra.mxu0 %v1376
      %1879 = vmatprep.subr.mxu0 %v1381
      %1880 = vmatpush1.msra.mxu0 %v1380
      %1881 = vmatprep.subr.mxu0 %v1385
      %1882 = vmatpush1.msra.mxu0 %v1384
      %1883 = vmatprep.subr.mxu0 %v1389
      %1884 = vmatpush1.msra.mxu0 %v1388
      %1885 = vmatprep.subr.mxu0 %v1393
      %1886 = vmatpush1.msra.mxu0 %v1392
      %1887 = vmatprep.subr.mxu0 %v1397
      %1888 = vmatpush1.msra.mxu0 %v1396
      %1889 = vmatprep.subr.mxu0 %v1401
      %1890 = vmatpush1.msra.mxu0 %v1400
      %1891 = vmatprep.subr.mxu0 %v1405
      %1892 = vmatpush1.msra.mxu0 %v1404
      %1893 = vmatprep.subr.mxu0 %v1409
      %1894 = vmatpush1.msra.mxu0 %v1408
      %1895 = vmatprep.subr.mxu0 %v1413
      %1896 = vmatpush1.msra.mxu0 %v1412
      %1897 = vmatprep.subr.mxu0 %v1417
      %1898 = vmatpush1.msra.mxu0 %v1416
      %1899 = vmatprep.subr.mxu0 %v1421
      %1900 = vmatpush1.msra.mxu0 %v1420
      %1901 = vmatprep.subr.mxu0 %v1425
      %1902 = vmatpush1.msra.mxu0 %v1424
      %1903 = vmatprep.subr.mxu0 %v1429
      %1904 = vmatpush1.msra.mxu0 %v1428
      %1905 = vmatprep.subr.mxu0 %v1433
      %1906 = vmatpush1.msra.mxu0 %v1432
      %1907 = vmatprep.subr.mxu0 %v1437
      %1908 = vmatpush1.msra.mxu0 %v1436
      %1909 = vmatprep.subr.mxu0 %v1441
      %1910 = vmatpush1.msra.mxu0 %v1440
      %1911 = vmatprep.subr.mxu0 %v1445
      %1912 = vmatpush1.msra.mxu0 %v1444
      %1913 = vmatprep.subr.mxu0 %v1449
      %1914 = vmatpush1.msra.mxu0 %v1448
      %1915 = vmatprep.subr.mxu0 %v1453
      %1916 = vmatpush1.msra.mxu0 %v1452
      %1917 = vmatprep.subr.mxu0 %v1457
      %1918 = vmatpush1.msra.mxu0 %v1456
      %1919 = vmatprep.subr.mxu0 %v1461
      %1920 = vmatpush1.msra.mxu0 %v1460
      %1921 = vmatprep.mubr.f32.mxu0 %v1760
      %1922 = vmatmul.mubr.f32.gmra.mrb[0].mxu0 %v1758
      %v1923 = vpop.f32.mrb[0].mxu0
      %v1924 = vadd.f32 %v1853, %v1923
      %v1925 = vpop.f32.mrb[0].mxu0
      %v1926 = vadd.f32 %v1855, %v1925
      %1927 = vdwg.mxu0
      %1928 = vmatprep.subr.mxu0 %v1465
      %1929 = vmatpush1.msra.mxu0 %v1464
      %1930 = vmatprep.subr.mxu0 %v1469
      %1931 = vmatpush1.msra.mxu0 %v1468
      %1932 = vmatprep.subr.mxu0 %v1473
      %1933 = vmatpush1.msra.mxu0 %v1472
      %1934 = vmatprep.subr.mxu0 %v1477
      %1935 = vmatpush1.msra.mxu0 %v1476
      %1936 = vmatprep.subr.mxu0 %v1481
      %1937 = vmatpush1.msra.mxu0 %v1480
      %1938 = vmatprep.subr.mxu0 %v1485
      %1939 = vmatpush1.msra.mxu0 %v1484
      %1940 = vmatprep.subr.mxu0 %v1489
      %1941 = vmatpush1.msra.mxu0 %v1488
      %1942 = vmatprep.subr.mxu0 %v1493
      %1943 = vmatpush1.msra.mxu0 %v1492
      %1944 = vmatprep.subr.mxu0 %v1497
      %1945 = vmatpush1.msra.mxu0 %v1496
      %1946 = vmatprep.subr.mxu0 %v1501
      %1947 = vmatpush1.msra.mxu0 %v1500
      %1948 = vmatprep.subr.mxu0 %v1505
      %1949 = vmatpush1.msra.mxu0 %v1504
      %1950 = vmatprep.subr.mxu0 %v1509
      %1951 = vmatpush1.msra.mxu0 %v1508
      %1952 = vmatprep.subr.mxu0 %v1513
      %1953 = vmatpush1.msra.mxu0 %v1512
      %1954 = vmatprep.subr.mxu0 %v1517
      %1955 = vmatpush1.msra.mxu0 %v1516
      %1956 = vmatprep.subr.mxu0 %v1521
      %1957 = vmatpush1.msra.mxu0 %v1520
      %1958 = vmatprep.subr.mxu0 %v1525
      %1959 = vmatpush1.msra.mxu0 %v1524
      %1960 = vmatprep.subr.mxu0 %v1529
      %1961 = vmatpush1.msra.mxu0 %v1528
      %1962 = vmatprep.subr.mxu0 %v1533
      %1963 = vmatpush1.msra.mxu0 %v1532
      %1964 = vmatprep.subr.mxu0 %v1537
      %1965 = vmatpush1.msra.mxu0 %v1536
      %1966 = vmatprep.subr.mxu0 %v1541
      %1967 = vmatpush1.msra.mxu0 %v1540
      %1968 = vmatprep.subr.mxu0 %v1545
      %1969 = vmatpush1.msra.mxu0 %v1544
      %1970 = vmatprep.subr.mxu0 %v1549
      %1971 = vmatpush1.msra.mxu0 %v1548
      %1972 = vmatprep.subr.mxu0 %v1553
      %1973 = vmatpush1.msra.mxu0 %v1552
      %1974 = vmatprep.subr.mxu0 %v1557
      %1975 = vmatpush1.msra.mxu0 %v1556
      %1976 = vmatprep.subr.mxu0 %v1561
      %1977 = vmatpush1.msra.mxu0 %v1560
      %1978 = vmatprep.subr.mxu0 %v1565
      %1979 = vmatpush1.msra.mxu0 %v1564
      %1980 = vmatprep.subr.mxu0 %v1569
      %1981 = vmatpush1.msra.mxu0 %v1568
      %1982 = vmatprep.subr.mxu0 %v1573
      %1983 = vmatpush1.msra.mxu0 %v1572
      %1984 = vmatprep.subr.mxu0 %v1577
      %1985 = vmatpush1.msra.mxu0 %v1576
      %1986 = vmatprep.subr.mxu0 %v1581
      %1987 = vmatpush1.msra.mxu0 %v1580
      %1988 = vmatprep.subr.mxu0 %v1585
      %1989 = vmatpush1.msra.mxu0 %v1584
      %1990 = vmatprep.subr.mxu0 %v1589
      %1991 = vmatpush1.msra.mxu0 %v1588
      %1992 = vmatprep.mubr.f32.mxu0 %v1776
      %1993 = vmatmul.mubr.f32.gmra.mrb[0].mxu0 %v1768
      %v1994 = vpop.f32.mrb[0].mxu0
      %v1995 = vadd.f32 %v1924, %v1994
      %v1996 = vpop.f32.mrb[0].mxu0
      %v1997 = vadd.f32 %v1926, %v1996
      %1998 = vdwg.mxu0
      %1999 = vmatprep.subr.mxu0 %v1593
      %2000 = vmatpush1.msra.mxu0 %v1592
      %2001 = vmatprep.subr.mxu0 %v1597
      %2002 = vmatpush1.msra.mxu0 %v1596
      %2003 = vmatprep.subr.mxu0 %v1601
      %2004 = vmatpush1.msra.mxu0 %v1600
      %2005 = vmatprep.subr.mxu0 %v1605
      %2006 = vmatpush1.msra.mxu0 %v1604
      %2007 = vmatprep.subr.mxu0 %v1609
      %2008 = vmatpush1.msra.mxu0 %v1608
      %2009 = vmatprep.subr.mxu0 %v1613
      %2010 = vmatpush1.msra.mxu0 %v1612
      %2011 = vmatprep.subr.mxu0 %v1617
      %2012 = vmatpush1.msra.mxu0 %v1616
      %2013 = vmatprep.subr.mxu0 %v1621
      %2014 = vmatpush1.msra.mxu0 %v1620
      %2015 = vmatprep.subr.mxu0 %v1625
      %2016 = vmatpush1.msra.mxu0 %v1624
      %2017 = vmatprep.subr.mxu0 %v1629
      %2018 = vmatpush1.msra.mxu0 %v1628
      %2019 = vmatprep.subr.mxu0 %v1633
      %2020 = vmatpush1.msra.mxu0 %v1632
      %2021 = vmatprep.subr.mxu0 %v1637
      %2022 = vmatpush1.msra.mxu0 %v1636
      %2023 = vmatprep.subr.mxu0 %v1641
      %2024 = vmatpush1.msra.mxu0 %v1640
      %2025 = vmatprep.subr.mxu0 %v1645
      %2026 = vmatpush1.msra.mxu0 %v1644
      %2027 = vmatprep.subr.mxu0 %v1649
      %2028 = vmatpush1.msra.mxu0 %v1648
      %2029 = vmatprep.subr.mxu0 %v1653
      %2030 = vmatpush1.msra.mxu0 %v1652
      %2031 = vmatprep.subr.mxu0 %v1657
      %2032 = vmatpush1.msra.mxu0 %v1656
      %2033 = vmatprep.subr.mxu0 %v1661
      %2034 = vmatpush1.msra.mxu0 %v1660
      %2035 = vmatprep.subr.mxu0 %v1665
      %2036 = vmatpush1.msra.mxu0 %v1664
      %2037 = vmatprep.subr.mxu0 %v1669
      %2038 = vmatpush1.msra.mxu0 %v1668
      %2039 = vmatprep.subr.mxu0 %v1673
      %2040 = vmatpush1.msra.mxu0 %v1672
      %2041 = vmatprep.subr.mxu0 %v1677
      %2042 = vmatpush1.msra.mxu0 %v1676
      %2043 = vmatprep.subr.mxu0 %v1681
      %2044 = vmatpush1.msra.mxu0 %v1680
      %2045 = vmatprep.subr.mxu0 %v1685
      %2046 = vmatpush1.msra.mxu0 %v1684
      %2047 = vmatprep.subr.mxu0 %v1689
      %2048 = vmatpush1.msra.mxu0 %v1688
      %2049 = vmatprep.subr.mxu0 %v1693
      %2050 = vmatpush1.msra.mxu0 %v1692
      %2051 = vmatprep.subr.mxu0 %v1697
      %2052 = vmatpush1.msra.mxu0 %v1696
      %2053 = vmatprep.subr.mxu0 %v1701
      %2054 = vmatpush1.msra.mxu0 %v1700
      %2055 = vmatprep.subr.mxu0 %v1705
      %2056 = vmatpush1.msra.mxu0 %v1704
      %2057 = vmatprep.subr.mxu0 %v1709
      %2058 = vmatpush1.msra.mxu0 %v1708
      %2059 = vmatprep.subr.mxu0 %v1713
      %2060 = vmatpush1.msra.mxu0 %v1712
      %2061 = vmatprep.subr.mxu0 %v1717
      %2062 = vmatpush1.msra.mxu0 %v1716
      %2063 = vmatprep.mubr.f32.mxu0 %v1777
      %2064 = vmatmul.mubr.f32.gmra.mrb[0].mxu0 %v1775
      %v2065 = vpop.f32.mrb[0].mxu0
      %v2066 = vadd.f32 %v1995, %v2065
      %v2067 = vpop.f32.mrb[0].mxu0
      %v2068 = vadd.f32 %v1997, %v2067
      %2069 = vdwg.mxu0
      %2070 = vmatprep.subr.mxu0 %v1211
      %2071 = vmatpush1.msra.mxu0 %v1210
      %2072 = vmatprep.subr.mxu0 %v1215
      %2073 = vmatpush1.msra.mxu0 %v1214
      %2074 = vmatprep.subr.mxu0 %v1219
      %2075 = vmatpush1.msra.mxu0 %v1218
      %2076 = vmatprep.subr.mxu0 %v1223
      %2077 = vmatpush1.msra.mxu0 %v1222
      %2078 = vmatprep.subr.mxu0 %v1227
      %2079 = vmatpush1.msra.mxu0 %v1226
      %2080 = vmatprep.subr.mxu0 %v1231
      %2081 = vmatpush1.msra.mxu0 %v1230
      %2082 = vmatprep.subr.mxu0 %v1235
      %2083 = vmatpush1.msra.mxu0 %v1234
      %2084 = vmatprep.subr.mxu0 %v1239
      %2085 = vmatpush1.msra.mxu0 %v1238
      %2086 = vmatprep.subr.mxu0 %v1243
      %2087 = vmatpush1.msra.mxu0 %v1242
      %2088 = vmatprep.subr.mxu0 %v1247
      %2089 = vmatpush1.msra.mxu0 %v1246
      %2090 = vmatprep.subr.mxu0 %v1251
      %2091 = vmatpush1.msra.mxu0 %v1250
      %2092 = vmatprep.subr.mxu0 %v1255
      %2093 = vmatpush1.msra.mxu0 %v1254
      %2094 = vmatprep.subr.mxu0 %v1259
      %2095 = vmatpush1.msra.mxu0 %v1258
      %2096 = vmatprep.subr.mxu0 %v1263
      %2097 = vmatpush1.msra.mxu0 %v1262
      %2098 = vmatprep.subr.mxu0 %v1267
      %2099 = vmatpush1.msra.mxu0 %v1266
      %2100 = vmatprep.subr.mxu0 %v1271
      %2101 = vmatpush1.msra.mxu0 %v1270
      %2102 = vmatprep.subr.mxu0 %v1275
      %2103 = vmatpush1.msra.mxu0 %v1274
      %2104 = vmatprep.subr.mxu0 %v1279
      %2105 = vmatpush1.msra.mxu0 %v1278
      %2106 = vmatprep.subr.mxu0 %v1283
      %2107 = vmatpush1.msra.mxu0 %v1282
      %2108 = vmatprep.subr.mxu0 %v1287
      %2109 = vmatpush1.msra.mxu0 %v1286
      %2110 = vmatprep.subr.mxu0 %v1291
      %2111 = vmatpush1.msra.mxu0 %v1290
      %2112 = vmatprep.subr.mxu0 %v1295
      %2113 = vmatpush1.msra.mxu0 %v1294
      %2114 = vmatprep.subr.mxu0 %v1299
      %2115 = vmatpush1.msra.mxu0 %v1298
      %2116 = vmatprep.subr.mxu0 %v1303
      %2117 = vmatpush1.msra.mxu0 %v1302
      %2118 = vmatprep.subr.mxu0 %v1307
      %2119 = vmatpush1.msra.mxu0 %v1306
      %2120 = vmatprep.subr.mxu0 %v1311
      %2121 = vmatpush1.msra.mxu0 %v1310
      %2122 = vmatprep.subr.mxu0 %v1315
      %2123 = vmatpush1.msra.mxu0 %v1314
      %2124 = vmatprep.subr.mxu0 %v1319
      %2125 = vmatpush1.msra.mxu0 %v1318
      %2126 = vmatprep.subr.mxu0 %v1323
      %2127 = vmatpush1.msra.mxu0 %v1322
      %2128 = vmatprep.subr.mxu0 %v1327
      %2129 = vmatpush1.msra.mxu0 %v1326
      %2130 = vmatprep.subr.mxu0 %v1331
      %2131 = vmatpush1.msra.mxu0 %v1330
      %2132 = vmatprep.subr.mxu0 %v1335
      %2133 = vmatpush1.msra.mxu0 %v1334
      %2134 = vmatprep.mubr.f32.mxu0 %v1759
      %2135 = vmatmul.mubr.f32.gmra.mrb[0].mxu0 %v1751
      %v2136 = vpop.f32.mrb[0].mxu0
      %v2137 = vadd.f32 %v1733, %v2136
      %v2138 = vpop.f32.mrb[0].mxu0
      %v2139 = vadd.f32 %v1737, %v2138
      %2140 = vdwg.mxu0
      %2141 = vmatprep.subr.mxu0 %v1339
      %2142 = vmatpush1.msra.mxu0 %v1338
      %2143 = vmatprep.subr.mxu0 %v1343
      %2144 = vmatpush1.msra.mxu0 %v1342
      %2145 = vmatprep.subr.mxu0 %v1347
      %2146 = vmatpush1.msra.mxu0 %v1346
      %2147 = vmatprep.subr.mxu0 %v1351
      %2148 = vmatpush1.msra.mxu0 %v1350
      %2149 = vmatprep.subr.mxu0 %v1355
      %2150 = vmatpush1.msra.mxu0 %v1354
      %2151 = vmatprep.subr.mxu0 %v1359
      %2152 = vmatpush1.msra.mxu0 %v1358
      %2153 = vmatprep.subr.mxu0 %v1363
      %2154 = vmatpush1.msra.mxu0 %v1362
      %2155 = vmatprep.subr.mxu0 %v1367
      %2156 = vmatpush1.msra.mxu0 %v1366
      %2157 = vmatprep.subr.mxu0 %v1371
      %2158 = vmatpush1.msra.mxu0 %v1370
      %2159 = vmatprep.subr.mxu0 %v1375
      %2160 = vmatpush1.msra.mxu0 %v1374
      %2161 = vmatprep.subr.mxu0 %v1379
      %2162 = vmatpush1.msra.mxu0 %v1378
      %2163 = vmatprep.subr.mxu0 %v1383
      %2164 = vmatpush1.msra.mxu0 %v1382
      %2165 = vmatprep.subr.mxu0 %v1387
      %2166 = vmatpush1.msra.mxu0 %v1386
      %2167 = vmatprep.subr.mxu0 %v1391
      %2168 = vmatpush1.msra.mxu0 %v1390
      %2169 = vmatprep.subr.mxu0 %v1395
      %2170 = vmatpush1.msra.mxu0 %v1394
      %2171 = vmatprep.subr.mxu0 %v1399
      %2172 = vmatpush1.msra.mxu0 %v1398
      %2173 = vmatprep.subr.mxu0 %v1403
      %2174 = vmatpush1.msra.mxu0 %v1402
      %2175 = vmatprep.subr.mxu0 %v1407
      %2176 = vmatpush1.msra.mxu0 %v1406
      %2177 = vmatprep.subr.mxu0 %v1411
      %2178 = vmatpush1.msra.mxu0 %v1410
      %2179 = vmatprep.subr.mxu0 %v1415
      %2180 = vmatpush1.msra.mxu0 %v1414
      %2181 = vmatprep.subr.mxu0 %v1419
      %2182 = vmatpush1.msra.mxu0 %v1418
      %2183 = vmatprep.subr.mxu0 %v1423
      %2184 = vmatpush1.msra.mxu0 %v1422
      %2185 = vmatprep.subr.mxu0 %v1427
      %2186 = vmatpush1.msra.mxu0 %v1426
      %2187 = vmatprep.subr.mxu0 %v1431
      %2188 = vmatpush1.msra.mxu0 %v1430
      %2189 = vmatprep.subr.mxu0 %v1435
      %2190 = vmatpush1.msra.mxu0 %v1434
      %2191 = vmatprep.subr.mxu0 %v1439
      %2192 = vmatpush1.msra.mxu0 %v1438
      %2193 = vmatprep.subr.mxu0 %v1443
      %2194 = vmatpush1.msra.mxu0 %v1442
      %2195 = vmatprep.subr.mxu0 %v1447
      %2196 = vmatpush1.msra.mxu0 %v1446
      %2197 = vmatprep.subr.mxu0 %v1451
      %2198 = vmatpush1.msra.mxu0 %v1450
      %2199 = vmatprep.subr.mxu0 %v1455
      %2200 = vmatpush1.msra.mxu0 %v1454
      %2201 = vmatprep.subr.mxu0 %v1459
      %2202 = vmatpush1.msra.mxu0 %v1458
      %2203 = vmatprep.subr.mxu0 %v1463
      %2204 = vmatpush1.msra.mxu0 %v1462
      %2205 = vmatprep.mubr.f32.mxu0 %v1760
      %2206 = vmatmul.mubr.f32.gmra.mrb[0].mxu0 %v1758
      %v2207 = vpop.f32.mrb[0].mxu0
      %v2208 = vadd.f32 %v2137, %v2207
      %v2209 = vpop.f32.mrb[0].mxu0
      %v2210 = vadd.f32 %v2139, %v2209
      %2211 = vdwg.mxu0
      %2212 = vmatprep.subr.mxu0 %v1467
      %2213 = vmatpush1.msra.mxu0 %v1466
      %2214 = vmatprep.subr.mxu0 %v1471
      %2215 = vmatpush1.msra.mxu0 %v1470
      %2216 = vmatprep.subr.mxu0 %v1475
      %2217 = vmatpush1.msra.mxu0 %v1474
      %2218 = vmatprep.subr.mxu0 %v1479
      %2219 = vmatpush1.msra.mxu0 %v1478
      %2220 = vmatprep.subr.mxu0 %v1483
      %2221 = vmatpush1.msra.mxu0 %v1482
      %2222 = vmatprep.subr.mxu0 %v1487
      %2223 = vmatpush1.msra.mxu0 %v1486
      %2224 = vmatprep.subr.mxu0 %v1491
      %2225 = vmatpush1.msra.mxu0 %v1490
      %2226 = vmatprep.subr.mxu0 %v1495
      %2227 = vmatpush1.msra.mxu0 %v1494
      %2228 = vmatprep.subr.mxu0 %v1499
      %2229 = vmatpush1.msra.mxu0 %v1498
      %2230 = vmatprep.subr.mxu0 %v1503
      %2231 = vmatpush1.msra.mxu0 %v1502
      %2232 = vmatprep.subr.mxu0 %v1507
      %2233 = vmatpush1.msra.mxu0 %v1506
      %2234 = vmatprep.subr.mxu0 %v1511
      %2235 = vmatpush1.msra.mxu0 %v1510
      %2236 = vmatprep.subr.mxu0 %v1515
      %2237 = vmatpush1.msra.mxu0 %v1514
      %2238 = vmatprep.subr.mxu0 %v1519
      %2239 = vmatpush1.msra.mxu0 %v1518
      %2240 = vmatprep.subr.mxu0 %v1523
      %2241 = vmatpush1.msra.mxu0 %v1522
      %2242 = vmatprep.subr.mxu0 %v1527
      %2243 = vmatpush1.msra.mxu0 %v1526
      %2244 = vmatprep.subr.mxu0 %v1531
      %2245 = vmatpush1.msra.mxu0 %v1530
      %2246 = vmatprep.subr.mxu0 %v1535
      %2247 = vmatpush1.msra.mxu0 %v1534
      %2248 = vmatprep.subr.mxu0 %v1539
      %2249 = vmatpush1.msra.mxu0 %v1538
      %2250 = vmatprep.subr.mxu0 %v1543
      %2251 = vmatpush1.msra.mxu0 %v1542
      %2252 = vmatprep.subr.mxu0 %v1547
      %2253 = vmatpush1.msra.mxu0 %v1546
      %2254 = vmatprep.subr.mxu0 %v1551
      %2255 = vmatpush1.msra.mxu0 %v1550
      %2256 = vmatprep.subr.mxu0 %v1555
      %2257 = vmatpush1.msra.mxu0 %v1554
      %2258 = vmatprep.subr.mxu0 %v1559
      %2259 = vmatpush1.msra.mxu0 %v1558
      %2260 = vmatprep.subr.mxu0 %v1563
      %2261 = vmatpush1.msra.mxu0 %v1562
      %2262 = vmatprep.subr.mxu0 %v1567
      %2263 = vmatpush1.msra.mxu0 %v1566
      %2264 = vmatprep.subr.mxu0 %v1571
      %2265 = vmatpush1.msra.mxu0 %v1570
      %2266 = vmatprep.subr.mxu0 %v1575
      %2267 = vmatpush1.msra.mxu0 %v1574
      %2268 = vmatprep.subr.mxu0 %v1579
      %2269 = vmatpush1.msra.mxu0 %v1578
      %2270 = vmatprep.subr.mxu0 %v1583
      %2271 = vmatpush1.msra.mxu0 %v1582
      %2272 = vmatprep.subr.mxu0 %v1587
      %2273 = vmatpush1.msra.mxu0 %v1586
      %2274 = vmatprep.subr.mxu0 %v1591
      %2275 = vmatpush1.msra.mxu0 %v1590
      %2276 = vmatprep.mubr.f32.mxu0 %v1776
      %2277 = vmatmul.mubr.f32.gmra.mrb[0].mxu0 %v1768
      %v2278 = vpop.f32.mrb[0].mxu0
      %v2279 = vadd.f32 %v2208, %v2278
      %v2280 = vpop.f32.mrb[0].mxu0
      %v2281 = vadd.f32 %v2210, %v2280
      %2282 = vdwg.mxu0
      %2283 = vmatprep.subr.mxu0 %v1595
      %2284 = vmatpush1.msra.mxu0 %v1594
      %2285 = vmatprep.subr.mxu0 %v1599
      %2286 = vmatpush1.msra.mxu0 %v1598
      %2287 = vmatprep.subr.mxu0 %v1603
      %2288 = vmatpush1.msra.mxu0 %v1602
      %2289 = vmatprep.subr.mxu0 %v1607
      %2290 = vmatpush1.msra.mxu0 %v1606
      %2291 = vmatprep.subr.mxu0 %v1611
      %2292 = vmatpush1.msra.mxu0 %v1610
      %2293 = vmatprep.subr.mxu0 %v1615
      %2294 = vmatpush1.msra.mxu0 %v1614
      %2295 = vmatprep.subr.mxu0 %v1619
      %2296 = vmatpush1.msra.mxu0 %v1618
      %2297 = vmatprep.subr.mxu0 %v1623
      %2298 = vmatpush1.msra.mxu0 %v1622
      %2299 = vmatprep.subr.mxu0 %v1627
      %2300 = vmatpush1.msra.mxu0 %v1626
      %2301 = vmatprep.subr.mxu0 %v1631
      %2302 = vmatpush1.msra.mxu0 %v1630
      %2303 = vmatprep.subr.mxu0 %v1635
      %2304 = vmatpush1.msra.mxu0 %v1634
      %2305 = vmatprep.subr.mxu0 %v1639
      %2306 = vmatpush1.msra.mxu0 %v1638
      %2307 = vmatprep.subr.mxu0 %v1643
      %2308 = vmatpush1.msra.mxu0 %v1642
      %2309 = vmatprep.subr.mxu0 %v1647
      %2310 = vmatpush1.msra.mxu0 %v1646
      %2311 = vmatprep.subr.mxu0 %v1651
      %2312 = vmatpush1.msra.mxu0 %v1650
      %2313 = vmatprep.subr.mxu0 %v1655
      %2314 = vmatpush1.msra.mxu0 %v1654
      %2315 = vmatprep.subr.mxu0 %v1659
      %2316 = vmatpush1.msra.mxu0 %v1658
      %2317 = vmatprep.subr.mxu0 %v1663
      %2318 = vmatpush1.msra.mxu0 %v1662
      %2319 = vmatprep.subr.mxu0 %v1667
      %2320 = vmatpush1.msra.mxu0 %v1666
      %2321 = vmatprep.subr.mxu0 %v1671
      %2322 = vmatpush1.msra.mxu0 %v1670
      %2323 = vmatprep.subr.mxu0 %v1675
      %2324 = vmatpush1.msra.mxu0 %v1674
      %2325 = vmatprep.subr.mxu0 %v1679
      %2326 = vmatpush1.msra.mxu0 %v1678
      %2327 = vmatprep.subr.mxu0 %v1683
      %2328 = vmatpush1.msra.mxu0 %v1682
      %2329 = vmatprep.subr.mxu0 %v1687
      %2330 = vmatpush1.msra.mxu0 %v1686
      %2331 = vmatprep.subr.mxu0 %v1691
      %2332 = vmatpush1.msra.mxu0 %v1690
      %2333 = vmatprep.subr.mxu0 %v1695
      %2334 = vmatpush1.msra.mxu0 %v1694
      %2335 = vmatprep.subr.mxu0 %v1699
      %2336 = vmatpush1.msra.mxu0 %v1698
      %2337 = vmatprep.subr.mxu0 %v1703
      %2338 = vmatpush1.msra.mxu0 %v1702
      %2339 = vmatprep.subr.mxu0 %v1707
      %2340 = vmatpush1.msra.mxu0 %v1706
      %2341 = vmatprep.subr.mxu0 %v1711
      %2342 = vmatpush1.msra.mxu0 %v1710
      %2343 = vmatprep.subr.mxu0 %v1715
      %2344 = vmatpush1.msra.mxu0 %v1714
      %2345 = vmatprep.subr.mxu0 %v1719
      %2346 = vmatpush1.msra.mxu0 %v1718
      %2347 = vmatprep.mubr.f32.mxu0 %v1777
      %2348 = vmatmul.mubr.f32.gmra.mrb[0].mxu0 %v1775
      %v2349 = vpop.f32.mrb[0].mxu0
      %v2350 = vadd.f32 %v2279, %v2349
      %v2351 = vpop.f32.mrb[0].mxu0
      %v2352 = vadd.f32 %v2281, %v2351
      %2353 = vdwg.mxu0
      %v2354 = vmax.f32 %v2066, 0.0
      %v2355 = vmax.f32 %v2068, 0.0
      %v2356 = vmax.f32 %v2350, 0.0
      %v2357 = vmax.f32 %v2352, 0.0
      %v2358 = vld [vmem:[#allocation17] sm:$0xff]
      %v2359 = vld [vmem:[#allocation17 + $0x8] sm:$0xff]
      %v2360 = vld [vmem:[#allocation17 + $0x10] sm:$0xff]
      %v2361 = vld [vmem:[#allocation17 + $0x18] sm:$0xff]
      %v2362 = vld [vmem:[#allocation17 + $0x20] sm:$0xff]
      %v2363 = vld [vmem:[#allocation17 + $0x28] sm:$0xff]
      %v2364 = vld [vmem:[#allocation17 + $0x30] sm:$0xff]
      %v2365 = vld [vmem:[#allocation17 + $0x38] sm:$0xff]
      %v2366 = vld [vmem:[#allocation17 + $0x40] sm:$0xff]
      %v2367 = vld [vmem:[#allocation17 + $0x48] sm:$0xff]
      %v2368 = vld [vmem:[#allocation17 + $0x50] sm:$0xff]
      %v2369 = vld [vmem:[#allocation17 + $0x58] sm:$0xff]
      %v2370 = vld [vmem:[#allocation17 + $0x60] sm:$0xff]
      %v2371 = vld [vmem:[#allocation17 + $0x68] sm:$0xff]
      %v2372 = vld [vmem:[#allocation17 + $0x70] sm:$0xff]
      %v2373 = vld [vmem:[#allocation17 + $0x78] sm:$0xff]
      %v2374 = vld [vmem:[#allocation17 + $0x80] sm:$0xff]
      %v2375 = vld [vmem:[#allocation17 + $0x88] sm:$0xff]
      %v2376 = vld [vmem:[#allocation17 + $0x90] sm:$0xff]
      %v2377 = vld [vmem:[#allocation17 + $0x98] sm:$0xff]
      %v2378 = vld [vmem:[#allocation17 + $0xa0] sm:$0xff]
      %v2379 = vld [vmem:[#allocation17 + $0xa8] sm:$0xff]
      %v2380 = vld [vmem:[#allocation17 + $0xb0] sm:$0xff]
      %v2381 = vld [vmem:[#allocation17 + $0xb8] sm:$0xff]
      %v2382 = vld [vmem:[#allocation17 + $0xc0] sm:$0xff]
      %v2383 = vld [vmem:[#allocation17 + $0xc8] sm:$0xff]
      %v2384 = vld [vmem:[#allocation17 + $0xd0] sm:$0xff]
      %v2385 = vld [vmem:[#allocation17 + $0xd8] sm:$0xff]
      %v2386 = vld [vmem:[#allocation17 + $0xe0] sm:$0xff]
      %v2387 = vld [vmem:[#allocation17 + $0xe8] sm:$0xff]
      %v2388 = vld [vmem:[#allocation17 + $0xf0] sm:$0xff]
      %v2389 = vld [vmem:[#allocation17 + $0xf8] sm:$0xff]
      %v2390 = vld [vmem:[#allocation17 + $0x100] sm:$0xff]
      %v2391 = vld [vmem:[#allocation17 + $0x108] sm:$0xff]
      %v2392 = vld [vmem:[#allocation17 + $0x110] sm:$0xff]
      %v2393 = vld [vmem:[#allocation17 + $0x118] sm:$0xff]
      %v2394 = vld [vmem:[#allocation17 + $0x120] sm:$0xff]
      %v2395 = vld [vmem:[#allocation17 + $0x128] sm:$0xff]
      %v2396 = vld [vmem:[#allocation17 + $0x130] sm:$0xff]
      %v2397 = vld [vmem:[#allocation17 + $0x138] sm:$0xff]
      %v2398 = vld [vmem:[#allocation17 + $0x140] sm:$0xff]
      %v2399 = vld [vmem:[#allocation17 + $0x148] sm:$0xff]
      %v2400 = vld [vmem:[#allocation17 + $0x150] sm:$0xff]
      %v2401 = vld [vmem:[#allocation17 + $0x158] sm:$0xff]
      %v2402 = vld [vmem:[#allocation17 + $0x160] sm:$0xff]
      %v2403 = vld [vmem:[#allocation17 + $0x168] sm:$0xff]
      %v2404 = vld [vmem:[#allocation17 + $0x170] sm:$0xff]
      %v2405 = vld [vmem:[#allocation17 + $0x178] sm:$0xff]
      %v2406 = vld [vmem:[#allocation17 + $0x180] sm:$0xff]
      %v2407 = vld [vmem:[#allocation17 + $0x188] sm:$0xff]
      %v2408 = vld [vmem:[#allocation17 + $0x190] sm:$0xff]
      %v2409 = vld [vmem:[#allocation17 + $0x198] sm:$0xff]
      %v2410 = vld [vmem:[#allocation17 + $0x1a0] sm:$0xff]
      %v2411 = vld [vmem:[#allocation17 + $0x1a8] sm:$0xff]
      %v2412 = vld [vmem:[#allocation17 + $0x1b0] sm:$0xff]
      %v2413 = vld [vmem:[#allocation17 + $0x1b8] sm:$0xff]
      %v2414 = vld [vmem:[#allocation17 + $0x1c0] sm:$0xff]
      %v2415 = vld [vmem:[#allocation17 + $0x1c8] sm:$0xff]
      %v2416 = vld [vmem:[#allocation17 + $0x1d0] sm:$0xff]
      %v2417 = vld [vmem:[#allocation17 + $0x1d8] sm:$0xff]
      %v2418 = vld [vmem:[#allocation17 + $0x1e0] sm:$0xff]
      %v2419 = vld [vmem:[#allocation17 + $0x1e8] sm:$0xff]
      %v2420 = vld [vmem:[#allocation17 + $0x1f0] sm:$0xff]
      %v2421 = vld [vmem:[#allocation17 + $0x1f8] sm:$0xff]
      %v2422 = vld [vmem:[#allocation17 + $0x200] sm:$0xff]
      %v2423 = vld [vmem:[#allocation17 + $0x208] sm:$0xff]
      %v2424 = vld [vmem:[#allocation17 + $0x210] sm:$0xff]
      %v2425 = vld [vmem:[#allocation17 + $0x218] sm:$0xff]
      %v2426 = vld [vmem:[#allocation17 + $0x220] sm:$0xff]
      %v2427 = vld [vmem:[#allocation17 + $0x228] sm:$0xff]
      %v2428 = vld [vmem:[#allocation17 + $0x230] sm:$0xff]
      %v2429 = vld [vmem:[#allocation17 + $0x238] sm:$0xff]
      %v2430 = vld [vmem:[#allocation17 + $0x240] sm:$0xff]
      %v2431 = vld [vmem:[#allocation17 + $0x248] sm:$0xff]
      %v2432 = vld [vmem:[#allocation17 + $0x250] sm:$0xff]
      %v2433 = vld [vmem:[#allocation17 + $0x258] sm:$0xff]
      %v2434 = vld [vmem:[#allocation17 + $0x260] sm:$0xff]
      %v2435 = vld [vmem:[#allocation17 + $0x268] sm:$0xff]
      %v2436 = vld [vmem:[#allocation17 + $0x270] sm:$0xff]
      %v2437 = vld [vmem:[#allocation17 + $0x278] sm:$0xff]
      %v2438 = vld [vmem:[#allocation17 + $0x280] sm:$0xff]
      %v2439 = vld [vmem:[#allocation17 + $0x288] sm:$0xff]
      %v2440 = vld [vmem:[#allocation17 + $0x290] sm:$0xff]
      %v2441 = vld [vmem:[#allocation17 + $0x298] sm:$0xff]
      %v2442 = vld [vmem:[#allocation17 + $0x2a0] sm:$0xff]
      %v2443 = vld [vmem:[#allocation17 + $0x2a8] sm:$0xff]
      %v2444 = vld [vmem:[#allocation17 + $0x2b0] sm:$0xff]
      %v2445 = vld [vmem:[#allocation17 + $0x2b8] sm:$0xff]
      %v2446 = vld [vmem:[#allocation17 + $0x2c0] sm:$0xff]
      %v2447 = vld [vmem:[#allocation17 + $0x2c8] sm:$0xff]
      %v2448 = vld [vmem:[#allocation17 + $0x2d0] sm:$0xff]
      %v2449 = vld [vmem:[#allocation17 + $0x2d8] sm:$0xff]
      %v2450 = vld [vmem:[#allocation17 + $0x2e0] sm:$0xff]
      %v2451 = vld [vmem:[#allocation17 + $0x2e8] sm:$0xff]
      %v2452 = vld [vmem:[#allocation17 + $0x2f0] sm:$0xff]
      %v2453 = vld [vmem:[#allocation17 + $0x2f8] sm:$0xff]
      %v2454 = vld [vmem:[#allocation17 + $0x300] sm:$0xff]
      %v2455 = vld [vmem:[#allocation17 + $0x308] sm:$0xff]
      %v2456 = vld [vmem:[#allocation17 + $0x310] sm:$0xff]
      %v2457 = vld [vmem:[#allocation17 + $0x318] sm:$0xff]
      %v2458 = vld [vmem:[#allocation17 + $0x320] sm:$0xff]
      %v2459 = vld [vmem:[#allocation17 + $0x328] sm:$0xff]
      %v2460 = vld [vmem:[#allocation17 + $0x330] sm:$0xff]
      %v2461 = vld [vmem:[#allocation17 + $0x338] sm:$0xff]
      %v2462 = vld [vmem:[#allocation17 + $0x340] sm:$0xff]
      %v2463 = vld [vmem:[#allocation17 + $0x348] sm:$0xff]
      %v2464 = vld [vmem:[#allocation17 + $0x350] sm:$0xff]
      %v2465 = vld [vmem:[#allocation17 + $0x358] sm:$0xff]
      %v2466 = vld [vmem:[#allocation17 + $0x360] sm:$0xff]
      %v2467 = vld [vmem:[#allocation17 + $0x368] sm:$0xff]
      %v2468 = vld [vmem:[#allocation17 + $0x370] sm:$0xff]
      %v2469 = vld [vmem:[#allocation17 + $0x378] sm:$0xff]
      %v2470 = vld [vmem:[#allocation17 + $0x380] sm:$0xff]
      %v2471 = vld [vmem:[#allocation17 + $0x388] sm:$0xff]
      %v2472 = vld [vmem:[#allocation17 + $0x390] sm:$0xff]
      %v2473 = vld [vmem:[#allocation17 + $0x398] sm:$0xff]
      %v2474 = vld [vmem:[#allocation17 + $0x3a0] sm:$0xff]
      %v2475 = vld [vmem:[#allocation17 + $0x3a8] sm:$0xff]
      %v2476 = vld [vmem:[#allocation17 + $0x3b0] sm:$0xff]
      %v2477 = vld [vmem:[#allocation17 + $0x3b8] sm:$0xff]
      %v2478 = vld [vmem:[#allocation17 + $0x3c0] sm:$0xff]
      %v2479 = vld [vmem:[#allocation17 + $0x3c8] sm:$0xff]
      %v2480 = vld [vmem:[#allocation17 + $0x3d0] sm:$0xff]
      %v2481 = vld [vmem:[#allocation17 + $0x3d8] sm:$0xff]
      %v2482 = vld [vmem:[#allocation17 + $0x3e0] sm:$0xff]
      %v2483 = vld [vmem:[#allocation17 + $0x3e8] sm:$0xff]
      %v2484 = vld [vmem:[#allocation17 + $0x3f0] sm:$0xff]
      %v2485 = vld [vmem:[#allocation17 + $0x3f8] sm:$0xff]
      %v2486 = vld [vmem:[#allocation18] sm:$0x3]
      %v2488 = vlaneseq
      %v2489 = vshrl.u32 %v2488, 7
      %v2490 = vsub.s32 0, %v2489
      %v2491 = vrot.slane %v2486, %v2490
      %v2492 = vlaneseq
      %v2493 = vshrl.u32 %v2492, 7
      %v2494 = vsub.s32 1, %v2493
      %v2495 = vrot.slane %v2486, %v2494
      %2498 = vmatprep.subr.mxu0 %v2359
      %2499 = vmatpush1.msra.mxu0 %v2358
      %2500 = vmatprep.subr.mxu0 %v2361
      %2501 = vmatpush1.msra.mxu0 %v2360
      %2502 = vmatprep.subr.mxu0 %v2363
      %2503 = vmatpush1.msra.mxu0 %v2362
      %2504 = vmatprep.subr.mxu0 %v2365
      %2505 = vmatpush1.msra.mxu0 %v2364
      %2506 = vmatprep.subr.mxu0 %v2367
      %2507 = vmatpush1.msra.mxu0 %v2366
      %2508 = vmatprep.subr.mxu0 %v2369
      %2509 = vmatpush1.msra.mxu0 %v2368
      %2510 = vmatprep.subr.mxu0 %v2371
      %2511 = vmatpush1.msra.mxu0 %v2370
      %2512 = vmatprep.subr.mxu0 %v2373
      %2513 = vmatpush1.msra.mxu0 %v2372
      %2514 = vmatprep.subr.mxu0 %v2375
      %2515 = vmatpush1.msra.mxu0 %v2374
      %2516 = vmatprep.subr.mxu0 %v2377
      %2517 = vmatpush1.msra.mxu0 %v2376
      %2518 = vmatprep.subr.mxu0 %v2379
      %2519 = vmatpush1.msra.mxu0 %v2378
      %2520 = vmatprep.subr.mxu0 %v2381
      %2521 = vmatpush1.msra.mxu0 %v2380
      %2522 = vmatprep.subr.mxu0 %v2383
      %2523 = vmatpush1.msra.mxu0 %v2382
      %2524 = vmatprep.subr.mxu0 %v2385
      %2525 = vmatpush1.msra.mxu0 %v2384
      %2526 = vmatprep.subr.mxu0 %v2387
      %2527 = vmatpush1.msra.mxu0 %v2386
      %2528 = vmatprep.subr.mxu0 %v2389
      %2529 = vmatpush1.msra.mxu0 %v2388
      %2530 = vmatprep.subr.mxu0 %v2391
      %2531 = vmatpush1.msra.mxu0 %v2390
      %2532 = vmatprep.subr.mxu0 %v2393
      %2533 = vmatpush1.msra.mxu0 %v2392
      %2534 = vmatprep.subr.mxu0 %v2395
      %2535 = vmatpush1.msra.mxu0 %v2394
      %2536 = vmatprep.subr.mxu0 %v2397
      %2537 = vmatpush1.msra.mxu0 %v2396
      %2538 = vmatprep.subr.mxu0 %v2399
      %2539 = vmatpush1.msra.mxu0 %v2398
      %2540 = vmatprep.subr.mxu0 %v2401
      %2541 = vmatpush1.msra.mxu0 %v2400
      %2542 = vmatprep.subr.mxu0 %v2403
      %2543 = vmatpush1.msra.mxu0 %v2402
      %2544 = vmatprep.subr.mxu0 %v2405
      %2545 = vmatpush1.msra.mxu0 %v2404
      %2546 = vmatprep.subr.mxu0 %v2407
      %2547 = vmatpush1.msra.mxu0 %v2406
      %2548 = vmatprep.subr.mxu0 %v2409
      %2549 = vmatpush1.msra.mxu0 %v2408
      %2550 = vmatprep.subr.mxu0 %v2411
      %2551 = vmatpush1.msra.mxu0 %v2410
      %2552 = vmatprep.subr.mxu0 %v2413
      %2553 = vmatpush1.msra.mxu0 %v2412
      %2554 = vmatprep.subr.mxu0 %v2415
      %2555 = vmatpush1.msra.mxu0 %v2414
      %2556 = vmatprep.subr.mxu0 %v2417
      %2557 = vmatpush1.msra.mxu0 %v2416
      %2558 = vmatprep.subr.mxu0 %v2419
      %2559 = vmatpush1.msra.mxu0 %v2418
      %2560 = vmatprep.subr.mxu0 %v2421
      %2561 = vmatpush1.msra.mxu0 %v2420
      %2562 = vmatprep.mubr.f32.mxu0 %v2355
      %2563 = vmatmul.mubr.f32.gmra.mrb[0].mxu0 %v2354
      %v2564 = vpop.f32.mrb[0].mxu0
      %v2565 = vadd.f32 %v2491, %v2564
      %v2566 = vpop.f32.mrb[0].mxu0
      %v2567 = vadd.f32 %v2495, %v2566
      %2568 = vdwg.mxu0
      %2569 = vmatprep.subr.mxu0 %v2423
      %2570 = vmatpush1.msra.mxu0 %v2422
      %2571 = vmatprep.subr.mxu0 %v2425
      %2572 = vmatpush1.msra.mxu0 %v2424
      %2573 = vmatprep.subr.mxu0 %v2427
      %2574 = vmatpush1.msra.mxu0 %v2426
      %2575 = vmatprep.subr.mxu0 %v2429
      %2576 = vmatpush1.msra.mxu0 %v2428
      %2577 = vmatprep.subr.mxu0 %v2431
      %2578 = vmatpush1.msra.mxu0 %v2430
      %2579 = vmatprep.subr.mxu0 %v2433
      %2580 = vmatpush1.msra.mxu0 %v2432
      %2581 = vmatprep.subr.mxu0 %v2435
      %2582 = vmatpush1.msra.mxu0 %v2434
      %2583 = vmatprep.subr.mxu0 %v2437
      %2584 = vmatpush1.msra.mxu0 %v2436
      %2585 = vmatprep.subr.mxu0 %v2439
      %2586 = vmatpush1.msra.mxu0 %v2438
      %2587 = vmatprep.subr.mxu0 %v2441
      %2588 = vmatpush1.msra.mxu0 %v2440
      %2589 = vmatprep.subr.mxu0 %v2443
      %2590 = vmatpush1.msra.mxu0 %v2442
      %2591 = vmatprep.subr.mxu0 %v2445
      %2592 = vmatpush1.msra.mxu0 %v2444
      %2593 = vmatprep.subr.mxu0 %v2447
      %2594 = vmatpush1.msra.mxu0 %v2446
      %2595 = vmatprep.subr.mxu0 %v2449
      %2596 = vmatpush1.msra.mxu0 %v2448
      %2597 = vmatprep.subr.mxu0 %v2451
      %2598 = vmatpush1.msra.mxu0 %v2450
      %2599 = vmatprep.subr.mxu0 %v2453
      %2600 = vmatpush1.msra.mxu0 %v2452
      %2601 = vmatprep.subr.mxu0 %v2455
      %2602 = vmatpush1.msra.mxu0 %v2454
      %2603 = vmatprep.subr.mxu0 %v2457
      %2604 = vmatpush1.msra.mxu0 %v2456
      %2605 = vmatprep.subr.mxu0 %v2459
      %2606 = vmatpush1.msra.mxu0 %v2458
      %2607 = vmatprep.subr.mxu0 %v2461
      %2608 = vmatpush1.msra.mxu0 %v2460
      %2609 = vmatprep.subr.mxu0 %v2463
      %2610 = vmatpush1.msra.mxu0 %v2462
      %2611 = vmatprep.subr.mxu0 %v2465
      %2612 = vmatpush1.msra.mxu0 %v2464
      %2613 = vmatprep.subr.mxu0 %v2467
      %2614 = vmatpush1.msra.mxu0 %v2466
      %2615 = vmatprep.subr.mxu0 %v2469
      %2616 = vmatpush1.msra.mxu0 %v2468
      %2617 = vmatprep.subr.mxu0 %v2471
      %2618 = vmatpush1.msra.mxu0 %v2470
      %2619 = vmatprep.subr.mxu0 %v2473
      %2620 = vmatpush1.msra.mxu0 %v2472
      %2621 = vmatprep.subr.mxu0 %v2475
      %2622 = vmatpush1.msra.mxu0 %v2474
      %2623 = vmatprep.subr.mxu0 %v2477
      %2624 = vmatpush1.msra.mxu0 %v2476
      %2625 = vmatprep.subr.mxu0 %v2479
      %2626 = vmatpush1.msra.mxu0 %v2478
      %2627 = vmatprep.subr.mxu0 %v2481
      %2628 = vmatpush1.msra.mxu0 %v2480
      %2629 = vmatprep.subr.mxu0 %v2483
      %2630 = vmatpush1.msra.mxu0 %v2482
      %2631 = vmatprep.subr.mxu0 %v2485
      %2632 = vmatpush1.msra.mxu0 %v2484
      %2633 = vmatprep.mubr.f32.mxu0 %v2357
      %2634 = vmatmul.mubr.f32.gmra.mrb[0].mxu0 %v2356
      %v2635 = vpop.f32.mrb[0].mxu0
      %v2636 = vadd.f32 %v2565, %v2635
      %v2637 = vpop.f32.mrb[0].mxu0
      %v2638 = vadd.f32 %v2567, %v2637
      %2639 = vdwg.mxu0
      %v2640 = vmax.f32 %v2636, 0.0
      %v2641 = vmax.f32 %v2638, 0.0
      %v2642 = vld [vmem:[#allocation20] sm:$0xff]
      %v2643 = vld [vmem:[#allocation20 + $0x8] sm:$0xff]
      %v2644 = vld [vmem:[#allocation20 + $0x10] sm:$0xff]
      %v2645 = vld [vmem:[#allocation20 + $0x18] sm:$0xff]
      %v2646 = vld [vmem:[#allocation20 + $0x20] sm:$0xff]
      %v2647 = vld [vmem:[#allocation20 + $0x28] sm:$0xff]
      %v2648 = vld [vmem:[#allocation20 + $0x30] sm:$0xff]
      %v2649 = vld [vmem:[#allocation20 + $0x38] sm:$0xff]
      %v2650 = vld [vmem:[#allocation20 + $0x40] sm:$0xff]
      %v2651 = vld [vmem:[#allocation20 + $0x48] sm:$0xff]
      %v2652 = vld [vmem:[#allocation20 + $0x50] sm:$0xff]
      %v2653 = vld [vmem:[#allocation20 + $0x58] sm:$0xff]
      %v2654 = vld [vmem:[#allocation20 + $0x60] sm:$0xff]
      %v2655 = vld [vmem:[#allocation20 + $0x68] sm:$0xff]
      %v2656 = vld [vmem:[#allocation20 + $0x70] sm:$0xff]
      %v2657 = vld [vmem:[#allocation20 + $0x78] sm:$0xff]
      %v2658 = vld [vmem:[#allocation20 + $0x80] sm:$0xff]
      %v2659 = vld [vmem:[#allocation20 + $0x88] sm:$0xff]
      %v2660 = vld [vmem:[#allocation20 + $0x90] sm:$0xff]
      %v2661 = vld [vmem:[#allocation20 + $0x98] sm:$0xff]
      %v2662 = vld [vmem:[#allocation20 + $0xa0] sm:$0xff]
      %v2663 = vld [vmem:[#allocation20 + $0xa8] sm:$0xff]
      %v2664 = vld [vmem:[#allocation20 + $0xb0] sm:$0xff]
      %v2665 = vld [vmem:[#allocation20 + $0xb8] sm:$0xff]
      %v2666 = vld [vmem:[#allocation20 + $0xc0] sm:$0xff]
      %v2667 = vld [vmem:[#allocation20 + $0xc8] sm:$0xff]
      %v2668 = vld [vmem:[#allocation20 + $0xd0] sm:$0xff]
      %v2669 = vld [vmem:[#allocation20 + $0xd8] sm:$0xff]
      %v2670 = vld [vmem:[#allocation20 + $0xe0] sm:$0xff]
      %v2671 = vld [vmem:[#allocation20 + $0xe8] sm:$0xff]
      %v2672 = vld [vmem:[#allocation20 + $0xf0] sm:$0xff]
      %v2673 = vld [vmem:[#allocation20 + $0xf8] sm:$0xff]
      %v2674 = vld [vmem:[#allocation21] sm:$0x1]
      %v2676 = vlaneseq
      %v2677 = vshrl.u32 %v2676, 7
      %v2678 = vsub.s32 0, %v2677
      %v2679 = vrot.slane %v2674, %v2678
      %2681 = vmatprep.subr.mxu0 0.0
      %2682 = vmatpush1.msra.mxu0 %v2642
      %2683 = vmatprep.subr.mxu0 0.0
      %2684 = vmatpush1.msra.mxu0 %v2643
      %2685 = vmatprep.subr.mxu0 0.0
      %2686 = vmatpush1.msra.mxu0 %v2644
      %2687 = vmatprep.subr.mxu0 0.0
      %2688 = vmatpush1.msra.mxu0 %v2645
      %2689 = vmatprep.subr.mxu0 0.0
      %2690 = vmatpush1.msra.mxu0 %v2646
      %2691 = vmatprep.subr.mxu0 0.0
      %2692 = vmatpush1.msra.mxu0 %v2647
      %2693 = vmatprep.subr.mxu0 0.0
      %2694 = vmatpush1.msra.mxu0 %v2648
      %2695 = vmatprep.subr.mxu0 0.0
      %2696 = vmatpush1.msra.mxu0 %v2649
      %2697 = vmatprep.subr.mxu0 0.0
      %2698 = vmatpush1.msra.mxu0 %v2650
      %2699 = vmatprep.subr.mxu0 0.0
      %2700 = vmatpush1.msra.mxu0 %v2651
      %2701 = vmatprep.subr.mxu0 0.0
      %2702 = vmatpush1.msra.mxu0 %v2652
      %2703 = vmatprep.subr.mxu0 0.0
      %2704 = vmatpush1.msra.mxu0 %v2653
      %2705 = vmatprep.subr.mxu0 0.0
      %2706 = vmatpush1.msra.mxu0 %v2654
      %2707 = vmatprep.subr.mxu0 0.0
      %2708 = vmatpush1.msra.mxu0 %v2655
      %2709 = vmatprep.subr.mxu0 0.0
      %2710 = vmatpush1.msra.mxu0 %v2656
      %2711 = vmatprep.subr.mxu0 0.0
      %2712 = vmatpush1.msra.mxu0 %v2657
      %2713 = vmatprep.subr.mxu0 0.0
      %2714 = vmatpush1.msra.mxu0 %v2658
      %2715 = vmatprep.subr.mxu0 0.0
      %2716 = vmatpush1.msra.mxu0 %v2659
      %2717 = vmatprep.subr.mxu0 0.0
      %2718 = vmatpush1.msra.mxu0 %v2660
      %2719 = vmatprep.subr.mxu0 0.0
      %2720 = vmatpush1.msra.mxu0 %v2661
      %2721 = vmatprep.subr.mxu0 0.0
      %2722 = vmatpush1.msra.mxu0 %v2662
      %2723 = vmatprep.subr.mxu0 0.0
      %2724 = vmatpush1.msra.mxu0 %v2663
      %2725 = vmatprep.subr.mxu0 0.0
      %2726 = vmatpush1.msra.mxu0 %v2664
      %2727 = vmatprep.subr.mxu0 0.0
      %2728 = vmatpush1.msra.mxu0 %v2665
      %2729 = vmatprep.subr.mxu0 0.0
      %2730 = vmatpush1.msra.mxu0 %v2666
      %2731 = vmatprep.subr.mxu0 0.0
      %2732 = vmatpush1.msra.mxu0 %v2667
      %2733 = vmatprep.subr.mxu0 0.0
      %2734 = vmatpush1.msra.mxu0 %v2668
      %2735 = vmatprep.subr.mxu0 0.0
      %2736 = vmatpush1.msra.mxu0 %v2669
      %2737 = vmatprep.subr.mxu0 0.0
      %2738 = vmatpush1.msra.mxu0 %v2670
      %2739 = vmatprep.subr.mxu0 0.0
      %2740 = vmatpush1.msra.mxu0 %v2671
      %2741 = vmatprep.subr.mxu0 0.0
      %2742 = vmatpush1.msra.mxu0 %v2672
      %2743 = vmatprep.subr.mxu0 0.0
      %2744 = vmatpush1.msra.mxu0 %v2673
      %2745 = vmatprep.mubr.f32.mxu0 %v2641
      %2746 = vmatmul.mubr.f32.gmra.mrb[0].mxu0 %v2640
      %v2747 = vpop.f32.mrb[0].mxu0
      %v2748 = vadd.f32 %v2679, %v2747
      %v2749 = vpop.f32.mrb[0].mxu0
      %2750 = vdwg.mxu0
      %2751 = vst [vmem:[#allocation23] sm:$0x3] %v2748
    $region109: #{tpu_custom_call.1} parent=1 // pred_fallthru
      _
    // Predicated region
    $region110: #{tpu_custom_call.1} parent=1 // pred_check
      _
    $region111: #{tpu_custom_call.1} parent=1 // pred_check_branch
      %2753 = sbr.rel (0) target = $region113
    $region112: #{tpu_custom_call.1} parent=1 // pred_region
      %s2755 = ssub.s32 32, 32
      %2756 = vsyncadd [#allocation5], %s2755
      %s2758 = sshll.u32 [#allocation23], 4
      %s2759 = int_to_ptr.vmem [resolvable:$true] %s2758
      %2761 = dma.vmem_to_hbm [thread:$0]  %s2759, 32, %s13, [#allocation5]
    $region113: #{tpu_custom_call.1} parent=1 // pred_fallthru
      _
    // Predicated region
    $region114: #{tpu_custom_call.1} parent=1 // pred_check
      _
    $region115: #{tpu_custom_call.1} parent=1 // pred_check_branch
      %2763 = sbr.rel (0) target = $region117
    $region116: #{tpu_custom_call.1} parent=1 // pred_region
      %2764 = dma.done [#allocation5], 32
    $region117: #{tpu_custom_call.1} parent=1 // pred_fallthru
      _
    %2765 = vsyncpa [#allocation4], 1
    %2766 = vsyncpa [#allocation7], 1
    %2767 = vsyncpa [#allocation10], 1
    %2768 = vsyncpa [#allocation13], 1
    %2769 = vsyncpa [#allocation16], 1
    %2770 = vsyncpa [#allocation19], 1
    %2771 = vsyncpa [#allocation22], 1
    %2772 = vsyncpa [#allocation5], 1

</llo_original>
